<compile_context>
chip_gen: v5e
topology: v5e:2x2
jax: 0.10.0
libtpu: 0.0.40
codegen_flags: <defaults>
</compile_context>

<pallas_src>
import functools
import math

import jax
import jax.numpy as jnp
from jax.experimental import pallas as pl
from jax.experimental.pallas import tpu as pltpu

_LN_EPS = 1e-5


# ----------------------------------------------------------------------------
# Fused kernel: grid = (S-blocks, layers)
# ----------------------------------------------------------------------------
def _make_kernel(num_heads):
    def kernel(x_ref, pe_ref, emb_w_ref, emb_b_ref,
               ain_w_ref, ain_b_ref, aout_w_ref, aout_b_ref,
               ln1_w_ref, ln1_b_ref,
               ffn_w1_ref, ffn_b1_ref, ffn_w2_ref, ffn_b2_ref,
               ln2_w_ref, ln2_b_ref,
               out_ref, h_ref):
        l = pl.program_id(1)
        s_blk, B, Din = x_ref.shape          # s-major slab: row = s_local*B + b
        H = emb_w_ref.shape[1]
        hd = H // num_heads
        R = s_blk * B
        scale = 1.0 / math.sqrt(hd)

        def mm(a, b):
            # bf16 MXU operands, f32 accumulation: single MXU pass.
            return jnp.dot(a.astype(jnp.bfloat16), b.astype(jnp.bfloat16),
                           preferred_element_type=jnp.float32)

        def bmm(a, b, pattern):
            # batched (single batch dim) matmul on the MXU.
            return jnp.einsum(pattern, a.astype(jnp.bfloat16),
                              b.astype(jnp.bfloat16),
                              preferred_element_type=jnp.float32)

        def layer_norm(z, w, b):
            mu = jnp.mean(z, axis=-1, keepdims=True)
            zc = z - mu
            var = jnp.mean(zc * zc, axis=-1, keepdims=True)
            return zc * jax.lax.rsqrt(var + _LN_EPS) * w + b

        # ---- layer 0: embedding + positional encoding into the h scratch ----
        @pl.when(l == 0)
        def _():
            x2d = x_ref[...].reshape(R, Din)
            emb = mm(x2d, emb_w_ref[...]) + emb_b_ref[...]        # (R, H)
            emb3 = emb.reshape(s_blk, B, H) + pe_ref[...]         # pe (s_blk,1,H)
            h_ref[...] = emb3.reshape(R, H)

        h = h_ref[...]

        # ---- self-attention: attends over B, batched over s & heads ----
        qkv = mm(h, ain_w_ref[0]) + ain_b_ref[0]                  # (R, 3H)
        ctx_heads = []
        for hh in range(num_heads):                               # static unroll
            lo = hh * hd
            qh = qkv[:, lo:lo + hd].reshape(s_blk, B, hd)
            kh = qkv[:, H + lo:H + lo + hd].reshape(s_blk, B, hd)
            vh = qkv[:, 2 * H + lo:2 * H + lo + hd].reshape(s_blk, B, hd)
            sc = bmm(qh, kh, 'sid,sjd->sij') * scale              # (s_blk, B, B)
            sc = sc - jnp.max(sc, axis=-1, keepdims=True)
            ex = jnp.exp(sc)
            p = ex * pl.reciprocal(jnp.sum(ex, axis=-1, keepdims=True),
                                   approx=True)
            ctx = bmm(p, vh, 'sij,sjd->sid')                      # (s_blk, B, hd)
            ctx_heads.append(ctx.reshape(R, hd))
        ctx = jnp.concatenate(ctx_heads, axis=-1)                 # (R, H)
        attn = mm(ctx, aout_w_ref[0]) + aout_b_ref[0]             # one proj matmul
        h = layer_norm(h + attn, ln1_w_ref[0], ln1_b_ref[0])

        # ---- feed-forward (ReLU): the only sizeable MXU work ----
        f = jnp.maximum(mm(h, ffn_w1_ref[0]) + ffn_b1_ref[0], 0.0)
        f = mm(f, ffn_w2_ref[0]) + ffn_b2_ref[0]
        h = layer_norm(h + f, ln2_w_ref[0], ln2_b_ref[0])

        h_ref[...] = h

        # ---- last layer: partial sum over this block's S rows (mean fused) ----
        @pl.when(l == pl.num_programs(1) - 1)
        def _():
            out_ref[0] = jnp.sum(h.reshape(s_blk, B, H), axis=0)  # (B, H)

    return kernel


# ----------------------------------------------------------------------------
# Wrapper
# ----------------------------------------------------------------------------
def make_positional_encoding(seq_len, d_model):
    position = jnp.arange(seq_len, dtype=jnp.float32)[:, None]
    div_term = jnp.exp(jnp.arange(0, d_model, 2, dtype=jnp.float32)
                       * (-math.log(10000.0) / d_model))
    pe = jnp.zeros((seq_len, d_model), jnp.float32)
    pe = pe.at[:, 0::2].set(jnp.sin(position * div_term))
    pe = pe.at[:, 1::2].set(jnp.cos(position * div_term))
    return pe


def _vmem_limit_bytes(Din, H, F, s_block, B):
    """Derive a per-config scoped-VMEM limit (double-buffered layer stream +
    static blocks + activation working set), with headroom."""
    fl = 4
    R = s_block * B
    per_layer = (H * 3 * H + 3 * H + H * H + H + 2 * H
                 + H * F + F + F * H + H + 2 * H) * fl
    streamed = 2 * per_layer                                   # double buffered
    static = 2 * (R * Din + s_block * H + Din * H + H + B * H) * fl
    acts = (R * (H + 3 * H + H + F) + R * H) * fl              # live intermediates
    total = streamed + static + acts
    return int(min(max(2 * total, 4 * 1024 * 1024), 64 * 1024 * 1024))


def transformer_forward(params, x, y, *, num_heads, s_block=None):
    """Pallas implementation of TransformerModel.forward -> (out, loss)."""
    B, S, Din = x.shape
    H = params["emb_w"].shape[1]
    F = params["ffn_w1"].shape[2]
    L = params["attn_in_w"].shape[0]
    assert H % num_heads == 0
    if s_block is None:
        s_block = S // 2 if (S % 2 == 0 and S >= 2) else S
    assert S % s_block == 0
    nsb = S // s_block

    # s-major rows (row = s*B + b): every in-kernel reshape is a pure
    # leading-dim split/merge.
    x_sbd = jnp.transpose(x, (1, 0, 2))                          # (S, B, Din)
    pe = make_positional_encoding(S, H)[:, None, :]              # (S, 1, H)

    def b2(v):
        return v.reshape(1, -1)

    def b3(v):
        return v.reshape(v.shape[0], 1, v.shape[1])

    in_specs = [
        pl.BlockSpec((s_block, B, Din), lambda s, l: (s, 0, 0)),   # x
        pl.BlockSpec((s_block, 1, H),   lambda s, l: (s, 0, 0)),   # pe
        pl.BlockSpec((Din, H),          lambda s, l: (0, 0)),      # emb_w
        pl.BlockSpec((1, H),            lambda s, l: (0, 0)),      # emb_b
        pl.BlockSpec((1, H, 3 * H),     lambda s, l: (l, 0, 0)),   # attn in w
        pl.BlockSpec((1, 1, 3 * H),     lambda s, l: (l, 0, 0)),   # attn in b
        pl.BlockSpec((1, H, H),         lambda s, l: (l, 0, 0)),   # attn out w
        pl.BlockSpec((1, 1, H),         lambda s, l: (l, 0, 0)),   # attn out b
        pl.BlockSpec((1, 1, H),         lambda s, l: (l, 0, 0)),   # ln1 w
        pl.BlockSpec((1, 1, H),         lambda s, l: (l, 0, 0)),   # ln1 b
        pl.BlockSpec((1, H, F),         lambda s, l: (l, 0, 0)),   # ffn w1
        pl.BlockSpec((1, 1, F),         lambda s, l: (l, 0, 0)),   # ffn b1
        pl.BlockSpec((1, F, H),         lambda s, l: (l, 0, 0)),   # ffn w2
        pl.BlockSpec((1, 1, H),         lambda s, l: (l, 0, 0)),   # ffn b2
        pl.BlockSpec((1, 1, H),         lambda s, l: (l, 0, 0)),   # ln2 w
        pl.BlockSpec((1, 1, H),         lambda s, l: (l, 0, 0)),   # ln2 b
    ]
    out_specs = pl.BlockSpec((1, B, H), lambda s, l: (s, 0, 0))

    h_parts = pl.pallas_call(
        _make_kernel(num_heads),
        out_shape=jax.ShapeDtypeStruct((nsb, B, H), jnp.float32),
        grid_spec=pltpu.PrefetchScalarGridSpec(
            num_scalar_prefetch=0,
            grid=(nsb, L),
            in_specs=in_specs,
            out_specs=out_specs,
            scratch_shapes=[pltpu.VMEM((s_block * B, H), jnp.float32)]),
        compiler_params=pltpu.CompilerParams(
            dimension_semantics=("parallel", "arbitrary"),
            vmem_limit_bytes=_vmem_limit_bytes(Din, H, F, s_block, B)),
    )(x_sbd, pe,
      params["emb_w"], b2(params["emb_b"]),
      params["attn_in_w"], b3(params["attn_in_b"]),
      params["attn_out_w"], b3(params["attn_out_b"]),
      b3(params["ln1_w"]), b3(params["ln1_b"]),
      params["ffn_w1"], b3(params["ffn_b1"]),
      params["ffn_w2"], b3(params["ffn_b2"]),
      b3(params["ln2_w"]), b3(params["ln2_b"]))

    # Decoder fused with the mean (mean over S commutes with the affine
    # decoder); this tiny epilogue fuses with the loss in one XLA fusion.
    h_mean = jnp.sum(h_parts, axis=0) / S                         # (B, H)
    out = jnp.dot(h_mean, params["dec_w"],
                  precision=jax.lax.Precision.HIGHEST) + params["dec_b"]
    loss = jnp.mean((out - y) ** 2)                               # MSELoss
    return out, loss


# ----------------------------------------------------------------------------
# Deterministic parameter init (weights stored pre-transposed as (in, out))
# ----------------------------------------------------------------------------
def init_params(key, input_dim, hidden_dim, num_layers, ffn_dim, output_dim):
    ks = jax.random.split(key, 12)

    def u(k, shape, fan_in):
        bound = 1.0 / math.sqrt(fan_in)
        return jax.random.uniform(k, shape, jnp.float32, -bound, bound)

    L, H, F = num_layers, hidden_dim, ffn_dim
    return {
        "emb_w": u(ks[0], (input_dim, H), input_dim),
        "emb_b": u(ks[1], (H,), input_dim),
        "attn_in_w": u(ks[2], (L, H, 3 * H), H),
        "attn_in_b": u(ks[3], (L, 3 * H), H),
        "attn_out_w": u(ks[4], (L, H, H), H),
        "attn_out_b": u(ks[5], (L, H), H),
        "ln1_w": jnp.ones((L, H), jnp.float32),
        "ln1_b": jnp.zeros((L, H), jnp.float32),
        "ffn_w1": u(ks[6], (L, H, F), H),
        "ffn_b1": u(ks[7], (L, F), H),
        "ffn_w2": u(ks[8], (L, F, H), F),
        "ffn_b2": u(ks[9], (L, H), F),
        "ln2_w": jnp.ones((L, H), jnp.float32),
        "ln2_b": jnp.zeros((L, H), jnp.float32),
        "dec_w": u(ks[10], (H, output_dim), H),
        "dec_b": u(ks[11], (output_dim,), H),
    }


# ----------------------------------------------------------------------------
# Pure-JAX reference (mirrors the kernel's bf16 MXU-operand precision)
# ----------------------------------------------------------------------------
def reference_forward(params, x, y, num_heads):
    B, S, _ = x.shape
    H = params["emb_w"].shape[1]
    hd = H // num_heads
    L = params["attn_in_w"].shape[0]
    scale = 1.0 / math.sqrt(hd)

    def mm(a, b, pattern):
        return jnp.einsum(pattern, a.astype(jnp.bfloat16), b.astype(jnp.bfloat16),
                          preferred_element_type=jnp.float32)

    def ln(z, w, b):
        mu = jnp.mean(z, axis=-1, keepdims=True)
        var = jnp.mean((z - mu) ** 2, axis=-1, keepdims=True)
        return (z - mu) * jax.lax.rsqrt(var + _LN_EPS) * w + b

    h = mm(x, params["emb_w"], "bsi,ih->bsh") + params["emb_b"]
    h = h + make_positional_encoding(S, H)[None]
    for l in range(L):
        qkv = mm(h, params["attn_in_w"][l], "bsh,hk->bsk") + params["attn_in_b"][l]
        q, k, v = jnp.split(qkv, 3, axis=-1)
        q = q.reshape(B, S, num_heads, hd)
        k = k.reshape(B, S, num_heads, hd)
        v = v.reshape(B, S, num_heads, hd)
        # torch batch_first=False: attention over dim 0 (B), dim 1 (S) = batch.
        sc = mm(q, k, "ishd,jshd->shij") * scale
        p = jax.nn.softmax(sc, axis=-1)
        ctx = mm(p, v, "shij,jshd->ishd").reshape(B, S, H)
        a = mm(ctx, params["attn_out_w"][l], "bsh,hk->bsk") + params["attn_out_b"][l]
        h = ln(h + a, params["ln1_w"][l], params["ln1_b"][l])
        f = jax.nn.relu(mm(h, params["ffn_w1"][l], "bsh,hf->bsf")
                        + params["ffn_b1"][l])
        f = mm(f, params["ffn_w2"][l], "bsf,fh->bsh") + params["ffn_b2"][l]
        h = ln(h + f, params["ln2_w"][l], params["ln2_b"][l])
    dec = jnp.einsum("bsh,ho->bso", h, params["dec_w"],
                     precision=jax.lax.Precision.HIGHEST) + params["dec_b"]
    out = jnp.mean(dec, axis=1)        # permute(1,0,2) then mean(dim=0)
    loss = jnp.mean((out - y) ** 2)
    return out, loss


if __name__ == "__main__":
    import numpy as np

    B, S, DIN, HIDDEN, HEADS, LAYERS, DOUT = 2, 8, 16, 32, 4, 2, 4
    FFN = 2048   # nn.TransformerEncoderLayer default dim_feedforward

    key = jax.random.PRNGKey(0)
    kx, ky, kp = jax.random.split(key, 3)
    x = jax.random.normal(kx, (B, S, DIN), jnp.float32)
    y = jax.random.normal(ky, (B, DOUT), jnp.float32)
    params = init_params(kp, DIN, LAYERS and HIDDEN, LAYERS, FFN, DOUT) \
        if False else init_params(kp, DIN, HIDDEN, LAYERS, FFN, DOUT)

    fwd = jax.jit(functools.partial(transformer_forward,
                                    num_heads=HEADS, s_block=4))
    out, loss = fwd(params, x, y)
    jax.block_until_ready((out, loss))

    ref_out, ref_loss = reference_forward(params, x, y, HEADS)
    assert out.shape == (B, DOUT)
    # Both kernel and reference feed bf16 operands to the MXU with f32
    # accumulation, so they share rounding; 5e-3 covers the EUP approx
    # reciprocal in the kernel softmax plus accumulation-order differences.
    assert np.allclose(np.asarray(out), np.asarray(ref_out),
                       rtol=5e-3, atol=5e-3), "output mismatch vs reference"
    assert np.allclose(float(loss), float(ref_loss),
                       rtol=5e-3, atol=5e-3), "loss mismatch vs reference"

    print("KERNEL_OK")
</pallas_src>

<mosaic_0001>
module attributes {stable_mosaic.version = 11 : i64} {
  func.func @kernel(%arg0: i32, %arg1: i32, %arg2: memref<4x2x16xf32, #tpu.memory_space<vmem>>, %arg3: memref<4x1x32xf32, #tpu.memory_space<vmem>>, %arg4: memref<16x32xf32, #tpu.memory_space<vmem>>, %arg5: memref<1x32xf32, #tpu.memory_space<vmem>>, %arg6: memref<1x32x96xf32, #tpu.memory_space<vmem>>, %arg7: memref<1x1x96xf32, #tpu.memory_space<vmem>>, %arg8: memref<1x32x32xf32, #tpu.memory_space<vmem>>, %arg9: memref<1x1x32xf32, #tpu.memory_space<vmem>>, %arg10: memref<1x1x32xf32, #tpu.memory_space<vmem>>, %arg11: memref<1x1x32xf32, #tpu.memory_space<vmem>>, %arg12: memref<1x32x2048xf32, #tpu.memory_space<vmem>>, %arg13: memref<1x1x2048xf32, #tpu.memory_space<vmem>>, %arg14: memref<1x2048x32xf32, #tpu.memory_space<vmem>>, %arg15: memref<1x1x32xf32, #tpu.memory_space<vmem>>, %arg16: memref<1x1x32xf32, #tpu.memory_space<vmem>>, %arg17: memref<1x1x32xf32, #tpu.memory_space<vmem>>, %arg18: memref<1x2x32xf32, #tpu.memory_space<vmem>>, %arg19: memref<8x32xf32, #tpu.memory_space<vmem>>) attributes {dimension_semantics = [#tpu.dimension_semantics<parallel>, #tpu.dimension_semantics<arbitrary>], iteration_bounds = array<i64: 2, 2>, scalar_prefetch = 0 : i64, scratch_operands = 1 : i64, tpu.core_type = #tpu.core_type<tc>, window_params = [{transform_indices = @transform_0, window_bounds = array<i64: 4, 2, 16>}, {transform_indices = @transform_1, window_bounds = array<i64: 4, 1, 32>}, {pipeline_mode = #tpu.pipeline_mode<synchronous>, transform_indices = @transform_2, window_bounds = array<i64: 16, 32>}, {pipeline_mode = #tpu.pipeline_mode<synchronous>, transform_indices = @transform_3, window_bounds = array<i64: 1, 32>}, {transform_indices = @transform_4, window_bounds = array<i64: 1, 32, 96>}, {transform_indices = @transform_5, window_bounds = array<i64: 1, 1, 96>}, {transform_indices = @transform_6, window_bounds = array<i64: 1, 32, 32>}, {transform_indices = @transform_7, window_bounds = array<i64: 1, 1, 32>}, {transform_indices = @transform_8, window_bounds = array<i64: 1, 1, 32>}, {transform_indices = @transform_9, window_bounds = array<i64: 1, 1, 32>}, {transform_indices = @transform_10, window_bounds = array<i64: 1, 32, 2048>}, {transform_indices = @transform_11, window_bounds = array<i64: 1, 1, 2048>}, {transform_indices = @transform_12, window_bounds = array<i64: 1, 2048, 32>}, {transform_indices = @transform_13, window_bounds = array<i64: 1, 1, 32>}, {transform_indices = @transform_14, window_bounds = array<i64: 1, 1, 32>}, {transform_indices = @transform_15, window_bounds = array<i64: 1, 1, 32>}, {transform_indices = @transform_16, window_bounds = array<i64: 1, 2, 32>}]} {
    %c0_i32 = arith.constant 0 : i32
    %0 = arith.cmpi eq, %arg1, %c0_i32 : i32
    %1 = arith.extui %0 : i1 to i32
    %c0_i32_0 = arith.constant 0 : i32
    %2 = arith.cmpi ne, %1, %c0_i32_0 : i32
    scf.if %2 {
      %c0_75 = arith.constant 0 : index
      %c0_76 = arith.constant 0 : index
      %c0_77 = arith.constant 0 : index
      %197 = vector.load %arg2[%c0_75, %c0_76, %c0_77] : memref<4x2x16xf32, #tpu.memory_space<vmem>>, vector<4x2x16xf32>
      %198 = vector.shape_cast %197 : vector<4x2x16xf32> to vector<8x16xf32>
      %c0_78 = arith.constant 0 : index
      %c0_79 = arith.constant 0 : index
      %199 = vector.load %arg4[%c0_78, %c0_79] : memref<16x32xf32, #tpu.memory_space<vmem>>, vector<16x32xf32>
      %200 = arith.truncf %198 : vector<8x16xf32> to vector<8x16xbf16>
      %201 = arith.truncf %199 : vector<16x32xf32> to vector<16x32xbf16>
      %cst_80 = arith.constant dense<0.000000e+00> : vector<8x32xf32>
      %202 = tpu.matmul %200, %201, %cst_80 {dimension_numbers = #tpu.dot_dimension_numbers<[1], [0], [0], [1], [0, 0, 1, 1], [], []>} : vector<8x16xbf16>, vector<16x32xbf16>, vector<8x32xf32> -> vector<8x32xf32>
      %c0_81 = arith.constant 0 : index
      %c0_82 = arith.constant 0 : index
      %203 = vector.load %arg5[%c0_81, %c0_82] : memref<1x32xf32, #tpu.memory_space<vmem>>, vector<1x32xf32>
      %204 = vector.broadcast %203 : vector<1x32xf32> to vector<8x32xf32>
      %205 = arith.addf %202, %204 : vector<8x32xf32>
      %206 = vector.shape_cast %205 : vector<8x32xf32> to vector<4x2x32xf32>
      %c0_83 = arith.constant 0 : index
      %c0_84 = arith.constant 0 : index
      %c0_85 = arith.constant 0 : index
      %207 = vector.load %arg3[%c0_83, %c0_84, %c0_85] : memref<4x1x32xf32, #tpu.memory_space<vmem>>, vector<4x1x32xf32>
      %208 = vector.broadcast %207 : vector<4x1x32xf32> to vector<4x2x32xf32>
      %209 = arith.addf %206, %208 : vector<4x2x32xf32>
      %210 = vector.shape_cast %209 : vector<4x2x32xf32> to vector<8x32xf32>
      %c0_86 = arith.constant 0 : index
      %c0_87 = arith.constant 0 : index
      %211 = vector.load %arg19[%c0_86, %c0_87] : memref<8x32xf32, #tpu.memory_space<vmem>>, vector<8x32xf32>
      tpu.vector_store %arg19[%c0_86, %c0_87], %210 {strides = array<i32>} : memref<8x32xf32, #tpu.memory_space<vmem>>, vector<8x32xf32>,
    } else {
    }
    %c0 = arith.constant 0 : index
    %c0_1 = arith.constant 0 : index
    %3 = vector.load %arg19[%c0, %c0_1] : memref<8x32xf32, #tpu.memory_space<vmem>>, vector<8x32xf32>
    %c0_2 = arith.constant 0 : index
    %c0_3 = arith.constant 0 : index
    %c0_4 = arith.constant 0 : index
    %4 = vector.load %arg6[%c0_2, %c0_3, %c0_4] : memref<1x32x96xf32, #tpu.memory_space<vmem>>, vector<1x32x96xf32>
    %5 = vector.shape_cast %4 : vector<1x32x96xf32> to vector<32x96xf32>
    %6 = arith.truncf %3 : vector<8x32xf32> to vector<8x32xbf16>
    %7 = arith.truncf %5 : vector<32x96xf32> to vector<32x96xbf16>
    %cst = arith.constant dense<0.000000e+00> : vector<8x96xf32>
    %8 = tpu.matmul %6, %7, %cst {dimension_numbers = #tpu.dot_dimension_numbers<[1], [0], [0], [1], [0, 0, 1, 1], [], []>} : vector<8x32xbf16>, vector<32x96xbf16>, vector<8x96xf32> -> vector<8x96xf32>
    %c0_5 = arith.constant 0 : index
    %c0_6 = arith.constant 0 : index
    %c0_7 = arith.constant 0 : index
    %9 = vector.load %arg7[%c0_5, %c0_6, %c0_7] : memref<1x1x96xf32, #tpu.memory_space<vmem>>, vector<1x1x96xf32>
    %10 = vector.shape_cast %9 : vector<1x1x96xf32> to vector<1x96xf32>
    %11 = vector.broadcast %10 : vector<1x96xf32> to vector<8x96xf32>
    %12 = arith.addf %8, %11 : vector<8x96xf32>
    %13 = vector.extract_strided_slice %12 {offsets = [0, 0], sizes = [8, 8], strides = [1, 1]} : vector<8x96xf32> to vector<8x8xf32>
    %14 = vector.shape_cast %13 : vector<8x8xf32> to vector<4x2x8xf32>
    %15 = vector.extract_strided_slice %12 {offsets = [0, 32], sizes = [8, 8], strides = [1, 1]} : vector<8x96xf32> to vector<8x8xf32>
    %16 = vector.shape_cast %15 : vector<8x8xf32> to vector<4x2x8xf32>
    %17 = vector.extract_strided_slice %12 {offsets = [0, 64], sizes = [8, 8], strides = [1, 1]} : vector<8x96xf32> to vector<8x8xf32>
    %18 = vector.shape_cast %17 : vector<8x8xf32> to vector<4x2x8xf32>
    %19 = arith.truncf %14 : vector<4x2x8xf32> to vector<4x2x8xbf16>
    %20 = arith.truncf %16 : vector<4x2x8xf32> to vector<4x2x8xbf16>
    "tpu.trace_start"() <{level = 10 : i32, message = "sid,sjd->sij"}> : () -> ()
    %cst_8 = arith.constant dense<0.000000e+00> : vector<4x2x2xf32>
    %21 = tpu.matmul %19, %20, %cst_8 {dimension_numbers = #tpu.dot_dimension_numbers<[2], [2], [1], [1], [0, 0, 0, 1, 1, 1], [0], [0]>} : vector<4x2x8xbf16>, vector<4x2x8xbf16>, vector<4x2x2xf32> -> vector<4x2x2xf32>
    "tpu.trace_stop"() : () -> ()
    %cst_9 = arith.constant 0.353553385 : f32
    %22 = vector.broadcast %cst_9 : f32 to vector<4x2x2xf32>
    %23 = arith.mulf %21, %22 : vector<4x2x2xf32>
    %cst_10 = arith.constant dense<0xFF800000> : vector<4x2xf32>
    %24 = vector.multi_reduction <maximumf>, %23, %cst_10 [2] : vector<4x2x2xf32> to vector<4x2xf32>
    %25 = vector.shape_cast %24 : vector<4x2xf32> to vector<4x2x1xf32>
    %26 = vector.broadcast %25 : vector<4x2x1xf32> to vector<4x2x2xf32>
    %27 = arith.subf %23, %26 : vector<4x2x2xf32>
    %28 = math.exp %27 : vector<4x2x2xf32>
    %cst_11 = arith.constant dense<0.000000e+00> : vector<4x2xf32>
    %29 = vector.multi_reduction <add>, %28, %cst_11 [2] : vector<4x2x2xf32> to vector<4x2xf32>
    %30 = vector.shape_cast %29 : vector<4x2xf32> to vector<4x2x1xf32>
    %31 = tpu.reciprocal %30 {approx = true} : vector<4x2x1xf32> -> vector<4x2x1xf32>
    %32 = vector.broadcast %31 : vector<4x2x1xf32> to vector<4x2x2xf32>
    %33 = arith.mulf %28, %32 : vector<4x2x2xf32>
    %34 = arith.truncf %33 : vector<4x2x2xf32> to vector<4x2x2xbf16>
    %35 = arith.truncf %18 : vector<4x2x8xf32> to vector<4x2x8xbf16>
    "tpu.trace_start"() <{level = 10 : i32, message = "sij,sjd->sid"}> : () -> ()
    %cst_12 = arith.constant dense<0.000000e+00> : vector<4x2x8xf32>
    %36 = tpu.matmul %34, %35, %cst_12 {dimension_numbers = #tpu.dot_dimension_numbers<[2], [1], [1], [2], [0, 0, 0, 1, 1, 2], [0], [0]>} : vector<4x2x2xbf16>, vector<4x2x8xbf16>, vector<4x2x8xf32> -> vector<4x2x8xf32>
    "tpu.trace_stop"() : () -> ()
    %37 = vector.shape_cast %36 : vector<4x2x8xf32> to vector<8x8xf32>
    %38 = vector.extract_strided_slice %12 {offsets = [0, 8], sizes = [8, 8], strides = [1, 1]} : vector<8x96xf32> to vector<8x8xf32>
    %39 = vector.shape_cast %38 : vector<8x8xf32> to vector<4x2x8xf32>
    %40 = vector.extract_strided_slice %12 {offsets = [0, 40], sizes = [8, 8], strides = [1, 1]} : vector<8x96xf32> to vector<8x8xf32>
    %41 = vector.shape_cast %40 : vector<8x8xf32> to vector<4x2x8xf32>
    %42 = vector.extract_strided_slice %12 {offsets = [0, 72], sizes = [8, 8], strides = [1, 1]} : vector<8x96xf32> to vector<8x8xf32>
    %43 = vector.shape_cast %42 : vector<8x8xf32> to vector<4x2x8xf32>
    %44 = arith.truncf %39 : vector<4x2x8xf32> to vector<4x2x8xbf16>
    %45 = arith.truncf %41 : vector<4x2x8xf32> to vector<4x2x8xbf16>
    "tpu.trace_start"() <{level = 10 : i32, message = "sid,sjd->sij"}> : () -> ()
    %cst_13 = arith.constant dense<0.000000e+00> : vector<4x2x2xf32>
    %46 = tpu.matmul %44, %45, %cst_13 {dimension_numbers = #tpu.dot_dimension_numbers<[2], [2], [1], [1], [0, 0, 0, 1, 1, 1], [0], [0]>} : vector<4x2x8xbf16>, vector<4x2x8xbf16>, vector<4x2x2xf32> -> vector<4x2x2xf32>
    "tpu.trace_stop"() : () -> ()
    %cst_14 = arith.constant 0.353553385 : f32
    %47 = vector.broadcast %cst_14 : f32 to vector<4x2x2xf32>
    %48 = arith.mulf %46, %47 : vector<4x2x2xf32>
    %cst_15 = arith.constant dense<0xFF800000> : vector<4x2xf32>
    %49 = vector.multi_reduction <maximumf>, %48, %cst_15 [2] : vector<4x2x2xf32> to vector<4x2xf32>
    %50 = vector.shape_cast %49 : vector<4x2xf32> to vector<4x2x1xf32>
    %51 = vector.broadcast %50 : vector<4x2x1xf32> to vector<4x2x2xf32>
    %52 = arith.subf %48, %51 : vector<4x2x2xf32>
    %53 = math.exp %52 : vector<4x2x2xf32>
    %cst_16 = arith.constant dense<0.000000e+00> : vector<4x2xf32>
    %54 = vector.multi_reduction <add>, %53, %cst_16 [2] : vector<4x2x2xf32> to vector<4x2xf32>
    %55 = vector.shape_cast %54 : vector<4x2xf32> to vector<4x2x1xf32>
    %56 = tpu.reciprocal %55 {approx = true} : vector<4x2x1xf32> -> vector<4x2x1xf32>
    %57 = vector.broadcast %56 : vector<4x2x1xf32> to vector<4x2x2xf32>
    %58 = arith.mulf %53, %57 : vector<4x2x2xf32>
    %59 = arith.truncf %58 : vector<4x2x2xf32> to vector<4x2x2xbf16>
    %60 = arith.truncf %43 : vector<4x2x8xf32> to vector<4x2x8xbf16>
    "tpu.trace_start"() <{level = 10 : i32, message = "sij,sjd->sid"}> : () -> ()
    %cst_17 = arith.constant dense<0.000000e+00> : vector<4x2x8xf32>
    %61 = tpu.matmul %59, %60, %cst_17 {dimension_numbers = #tpu.dot_dimension_numbers<[2], [1], [1], [2], [0, 0, 0, 1, 1, 2], [0], [0]>} : vector<4x2x2xbf16>, vector<4x2x8xbf16>, vector<4x2x8xf32> -> vector<4x2x8xf32>
    "tpu.trace_stop"() : () -> ()
    %62 = vector.shape_cast %61 : vector<4x2x8xf32> to vector<8x8xf32>
    %63 = vector.extract_strided_slice %12 {offsets = [0, 16], sizes = [8, 8], strides = [1, 1]} : vector<8x96xf32> to vector<8x8xf32>
    %64 = vector.shape_cast %63 : vector<8x8xf32> to vector<4x2x8xf32>
    %65 = vector.extract_strided_slice %12 {offsets = [0, 48], sizes = [8, 8], strides = [1, 1]} : vector<8x96xf32> to vector<8x8xf32>
    %66 = vector.shape_cast %65 : vector<8x8xf32> to vector<4x2x8xf32>
    %67 = vector.extract_strided_slice %12 {offsets = [0, 80], sizes = [8, 8], strides = [1, 1]} : vector<8x96xf32> to vector<8x8xf32>
    %68 = vector.shape_cast %67 : vector<8x8xf32> to vector<4x2x8xf32>
    %69 = arith.truncf %64 : vector<4x2x8xf32> to vector<4x2x8xbf16>
    %70 = arith.truncf %66 : vector<4x2x8xf32> to vector<4x2x8xbf16>
    "tpu.trace_start"() <{level = 10 : i32, message = "sid,sjd->sij"}> : () -> ()
    %cst_18 = arith.constant dense<0.000000e+00> : vector<4x2x2xf32>
    %71 = tpu.matmul %69, %70, %cst_18 {dimension_numbers = #tpu.dot_dimension_numbers<[2], [2], [1], [1], [0, 0, 0, 1, 1, 1], [0], [0]>} : vector<4x2x8xbf16>, vector<4x2x8xbf16>, vector<4x2x2xf32> -> vector<4x2x2xf32>
    "tpu.trace_stop"() : () -> ()
    %cst_19 = arith.constant 0.353553385 : f32
    %72 = vector.broadcast %cst_19 : f32 to vector<4x2x2xf32>
    %73 = arith.mulf %71, %72 : vector<4x2x2xf32>
    %cst_20 = arith.constant dense<0xFF800000> : vector<4x2xf32>
    %74 = vector.multi_reduction <maximumf>, %73, %cst_20 [2] : vector<4x2x2xf32> to vector<4x2xf32>
    %75 = vector.shape_cast %74 : vector<4x2xf32> to vector<4x2x1xf32>
    %76 = vector.broadcast %75 : vector<4x2x1xf32> to vector<4x2x2xf32>
    %77 = arith.subf %73, %76 : vector<4x2x2xf32>
    %78 = math.exp %77 : vector<4x2x2xf32>
    %cst_21 = arith.constant dense<0.000000e+00> : vector<4x2xf32>
    %79 = vector.multi_reduction <add>, %78, %cst_21 [2] : vector<4x2x2xf32> to vector<4x2xf32>
    %80 = vector.shape_cast %79 : vector<4x2xf32> to vector<4x2x1xf32>
    %81 = tpu.reciprocal %80 {approx = true} : vector<4x2x1xf32> -> vector<4x2x1xf32>
    %82 = vector.broadcast %81 : vector<4x2x1xf32> to vector<4x2x2xf32>
    %83 = arith.mulf %78, %82 : vector<4x2x2xf32>
    %84 = arith.truncf %83 : vector<4x2x2xf32> to vector<4x2x2xbf16>
    %85 = arith.truncf %68 : vector<4x2x8xf32> to vector<4x2x8xbf16>
    "tpu.trace_start"() <{level = 10 : i32, message = "sij,sjd->sid"}> : () -> ()
    %cst_22 = arith.constant dense<0.000000e+00> : vector<4x2x8xf32>
    %86 = tpu.matmul %84, %85, %cst_22 {dimension_numbers = #tpu.dot_dimension_numbers<[2], [1], [1], [2], [0, 0, 0, 1, 1, 2], [0], [0]>} : vector<4x2x2xbf16>, vector<4x2x8xbf16>, vector<4x2x8xf32> -> vector<4x2x8xf32>
    "tpu.trace_stop"() : () -> ()
    %87 = vector.shape_cast %86 : vector<4x2x8xf32> to vector<8x8xf32>
    %88 = vector.extract_strided_slice %12 {offsets = [0, 24], sizes = [8, 8], strides = [1, 1]} : vector<8x96xf32> to vector<8x8xf32>
    %89 = vector.shape_cast %88 : vector<8x8xf32> to vector<4x2x8xf32>
    %90 = vector.extract_strided_slice %12 {offsets = [0, 56], sizes = [8, 8], strides = [1, 1]} : vector<8x96xf32> to vector<8x8xf32>
    %91 = vector.shape_cast %90 : vector<8x8xf32> to vector<4x2x8xf32>
    %92 = vector.extract_strided_slice %12 {offsets = [0, 88], sizes = [8, 8], strides = [1, 1]} : vector<8x96xf32> to vector<8x8xf32>
    %93 = vector.shape_cast %92 : vector<8x8xf32> to vector<4x2x8xf32>
    %94 = arith.truncf %89 : vector<4x2x8xf32> to vector<4x2x8xbf16>
    %95 = arith.truncf %91 : vector<4x2x8xf32> to vector<4x2x8xbf16>
    "tpu.trace_start"() <{level = 10 : i32, message = "sid,sjd->sij"}> : () -> ()
    %cst_23 = arith.constant dense<0.000000e+00> : vector<4x2x2xf32>
    %96 = tpu.matmul %94, %95, %cst_23 {dimension_numbers = #tpu.dot_dimension_numbers<[2], [2], [1], [1], [0, 0, 0, 1, 1, 1], [0], [0]>} : vector<4x2x8xbf16>, vector<4x2x8xbf16>, vector<4x2x2xf32> -> vector<4x2x2xf32>
    "tpu.trace_stop"() : () -> ()
    %cst_24 = arith.constant 0.353553385 : f32
    %97 = vector.broadcast %cst_24 : f32 to vector<4x2x2xf32>
    %98 = arith.mulf %96, %97 : vector<4x2x2xf32>
    %cst_25 = arith.constant dense<0xFF800000> : vector<4x2xf32>
    %99 = vector.multi_reduction <maximumf>, %98, %cst_25 [2] : vector<4x2x2xf32> to vector<4x2xf32>
    %100 = vector.shape_cast %99 : vector<4x2xf32> to vector<4x2x1xf32>
    %101 = vector.broadcast %100 : vector<4x2x1xf32> to vector<4x2x2xf32>
    %102 = arith.subf %98, %101 : vector<4x2x2xf32>
    %103 = math.exp %102 : vector<4x2x2xf32>
    %cst_26 = arith.constant dense<0.000000e+00> : vector<4x2xf32>
    %104 = vector.multi_reduction <add>, %103, %cst_26 [2] : vector<4x2x2xf32> to vector<4x2xf32>
    %105 = vector.shape_cast %104 : vector<4x2xf32> to vector<4x2x1xf32>
    %106 = tpu.reciprocal %105 {approx = true} : vector<4x2x1xf32> -> vector<4x2x1xf32>
    %107 = vector.broadcast %106 : vector<4x2x1xf32> to vector<4x2x2xf32>
    %108 = arith.mulf %103, %107 : vector<4x2x2xf32>
    %109 = arith.truncf %108 : vector<4x2x2xf32> to vector<4x2x2xbf16>
    %110 = arith.truncf %93 : vector<4x2x8xf32> to vector<4x2x8xbf16>
    "tpu.trace_start"() <{level = 10 : i32, message = "sij,sjd->sid"}> : () -> ()
    %cst_27 = arith.constant dense<0.000000e+00> : vector<4x2x8xf32>
    %111 = tpu.matmul %109, %110, %cst_27 {dimension_numbers = #tpu.dot_dimension_numbers<[2], [1], [1], [2], [0, 0, 0, 1, 1, 2], [0], [0]>} : vector<4x2x2xbf16>, vector<4x2x8xbf16>, vector<4x2x8xf32> -> vector<4x2x8xf32>
    "tpu.trace_stop"() : () -> ()
    %112 = vector.shape_cast %111 : vector<4x2x8xf32> to vector<8x8xf32>
    %113 = tpu.concatenate %37, %62, %87, %112 in 1 : vector<8x8xf32>, vector<8x8xf32>, vector<8x8xf32>, vector<8x8xf32> -> vector<8x32xf32>
    %c0_28 = arith.constant 0 : index
    %c0_29 = arith.constant 0 : index
    %c0_30 = arith.constant 0 : index
    %114 = vector.load %arg8[%c0_28, %c0_29, %c0_30] : memref<1x32x32xf32, #tpu.memory_space<vmem>>, vector<1x32x32xf32>
    %115 = vector.shape_cast %114 : vector<1x32x32xf32> to vector<32x32xf32>
    %116 = arith.truncf %113 : vector<8x32xf32> to vector<8x32xbf16>
    %117 = arith.truncf %115 : vector<32x32xf32> to vector<32x32xbf16>
    %cst_31 = arith.constant dense<0.000000e+00> : vector<8x32xf32>
    %118 = tpu.matmul %116, %117, %cst_31 {dimension_numbers = #tpu.dot_dimension_numbers<[1], [0], [0], [1], [0, 0, 1, 1], [], []>} : vector<8x32xbf16>, vector<32x32xbf16>, vector<8x32xf32> -> vector<8x32xf32>
    %c0_32 = arith.constant 0 : index
    %c0_33 = arith.constant 0 : index
    %c0_34 = arith.constant 0 : index
    %119 = vector.load %arg9[%c0_32, %c0_33, %c0_34] : memref<1x1x32xf32, #tpu.memory_space<vmem>>, vector<1x1x32xf32>
    %120 = vector.shape_cast %119 : vector<1x1x32xf32> to vector<1x32xf32>
    %121 = vector.broadcast %120 : vector<1x32xf32> to vector<8x32xf32>
    %122 = arith.addf %118, %121 : vector<8x32xf32>
    %123 = arith.addf %3, %122 : vector<8x32xf32>
    %c0_35 = arith.constant 0 : index
    %c0_36 = arith.constant 0 : index
    %c0_37 = arith.constant 0 : index
    %124 = vector.load %arg10[%c0_35, %c0_36, %c0_37] : memref<1x1x32xf32, #tpu.memory_space<vmem>>, vector<1x1x32xf32>
    %125 = vector.shape_cast %124 : vector<1x1x32xf32> to vector<1x32xf32>
    %c0_38 = arith.constant 0 : index
    %c0_39 = arith.constant 0 : index
    %c0_40 = arith.constant 0 : index
    %126 = vector.load %arg11[%c0_38, %c0_39, %c0_40] : memref<1x1x32xf32, #tpu.memory_space<vmem>>, vector<1x1x32xf32>
    %127 = vector.shape_cast %126 : vector<1x1x32xf32> to vector<1x32xf32>
    %cst_41 = arith.constant dense<0.000000e+00> : vector<8xf32>
    %128 = vector.multi_reduction <add>, %123, %cst_41 [1] : vector<8x32xf32> to vector<8xf32>
    %129 = vector.shape_cast %128 : vector<8xf32> to vector<8x1xf32>
    %cst_42 = arith.constant 3.200000e+01 : f32
    %130 = vector.broadcast %cst_42 : f32 to vector<8x1xf32>
    %131 = arith.divf %129, %130 : vector<8x1xf32>
    %132 = vector.broadcast %131 : vector<8x1xf32> to vector<8x32xf32>
    %133 = arith.subf %123, %132 : vector<8x32xf32>
    %134 = arith.mulf %133, %133 : vector<8x32xf32>
    %cst_43 = arith.constant dense<0.000000e+00> : vector<8xf32>
    %135 = vector.multi_reduction <add>, %134, %cst_43 [1] : vector<8x32xf32> to vector<8xf32>
    %136 = vector.shape_cast %135 : vector<8xf32> to vector<8x1xf32>
    %cst_44 = arith.constant 3.200000e+01 : f32
    %137 = vector.broadcast %cst_44 : f32 to vector<8x1xf32>
    %138 = arith.divf %136, %137 : vector<8x1xf32>
    %cst_45 = arith.constant 9.99999974E-6 : f32
    %139 = vector.broadcast %cst_45 : f32 to vector<8x1xf32>
    %140 = arith.addf %138, %139 : vector<8x1xf32>
    %141 = math.rsqrt %140 : vector<8x1xf32>
    %142 = vector.broadcast %141 : vector<8x1xf32> to vector<8x32xf32>
    %143 = arith.mulf %133, %142 : vector<8x32xf32>
    %144 = vector.broadcast %125 : vector<1x32xf32> to vector<8x32xf32>
    %145 = arith.mulf %143, %144 : vector<8x32xf32>
    %146 = vector.broadcast %127 : vector<1x32xf32> to vector<8x32xf32>
    %147 = arith.addf %145, %146 : vector<8x32xf32>
    %c0_46 = arith.constant 0 : index
    %c0_47 = arith.constant 0 : index
    %c0_48 = arith.constant 0 : index
    %148 = vector.load %arg12[%c0_46, %c0_47, %c0_48] : memref<1x32x2048xf32, #tpu.memory_space<vmem>>, vector<1x32x2048xf32>
    %149 = vector.shape_cast %148 : vector<1x32x2048xf32> to vector<32x2048xf32>
    %150 = arith.truncf %147 : vector<8x32xf32> to vector<8x32xbf16>
    %151 = arith.truncf %149 : vector<32x2048xf32> to vector<32x2048xbf16>
    %cst_49 = arith.constant dense<0.000000e+00> : vector<8x2048xf32>
    %152 = tpu.matmul %150, %151, %cst_49 {dimension_numbers = #tpu.dot_dimension_numbers<[1], [0], [0], [1], [0, 0, 1, 1], [], []>} : vector<8x32xbf16>, vector<32x2048xbf16>, vector<8x2048xf32> -> vector<8x2048xf32>
    %c0_50 = arith.constant 0 : index
    %c0_51 = arith.constant 0 : index
    %c0_52 = arith.constant 0 : index
    %153 = vector.load %arg13[%c0_50, %c0_51, %c0_52] : memref<1x1x2048xf32, #tpu.memory_space<vmem>>, vector<1x1x2048xf32>
    %154 = vector.shape_cast %153 : vector<1x1x2048xf32> to vector<1x2048xf32>
    %155 = vector.broadcast %154 : vector<1x2048xf32> to vector<8x2048xf32>
    %156 = arith.addf %152, %155 : vector<8x2048xf32>
    %cst_53 = arith.constant 0.000000e+00 : f32
    %157 = vector.broadcast %cst_53 : f32 to vector<8x2048xf32>
    %158 = arith.maximumf %156, %157 : vector<8x2048xf32>
    %c0_54 = arith.constant 0 : index
    %c0_55 = arith.constant 0 : index
    %c0_56 = arith.constant 0 : index
    %159 = vector.load %arg14[%c0_54, %c0_55, %c0_56] : memref<1x2048x32xf32, #tpu.memory_space<vmem>>, vector<1x2048x32xf32>
    %160 = vector.shape_cast %159 : vector<1x2048x32xf32> to vector<2048x32xf32>
    %161 = arith.truncf %158 : vector<8x2048xf32> to vector<8x2048xbf16>
    %162 = arith.truncf %160 : vector<2048x32xf32> to vector<2048x32xbf16>
    %cst_57 = arith.constant dense<0.000000e+00> : vector<8x32xf32>
    %163 = tpu.matmul %161, %162, %cst_57 {dimension_numbers = #tpu.dot_dimension_numbers<[1], [0], [0], [1], [0, 0, 1, 1], [], []>} : vector<8x2048xbf16>, vector<2048x32xbf16>, vector<8x32xf32> -> vector<8x32xf32>
    %c0_58 = arith.constant 0 : index
    %c0_59 = arith.constant 0 : index
    %c0_60 = arith.constant 0 : index
    %164 = vector.load %arg15[%c0_58, %c0_59, %c0_60] : memref<1x1x32xf32, #tpu.memory_space<vmem>>, vector<1x1x32xf32>
    %165 = vector.shape_cast %164 : vector<1x1x32xf32> to vector<1x32xf32>
    %166 = vector.broadcast %165 : vector<1x32xf32> to vector<8x32xf32>
    %167 = arith.addf %163, %166 : vector<8x32xf32>
    %168 = arith.addf %147, %167 : vector<8x32xf32>
    %c0_61 = arith.constant 0 : index
    %c0_62 = arith.constant 0 : index
    %c0_63 = arith.constant 0 : index
    %169 = vector.load %arg16[%c0_61, %c0_62, %c0_63] : memref<1x1x32xf32, #tpu.memory_space<vmem>>, vector<1x1x32xf32>
    %170 = vector.shape_cast %169 : vector<1x1x32xf32> to vector<1x32xf32>
    %c0_64 = arith.constant 0 : index
    %c0_65 = arith.constant 0 : index
    %c0_66 = arith.constant 0 : index
    %171 = vector.load %arg17[%c0_64, %c0_65, %c0_66] : memref<1x1x32xf32, #tpu.memory_space<vmem>>, vector<1x1x32xf32>
    %172 = vector.shape_cast %171 : vector<1x1x32xf32> to vector<1x32xf32>
    %cst_67 = arith.constant dense<0.000000e+00> : vector<8xf32>
    %173 = vector.multi_reduction <add>, %168, %cst_67 [1] : vector<8x32xf32> to vector<8xf32>
    %174 = vector.shape_cast %173 : vector<8xf32> to vector<8x1xf32>
    %cst_68 = arith.constant 3.200000e+01 : f32
    %175 = vector.broadcast %cst_68 : f32 to vector<8x1xf32>
    %176 = arith.divf %174, %175 : vector<8x1xf32>
    %177 = vector.broadcast %176 : vector<8x1xf32> to vector<8x32xf32>
    %178 = arith.subf %168, %177 : vector<8x32xf32>
    %179 = arith.mulf %178, %178 : vector<8x32xf32>
    %cst_69 = arith.constant dense<0.000000e+00> : vector<8xf32>
    %180 = vector.multi_reduction <add>, %179, %cst_69 [1] : vector<8x32xf32> to vector<8xf32>
    %181 = vector.shape_cast %180 : vector<8xf32> to vector<8x1xf32>
    %cst_70 = arith.constant 3.200000e+01 : f32
    %182 = vector.broadcast %cst_70 : f32 to vector<8x1xf32>
    %183 = arith.divf %181, %182 : vector<8x1xf32>
    %cst_71 = arith.constant 9.99999974E-6 : f32
    %184 = vector.broadcast %cst_71 : f32 to vector<8x1xf32>
    %185 = arith.addf %183, %184 : vector<8x1xf32>
    %186 = math.rsqrt %185 : vector<8x1xf32>
    %187 = vector.broadcast %186 : vector<8x1xf32> to vector<8x32xf32>
    %188 = arith.mulf %178, %187 : vector<8x32xf32>
    %189 = vector.broadcast %170 : vector<1x32xf32> to vector<8x32xf32>
    %190 = arith.mulf %188, %189 : vector<8x32xf32>
    %191 = vector.broadcast %172 : vector<1x32xf32> to vector<8x32xf32>
    %192 = arith.addf %190, %191 : vector<8x32xf32>
    %c0_72 = arith.constant 0 : index
    %c0_73 = arith.constant 0 : index
    %193 = vector.load %arg19[%c0_72, %c0_73] : memref<8x32xf32, #tpu.memory_space<vmem>>, vector<8x32xf32>
    tpu.vector_store %arg19[%c0_72, %c0_73], %192 {strides = array<i32>} : memref<8x32xf32, #tpu.memory_space<vmem>>, vector<8x32xf32>,
    %c1_i32 = arith.constant 1 : i32
    %194 = arith.cmpi eq, %arg1, %c1_i32 : i32
    %195 = arith.extui %194 : i1 to i32
    %c0_i32_74 = arith.constant 0 : i32
    %196 = arith.cmpi ne, %195, %c0_i32_74 : i32
    scf.if %196 {
      %197 = vector.shape_cast %192 : vector<8x32xf32> to vector<4x2x32xf32>
      %cst_75 = arith.constant dense<0.000000e+00> : vector<2x32xf32>
      %198 = vector.multi_reduction <add>, %197, %cst_75 [0] : vector<4x2x32xf32> to vector<2x32xf32>
      %c0_76 = arith.constant 0 : index
      %c0_77 = arith.constant 0 : index
      %c0_78 = arith.constant 0 : index
      %199 = vector.load %arg18[%c0_76, %c0_77, %c0_78] : memref<1x2x32xf32, #tpu.memory_space<vmem>>, vector<1x2x32xf32>
      %200 = vector.shape_cast %199 : vector<1x2x32xf32> to vector<2x32xf32>
      %201 = vector.shape_cast %198 : vector<2x32xf32> to vector<1x2x32xf32>
      tpu.vector_store %arg18[%c0_76, %c0_77, %c0_78], %201 {strides = array<i32>} : memref<1x2x32xf32, #tpu.memory_space<vmem>>, vector<1x2x32xf32>,
    } else {
    }
    return
  }
  func.func @transform_0(%arg0: i32, %arg1: i32) -> (i32, i32, i32) {
    %c0_i32 = arith.constant 0 : i32
    %c0_i32_0 = arith.constant 0 : i32
    %c0_i32_1 = arith.constant 0 : i32
    return %arg0, %c0_i32, %c0_i32_0 : i32, i32, i32
  }
  func.func @transform_1(%arg0: i32, %arg1: i32) -> (i32, i32, i32) {
    %c0_i32 = arith.constant 0 : i32
    %c0_i32_0 = arith.constant 0 : i32
    %c0_i32_1 = arith.constant 0 : i32
    return %arg0, %c0_i32, %c0_i32_0 : i32, i32, i32
  }
  func.func @transform_2(%arg0: i32, %arg1: i32) -> (i32, i32) {
    %c0_i32 = arith.constant 0 : i32
    %c0_i32_0 = arith.constant 0 : i32
    %c0_i32_1 = arith.constant 0 : i32
    return %c0_i32, %c0_i32_0 : i32, i32
  }
  func.func @transform_3(%arg0: i32, %arg1: i32) -> (i32, i32) {
    %c0_i32 = arith.constant 0 : i32
    %c0_i32_0 = arith.constant 0 : i32
    %c0_i32_1 = arith.constant 0 : i32
    return %c0_i32, %c0_i32_0 : i32, i32
  }
  func.func @transform_4(%arg0: i32, %arg1: i32) -> (i32, i32, i32) {
    %c0_i32 = arith.constant 0 : i32
    %c0_i32_0 = arith.constant 0 : i32
    %c0_i32_1 = arith.constant 0 : i32
    return %arg1, %c0_i32, %c0_i32_0 : i32, i32, i32
  }
  func.func @transform_5(%arg0: i32, %arg1: i32) -> (i32, i32, i32) {
    %c0_i32 = arith.constant 0 : i32
    %c0_i32_0 = arith.constant 0 : i32
    %c0_i32_1 = arith.constant 0 : i32
    return %arg1, %c0_i32, %c0_i32_0 : i32, i32, i32
  }
  func.func @transform_6(%arg0: i32, %arg1: i32) -> (i32, i32, i32) {
    %c0_i32 = arith.constant 0 : i32
    %c0_i32_0 = arith.constant 0 : i32
    %c0_i32_1 = arith.constant 0 : i32
    return %arg1, %c0_i32, %c0_i32_0 : i32, i32, i32
  }
  func.func @transform_7(%arg0: i32, %arg1: i32) -> (i32, i32, i32) {
    %c0_i32 = arith.constant 0 : i32
    %c0_i32_0 = arith.constant 0 : i32
    %c0_i32_1 = arith.constant 0 : i32
    return %arg1, %c0_i32, %c0_i32_0 : i32, i32, i32
  }
  func.func @transform_8(%arg0: i32, %arg1: i32) -> (i32, i32, i32) {
    %c0_i32 = arith.constant 0 : i32
    %c0_i32_0 = arith.constant 0 : i32
    %c0_i32_1 = arith.constant 0 : i32
    return %arg1, %c0_i32, %c0_i32_0 : i32, i32, i32
  }
  func.func @transform_9(%arg0: i32, %arg1: i32) -> (i32, i32, i32) {
    %c0_i32 = arith.constant 0 : i32
    %c0_i32_0 = arith.constant 0 : i32
    %c0_i32_1 = arith.constant 0 : i32
    return %arg1, %c0_i32, %c0_i32_0 : i32, i32, i32
  }
  func.func @transform_10(%arg0: i32, %arg1: i32) -> (i32, i32, i32) {
    %c0_i32 = arith.constant 0 : i32
    %c0_i32_0 = arith.constant 0 : i32
    %c0_i32_1 = arith.constant 0 : i32
    return %arg1, %c0_i32, %c0_i32_0 : i32, i32, i32
  }
  func.func @transform_11(%arg0: i32, %arg1: i32) -> (i32, i32, i32) {
    %c0_i32 = arith.constant 0 : i32
    %c0_i32_0 = arith.constant 0 : i32
    %c0_i32_1 = arith.constant 0 : i32
    return %arg1, %c0_i32, %c0_i32_0 : i32, i32, i32
  }
  func.func @transform_12(%arg0: i32, %arg1: i32) -> (i32, i32, i32) {
    %c0_i32 = arith.constant 0 : i32
    %c0_i32_0 = arith.constant 0 : i32
    %c0_i32_1 = arith.constant 0 : i32
    return %arg1, %c0_i32, %c0_i32_0 : i32, i32, i32
  }
  func.func @transform_13(%arg0: i32, %arg1: i32) -> (i32, i32, i32) {
    %c0_i32 = arith.constant 0 : i32
    %c0_i32_0 = arith.constant 0 : i32
    %c0_i32_1 = arith.constant 0 : i32
    return %arg1, %c0_i32, %c0_i32_0 : i32, i32, i32
  }
  func.func @transform_14(%arg0: i32, %arg1: i32) -> (i32, i32, i32) {
    %c0_i32 = arith.constant 0 : i32
    %c0_i32_0 = arith.constant 0 : i32
    %c0_i32_1 = arith.constant 0 : i32
    return %arg1, %c0_i32, %c0_i32_0 : i32, i32, i32
  }
  func.func @transform_15(%arg0: i32, %arg1: i32) -> (i32, i32, i32) {
    %c0_i32 = arith.constant 0 : i32
    %c0_i32_0 = arith.constant 0 : i32
    %c0_i32_1 = arith.constant 0 : i32
    return %arg1, %c0_i32, %c0_i32_0 : i32, i32, i32
  }
  func.func @transform_16(%arg0: i32, %arg1: i32) -> (i32, i32, i32) {
    %c0_i32 = arith.constant 0 : i32
    %c0_i32_0 = arith.constant 0 : i32
    %c0_i32_1 = arith.constant 0 : i32
    return %arg0, %c0_i32, %c0_i32_0 : i32, i32, i32
  }
}

</mosaic_0001>

<llo_original>
// kernel: transformer_forward.1
$region0: #{transformer_forward.1}
  #allocation0 [shape = 'u32[]', space=smem, size = 0x4, offset = 0x4, fixed_abs, tag = 'smem constant byte address 0x4 - core index']
  #allocation1 [shape = 'u32[72,128]{1,0:T(1,128)}', space=vmem, size = 0x9000, scoped, tag = 'internal scratch']
  #allocation2 [shape = 'f32[8,32]{1,0:T(8,128)}', space=vmem, size = 0x1000, scoped, tag = 'scratch operand']
  %s0 = inlined_call_operand.vmem [shape: f32[8,2,16], index: 0, kind: input, shape index: {}]
  %s1 = inlined_call_operand.vmem [shape: f32[8,1,32], index: 1, kind: input, shape index: {}]
  %s2 = inlined_call_operand.vmem [shape: f32[16,32], index: 2, kind: input, shape index: {}]
  %s3 = inlined_call_operand.vmem [shape: f32[1,32], index: 3, kind: input, shape index: {}]
  %s4 = inlined_call_operand.vmem [shape: f32[2,32,96], index: 4, kind: input, shape index: {}]
  %s5 = inlined_call_operand.vmem [shape: f32[2,1,96], index: 5, kind: input, shape index: {}]
  %s6 = inlined_call_operand.vmem [shape: f32[2,32,32], index: 6, kind: input, shape index: {}]
  %s7 = inlined_call_operand.vmem [shape: f32[2,1,32], index: 7, kind: input, shape index: {}]
  %s8 = inlined_call_operand.vmem [shape: f32[2,1,32], index: 8, kind: input, shape index: {}]
  %s9 = inlined_call_operand.vmem [shape: f32[2,1,32], index: 9, kind: input, shape index: {}]
  %s10 = inlined_call_operand.vmem [shape: f32[2,32,2048], index: 10, kind: input, shape index: {}]
  %s11 = inlined_call_operand.vmem [shape: f32[2,1,2048], index: 11, kind: input, shape index: {}]
  %s12 = inlined_call_operand.vmem [shape: f32[2,2048,32], index: 12, kind: input, shape index: {}]
  %s13 = inlined_call_operand.vmem [shape: f32[2,1,32], index: 13, kind: input, shape index: {}]
  %s14 = inlined_call_operand.vmem [shape: f32[2,1,32], index: 14, kind: input, shape index: {}]
  %s15 = inlined_call_operand.vmem [shape: f32[2,1,32], index: 15, kind: input, shape index: {}]
  %s16 = inlined_call_operand.vmem [shape: f32[2,2,32], index: 16, kind: output, shape index: {}]
  %s17 = sld [smem:[#allocation0]]
  $region105: #{transformer_forward.1} parent=0
    _
  %s19 = ssub.s32 1, %s17
  %s20 = scalar_select 0, %s19, %s17
  loop: start=0, step=1, limit=6
  $region2: #{transformer_forward.1} parent=0 // loop_pre_header
    _
  $region3: #{transformer_forward.1} parent=0 // loop_header
    %s22 = sphi 0, %s26
    %p23 = scmp.ge.s32.totalorder %s22, 6
    %s29 = sphi 0, %s41
    %s30 = sphi 0, %s37
    %s31 = sphi 0, %s29
    %s32 = sphi 0, %s30
    %s33 = sphi 0, %s31
    %s34 = sphi 0, %s32
    %s44 = sphi 0, %s46
    %s47 = sphi 0, %s44
    %s48 = sphi 0, %s47
    %s64 = sphi 0, %s48
    %s70 = sphi 0, %s72
    %s73 = sphi 0, %s70
    %s74 = sphi 0, %s73
    %s90 = sphi 0, %s74
    %s94 = sphi 0, %s94
    %s96 = sphi 0, %s94
    %s97 = sphi 0, %s96
    %s111 = sphi 0, %s97
    %s115 = sphi 0, %s115
    %s117 = sphi 0, %s115
    %s118 = sphi 0, %s117
    %s132 = sphi 0, %s118
    %s138 = sphi 0, %s140
    %s141 = sphi 0, %s138
    %s142 = sphi 0, %s141
    %s158 = sphi 0, %s142
    %s164 = sphi 0, %s166
    %s167 = sphi 0, %s164
    %s168 = sphi 0, %s167
    %s184 = sphi 0, %s168
    %s190 = sphi 0, %s192
    %s193 = sphi 0, %s190
    %s194 = sphi 0, %s193
    %s210 = sphi 0, %s194
    %s216 = sphi 0, %s218
    %s219 = sphi 0, %s216
    %s220 = sphi 0, %s219
    %s236 = sphi 0, %s220
    %s242 = sphi 0, %s244
    %s245 = sphi 0, %s242
    %s246 = sphi 0, %s245
    %s262 = sphi 0, %s246
    %s268 = sphi 0, %s270
    %s271 = sphi 0, %s268
    %s272 = sphi 0, %s271
    %s288 = sphi 0, %s272
    %s294 = sphi 0, %s296
    %s297 = sphi 0, %s294
    %s298 = sphi 0, %s297
    %s314 = sphi 0, %s298
    %s320 = sphi 0, %s322
    %s323 = sphi 0, %s320
    %s324 = sphi 0, %s323
    %s340 = sphi 0, %s324
    %s346 = sphi 0, %s348
    %s349 = sphi 0, %s346
    %s350 = sphi 0, %s349
    %s366 = sphi 0, %s350
    %s372 = sphi 0, %s374
    %s375 = sphi 0, %s372
    %s376 = sphi 0, %s375
    %s392 = sphi 0, %s376
    %s398 = sphi 0, %s400
    %s401 = sphi 0, %s398
    %s402 = sphi 0, %s401
    %s418 = sphi 0, %s402
    %s424 = sphi 0, %s426
    %s427 = sphi 0, %s424
    %s428 = sphi 0, %s427
    %s444 = sphi 0, %s428
    %s450 = sphi 0, %s452
    %s453 = sphi 0, %s450
    %s454 = sphi 0, %s453
    %s470 = sphi 0, %s454
  $region4: #{transformer_forward.1} parent=0 // loop_header_branch
    %25 = sbr.rel (%p23) target = $region8
  $region5: #{transformer_forward.1} parent=0 // loop_body
    %s27 = ssub.s32 %s22, 1
    %s28 = ssub.s32 %s22, 2
    %s35 = sadd.s32 1, %s30
    %p36 = scmp.ge.s32.totalorder %s35, 2
    %s37 = scalar_select %p36, 0, %s35
    %s38 = sadd.s32 1, %s29
    %s39 = scalar_select %p36, %s38, %s29
    %p40 = scmp.ge.s32.totalorder %s39, 2
    %s41 = scalar_select %p40, 0, %s39
    %s42 = ssub.s32 %s29, %s41
    %p43 = scmp.eq.s32.totalorder %s42, 0
    %s45 = sadd.s32 %s44, 1
    %s46 = scalar_select %p43, %s44, %s45
    %p49 = pneg %p43
    %p50 = scmp.eq.s32.totalorder %s22, 3
    %p51 = por %p49, %p50
    %p52 = scmp.ne.s32.totalorder %s44, %s47
    %p53 = scmp.eq.s32.totalorder %s22, 0
    %p54 = por %p52, %p53
    %p55 = scmp.ne.s32.totalorder %s44, %s47
    %p56 = scmp.eq.s32.totalorder %s27, 3
    %p57 = por %p55, %p56
    %p58 = scmp.ne.s32.totalorder %s47, %s48
    %p59 = scmp.eq.s32.totalorder %s27, 0
    %p60 = por %p58, %p59
    %p61 = scmp.ne.s32.totalorder %s47, %s48
    %p62 = scmp.eq.s32.totalorder %s28, 3
    %p63 = por %p61, %p62
    %p65 = scmp.ne.s32.totalorder %s48, %s64
    %p66 = scmp.eq.s32.totalorder %s28, 0
    %p67 = por %p65, %p66
    %s68 = ssub.s32 %s29, %s41
    %p69 = scmp.eq.s32.totalorder %s68, 0
    %s71 = sadd.s32 %s70, 1
    %s72 = scalar_select %p69, %s70, %s71
    %p75 = pneg %p69
    %p76 = scmp.eq.s32.totalorder %s22, 3
    %p77 = por %p75, %p76
    %p78 = scmp.ne.s32.totalorder %s70, %s73
    %p79 = scmp.eq.s32.totalorder %s22, 0
    %p80 = por %p78, %p79
    %p81 = scmp.ne.s32.totalorder %s70, %s73
    %p82 = scmp.eq.s32.totalorder %s27, 3
    %p83 = por %p81, %p82
    %p84 = scmp.ne.s32.totalorder %s73, %s74
    %p85 = scmp.eq.s32.totalorder %s27, 0
    %p86 = por %p84, %p85
    %p87 = scmp.ne.s32.totalorder %s73, %s74
    %p88 = scmp.eq.s32.totalorder %s28, 3
    %p89 = por %p87, %p88
    %p91 = scmp.ne.s32.totalorder %s74, %s90
    %p92 = scmp.eq.s32.totalorder %s28, 0
    %p93 = por %p91, %p92
    %s95 = sadd.s32 %s94, 1
    %p98 = scmp.eq.s32.totalorder %s22, 3
    %p99 = scmp.ne.s32.totalorder %s94, %s96
    %p100 = scmp.eq.s32.totalorder %s22, 0
    %p101 = por %p99, %p100
    %p102 = scmp.ne.s32.totalorder %s94, %s96
    %p103 = scmp.eq.s32.totalorder %s27, 3
    %p104 = por %p102, %p103
    %p105 = scmp.ne.s32.totalorder %s96, %s97
    %p106 = scmp.eq.s32.totalorder %s27, 0
    %p107 = por %p105, %p106
    %p108 = scmp.ne.s32.totalorder %s96, %s97
    %p109 = scmp.eq.s32.totalorder %s28, 3
    %p110 = por %p108, %p109
    %p112 = scmp.ne.s32.totalorder %s97, %s111
    %p113 = scmp.eq.s32.totalorder %s28, 0
    %p114 = por %p112, %p113
    %s116 = sadd.s32 %s115, 1
    %p119 = scmp.eq.s32.totalorder %s22, 3
    %p120 = scmp.ne.s32.totalorder %s115, %s117
    %p121 = scmp.eq.s32.totalorder %s22, 0
    %p122 = por %p120, %p121
    %p123 = scmp.ne.s32.totalorder %s115, %s117
    %p124 = scmp.eq.s32.totalorder %s27, 3
    %p125 = por %p123, %p124
    %p126 = scmp.ne.s32.totalorder %s117, %s118
    %p127 = scmp.eq.s32.totalorder %s27, 0
    %p128 = por %p126, %p127
    %p129 = scmp.ne.s32.totalorder %s117, %s118
    %p130 = scmp.eq.s32.totalorder %s28, 3
    %p131 = por %p129, %p130
    %p133 = scmp.ne.s32.totalorder %s118, %s132
    %p134 = scmp.eq.s32.totalorder %s28, 0
    %p135 = por %p133, %p134
    %s136 = ssub.s32 %s30, %s37
    %p137 = scmp.eq.s32.totalorder %s136, 0
    %s139 = sadd.s32 %s138, 1
    %s140 = scalar_select %p137, %s138, %s139
    %p143 = pneg %p137
    %p144 = scmp.eq.s32.totalorder %s22, 3
    %p145 = por %p143, %p144
    %p146 = scmp.ne.s32.totalorder %s138, %s141
    %p147 = scmp.eq.s32.totalorder %s22, 0
    %p148 = por %p146, %p147
    %p149 = scmp.ne.s32.totalorder %s138, %s141
    %p150 = scmp.eq.s32.totalorder %s27, 3
    %p151 = por %p149, %p150
    %p152 = scmp.ne.s32.totalorder %s141, %s142
    %p153 = scmp.eq.s32.totalorder %s27, 0
    %p154 = por %p152, %p153
    %p155 = scmp.ne.s32.totalorder %s141, %s142
    %p156 = scmp.eq.s32.totalorder %s28, 3
    %p157 = por %p155, %p156
    %p159 = scmp.ne.s32.totalorder %s142, %s158
    %p160 = scmp.eq.s32.totalorder %s28, 0
    %p161 = por %p159, %p160
    %s162 = ssub.s32 %s30, %s37
    %p163 = scmp.eq.s32.totalorder %s162, 0
    %s165 = sadd.s32 %s164, 1
    %s166 = scalar_select %p163, %s164, %s165
    %p169 = pneg %p163
    %p170 = scmp.eq.s32.totalorder %s22, 3
    %p171 = por %p169, %p170
    %p172 = scmp.ne.s32.totalorder %s164, %s167
    %p173 = scmp.eq.s32.totalorder %s22, 0
    %p174 = por %p172, %p173
    %p175 = scmp.ne.s32.totalorder %s164, %s167
    %p176 = scmp.eq.s32.totalorder %s27, 3
    %p177 = por %p175, %p176
    %p178 = scmp.ne.s32.totalorder %s167, %s168
    %p179 = scmp.eq.s32.totalorder %s27, 0
    %p180 = por %p178, %p179
    %p181 = scmp.ne.s32.totalorder %s167, %s168
    %p182 = scmp.eq.s32.totalorder %s28, 3
    %p183 = por %p181, %p182
    %p185 = scmp.ne.s32.totalorder %s168, %s184
    %p186 = scmp.eq.s32.totalorder %s28, 0
    %p187 = por %p185, %p186
    %s188 = ssub.s32 %s30, %s37
    %p189 = scmp.eq.s32.totalorder %s188, 0
    %s191 = sadd.s32 %s190, 1
    %s192 = scalar_select %p189, %s190, %s191
    %p195 = pneg %p189
    %p196 = scmp.eq.s32.totalorder %s22, 3
    %p197 = por %p195, %p196
    %p198 = scmp.ne.s32.totalorder %s190, %s193
    %p199 = scmp.eq.s32.totalorder %s22, 0
    %p200 = por %p198, %p199
    %p201 = scmp.ne.s32.totalorder %s190, %s193
    %p202 = scmp.eq.s32.totalorder %s27, 3
    %p203 = por %p201, %p202
    %p204 = scmp.ne.s32.totalorder %s193, %s194
    %p205 = scmp.eq.s32.totalorder %s27, 0
    %p206 = por %p204, %p205
    %p207 = scmp.ne.s32.totalorder %s193, %s194
    %p208 = scmp.eq.s32.totalorder %s28, 3
    %p209 = por %p207, %p208
    %p211 = scmp.ne.s32.totalorder %s194, %s210
    %p212 = scmp.eq.s32.totalorder %s28, 0
    %p213 = por %p211, %p212
    %s214 = ssub.s32 %s30, %s37
    %p215 = scmp.eq.s32.totalorder %s214, 0
    %s217 = sadd.s32 %s216, 1
    %s218 = scalar_select %p215, %s216, %s217
    %p221 = pneg %p215
    %p222 = scmp.eq.s32.totalorder %s22, 3
    %p223 = por %p221, %p222
    %p224 = scmp.ne.s32.totalorder %s216, %s219
    %p225 = scmp.eq.s32.totalorder %s22, 0
    %p226 = por %p224, %p225
    %p227 = scmp.ne.s32.totalorder %s216, %s219
    %p228 = scmp.eq.s32.totalorder %s27, 3
    %p229 = por %p227, %p228
    %p230 = scmp.ne.s32.totalorder %s219, %s220
    %p231 = scmp.eq.s32.totalorder %s27, 0
    %p232 = por %p230, %p231
    %p233 = scmp.ne.s32.totalorder %s219, %s220
    %p234 = scmp.eq.s32.totalorder %s28, 3
    %p235 = por %p233, %p234
    %p237 = scmp.ne.s32.totalorder %s220, %s236
    %p238 = scmp.eq.s32.totalorder %s28, 0
    %p239 = por %p237, %p238
    %s240 = ssub.s32 %s30, %s37
    %p241 = scmp.eq.s32.totalorder %s240, 0
    %s243 = sadd.s32 %s242, 1
    %s244 = scalar_select %p241, %s242, %s243
    %p247 = pneg %p241
    %p248 = scmp.eq.s32.totalorder %s22, 3
    %p249 = por %p247, %p248
    %p250 = scmp.ne.s32.totalorder %s242, %s245
    %p251 = scmp.eq.s32.totalorder %s22, 0
    %p252 = por %p250, %p251
    %p253 = scmp.ne.s32.totalorder %s242, %s245
    %p254 = scmp.eq.s32.totalorder %s27, 3
    %p255 = por %p253, %p254
    %p256 = scmp.ne.s32.totalorder %s245, %s246
    %p257 = scmp.eq.s32.totalorder %s27, 0
    %p258 = por %p256, %p257
    %p259 = scmp.ne.s32.totalorder %s245, %s246
    %p260 = scmp.eq.s32.totalorder %s28, 3
    %p261 = por %p259, %p260
    %p263 = scmp.ne.s32.totalorder %s246, %s262
    %p264 = scmp.eq.s32.totalorder %s28, 0
    %p265 = por %p263, %p264
    %s266 = ssub.s32 %s30, %s37
    %p267 = scmp.eq.s32.totalorder %s266, 0
    %s269 = sadd.s32 %s268, 1
    %s270 = scalar_select %p267, %s268, %s269
    %p273 = pneg %p267
    %p274 = scmp.eq.s32.totalorder %s22, 3
    %p275 = por %p273, %p274
    %p276 = scmp.ne.s32.totalorder %s268, %s271
    %p277 = scmp.eq.s32.totalorder %s22, 0
    %p278 = por %p276, %p277
    %p279 = scmp.ne.s32.totalorder %s268, %s271
    %p280 = scmp.eq.s32.totalorder %s27, 3
    %p281 = por %p279, %p280
    %p282 = scmp.ne.s32.totalorder %s271, %s272
    %p283 = scmp.eq.s32.totalorder %s27, 0
    %p284 = por %p282, %p283
    %p285 = scmp.ne.s32.totalorder %s271, %s272
    %p286 = scmp.eq.s32.totalorder %s28, 3
    %p287 = por %p285, %p286
    %p289 = scmp.ne.s32.totalorder %s272, %s288
    %p290 = scmp.eq.s32.totalorder %s28, 0
    %p291 = por %p289, %p290
    %s292 = ssub.s32 %s30, %s37
    %p293 = scmp.eq.s32.totalorder %s292, 0
    %s295 = sadd.s32 %s294, 1
    %s296 = scalar_select %p293, %s294, %s295
    %p299 = pneg %p293
    %p300 = scmp.eq.s32.totalorder %s22, 3
    %p301 = por %p299, %p300
    %p302 = scmp.ne.s32.totalorder %s294, %s297
    %p303 = scmp.eq.s32.totalorder %s22, 0
    %p304 = por %p302, %p303
    %p305 = scmp.ne.s32.totalorder %s294, %s297
    %p306 = scmp.eq.s32.totalorder %s27, 3
    %p307 = por %p305, %p306
    %p308 = scmp.ne.s32.totalorder %s297, %s298
    %p309 = scmp.eq.s32.totalorder %s27, 0
    %p310 = por %p308, %p309
    %p311 = scmp.ne.s32.totalorder %s297, %s298
    %p312 = scmp.eq.s32.totalorder %s28, 3
    %p313 = por %p311, %p312
    %p315 = scmp.ne.s32.totalorder %s298, %s314
    %p316 = scmp.eq.s32.totalorder %s28, 0
    %p317 = por %p315, %p316
    %s318 = ssub.s32 %s30, %s37
    %p319 = scmp.eq.s32.totalorder %s318, 0
    %s321 = sadd.s32 %s320, 1
    %s322 = scalar_select %p319, %s320, %s321
    %p325 = pneg %p319
    %p326 = scmp.eq.s32.totalorder %s22, 3
    %p327 = por %p325, %p326
    %p328 = scmp.ne.s32.totalorder %s320, %s323
    %p329 = scmp.eq.s32.totalorder %s22, 0
    %p330 = por %p328, %p329
    %p331 = scmp.ne.s32.totalorder %s320, %s323
    %p332 = scmp.eq.s32.totalorder %s27, 3
    %p333 = por %p331, %p332
    %p334 = scmp.ne.s32.totalorder %s323, %s324
    %p335 = scmp.eq.s32.totalorder %s27, 0
    %p336 = por %p334, %p335
    %p337 = scmp.ne.s32.totalorder %s323, %s324
    %p338 = scmp.eq.s32.totalorder %s28, 3
    %p339 = por %p337, %p338
    %p341 = scmp.ne.s32.totalorder %s324, %s340
    %p342 = scmp.eq.s32.totalorder %s28, 0
    %p343 = por %p341, %p342
    %s344 = ssub.s32 %s30, %s37
    %p345 = scmp.eq.s32.totalorder %s344, 0
    %s347 = sadd.s32 %s346, 1
    %s348 = scalar_select %p345, %s346, %s347
    %p351 = pneg %p345
    %p352 = scmp.eq.s32.totalorder %s22, 3
    %p353 = por %p351, %p352
    %p354 = scmp.ne.s32.totalorder %s346, %s349
    %p355 = scmp.eq.s32.totalorder %s22, 0
    %p356 = por %p354, %p355
    %p357 = scmp.ne.s32.totalorder %s346, %s349
    %p358 = scmp.eq.s32.totalorder %s27, 3
    %p359 = por %p357, %p358
    %p360 = scmp.ne.s32.totalorder %s349, %s350
    %p361 = scmp.eq.s32.totalorder %s27, 0
    %p362 = por %p360, %p361
    %p363 = scmp.ne.s32.totalorder %s349, %s350
    %p364 = scmp.eq.s32.totalorder %s28, 3
    %p365 = por %p363, %p364
    %p367 = scmp.ne.s32.totalorder %s350, %s366
    %p368 = scmp.eq.s32.totalorder %s28, 0
    %p369 = por %p367, %p368
    %s370 = ssub.s32 %s30, %s37
    %p371 = scmp.eq.s32.totalorder %s370, 0
    %s373 = sadd.s32 %s372, 1
    %s374 = scalar_select %p371, %s372, %s373
    %p377 = pneg %p371
    %p378 = scmp.eq.s32.totalorder %s22, 3
    %p379 = por %p377, %p378
    %p380 = scmp.ne.s32.totalorder %s372, %s375
    %p381 = scmp.eq.s32.totalorder %s22, 0
    %p382 = por %p380, %p381
    %p383 = scmp.ne.s32.totalorder %s372, %s375
    %p384 = scmp.eq.s32.totalorder %s27, 3
    %p385 = por %p383, %p384
    %p386 = scmp.ne.s32.totalorder %s375, %s376
    %p387 = scmp.eq.s32.totalorder %s27, 0
    %p388 = por %p386, %p387
    %p389 = scmp.ne.s32.totalorder %s375, %s376
    %p390 = scmp.eq.s32.totalorder %s28, 3
    %p391 = por %p389, %p390
    %p393 = scmp.ne.s32.totalorder %s376, %s392
    %p394 = scmp.eq.s32.totalorder %s28, 0
    %p395 = por %p393, %p394
    %s396 = ssub.s32 %s30, %s37
    %p397 = scmp.eq.s32.totalorder %s396, 0
    %s399 = sadd.s32 %s398, 1
    %s400 = scalar_select %p397, %s398, %s399
    %p403 = pneg %p397
    %p404 = scmp.eq.s32.totalorder %s22, 3
    %p405 = por %p403, %p404
    %p406 = scmp.ne.s32.totalorder %s398, %s401
    %p407 = scmp.eq.s32.totalorder %s22, 0
    %p408 = por %p406, %p407
    %p409 = scmp.ne.s32.totalorder %s398, %s401
    %p410 = scmp.eq.s32.totalorder %s27, 3
    %p411 = por %p409, %p410
    %p412 = scmp.ne.s32.totalorder %s401, %s402
    %p413 = scmp.eq.s32.totalorder %s27, 0
    %p414 = por %p412, %p413
    %p415 = scmp.ne.s32.totalorder %s401, %s402
    %p416 = scmp.eq.s32.totalorder %s28, 3
    %p417 = por %p415, %p416
    %p419 = scmp.ne.s32.totalorder %s402, %s418
    %p420 = scmp.eq.s32.totalorder %s28, 0
    %p421 = por %p419, %p420
    %s422 = ssub.s32 %s30, %s37
    %p423 = scmp.eq.s32.totalorder %s422, 0
    %s425 = sadd.s32 %s424, 1
    %s426 = scalar_select %p423, %s424, %s425
    %p429 = pneg %p423
    %p430 = scmp.eq.s32.totalorder %s22, 3
    %p431 = por %p429, %p430
    %p432 = scmp.ne.s32.totalorder %s424, %s427
    %p433 = scmp.eq.s32.totalorder %s22, 0
    %p434 = por %p432, %p433
    %p435 = scmp.ne.s32.totalorder %s424, %s427
    %p436 = scmp.eq.s32.totalorder %s27, 3
    %p437 = por %p435, %p436
    %p438 = scmp.ne.s32.totalorder %s427, %s428
    %p439 = scmp.eq.s32.totalorder %s27, 0
    %p440 = por %p438, %p439
    %p441 = scmp.ne.s32.totalorder %s427, %s428
    %p442 = scmp.eq.s32.totalorder %s28, 3
    %p443 = por %p441, %p442
    %p445 = scmp.ne.s32.totalorder %s428, %s444
    %p446 = scmp.eq.s32.totalorder %s28, 0
    %p447 = por %p445, %p446
    %s448 = ssub.s32 %s29, %s41
    %p449 = scmp.eq.s32.totalorder %s448, 0
    %s451 = sadd.s32 %s450, 1
    %s452 = scalar_select %p449, %s450, %s451
    %p455 = pneg %p449
    %p456 = scmp.eq.s32.totalorder %s22, 3
    %p457 = por %p455, %p456
    %p458 = scmp.ne.s32.totalorder %s450, %s453
    %p459 = scmp.eq.s32.totalorder %s22, 0
    %p460 = por %p458, %p459
    %p461 = scmp.ne.s32.totalorder %s450, %s453
    %p462 = scmp.eq.s32.totalorder %s27, 3
    %p463 = por %p461, %p462
    %p464 = scmp.ne.s32.totalorder %s453, %s454
    %p465 = scmp.eq.s32.totalorder %s27, 0
    %p466 = por %p464, %p465
    %p467 = scmp.ne.s32.totalorder %s453, %s454
    %p468 = scmp.eq.s32.totalorder %s28, 3
    %p469 = por %p467, %p468
    %p471 = scmp.ne.s32.totalorder %s454, %s470
    %p472 = scmp.eq.s32.totalorder %s28, 0
    %p473 = por %p471, %p472
    %p474 = scmp.le.s32.totalorder 1, %s22
    %p475 = scmp.lt.s32.totalorder %s22, 5
    %p476 = pnand %p474, %p475
    %p477 = pneg %p476
    // Predicated region
    $region9: #{transformer_forward.1} parent=5 // pred_check
      _
    $region10: #{transformer_forward.1} parent=5 // pred_check_branch
      %479 = sbr.rel (%p476) target = $region12
    $region11: #{transformer_forward.1} parent=5 // pred_region
      %s480 = ssub.s32 %s22, 1
      // Predicated region
      $region13: #{transformer_forward.1} parent=11 // pred_check
        %p481 = pneg %p107
      $region14: #{transformer_forward.1} parent=11 // pred_check_branch
        %483 = sbr.rel (%p481) target = $region16
      $region15: #{transformer_forward.1} parent=11 // pred_region
        _
      $region16: #{transformer_forward.1} parent=11 // pred_fallthru
        _
      // Predicated region
      $region17: #{transformer_forward.1} parent=11 // pred_check
        %p484 = pneg %p128
      $region18: #{transformer_forward.1} parent=11 // pred_check_branch
        %486 = sbr.rel (%p484) target = $region20
      $region19: #{transformer_forward.1} parent=11 // pred_region
        _
      $region20: #{transformer_forward.1} parent=11 // pred_fallthru
        _
    $region12: #{transformer_forward.1} parent=5 // pred_fallthru
      _
    %p487 = scmp.lt.s32.totalorder %s22, 4
    // Predicated region
    $region21: #{transformer_forward.1} parent=5 // pred_check
      %p488 = pneg %p487
    $region22: #{transformer_forward.1} parent=5 // pred_check_branch
      %490 = sbr.rel (%p488) target = $region24
    $region23: #{transformer_forward.1} parent=5 // pred_region
      // Predicated region
      $region25: #{transformer_forward.1} parent=23 // pred_check
        %p491 = pneg %p54
      $region26: #{transformer_forward.1} parent=23 // pred_check_branch
        %493 = sbr.rel (%p491) target = $region28
      $region27: #{transformer_forward.1} parent=23 // pred_region
        %s494 = smul.u32 4, %s29
        %p495 = scmp.lt.s32.totalorder %s494, 7
        %s496 = scalar_select %p495, %s494, 7
        %s497 = smul.addr %s496, 2
        %s498 = scalar_lea.vmem %s0, %s497
        %s499 = smul.u32 4, %s29
      $region28: #{transformer_forward.1} parent=23 // pred_fallthru
        _
      // Predicated region
      $region29: #{transformer_forward.1} parent=23 // pred_check
        %p500 = pneg %p80
      $region30: #{transformer_forward.1} parent=23 // pred_check_branch
        %502 = sbr.rel (%p500) target = $region32
      $region31: #{transformer_forward.1} parent=23 // pred_region
        %s503 = smul.u32 4, %s29
        %p504 = scmp.lt.s32.totalorder %s503, 7
        %s505 = scalar_select %p504, %s503, 7
        %s506 = scalar_lea.vmem %s1, %s505
        %s507 = smul.u32 4, %s29
      $region32: #{transformer_forward.1} parent=23 // pred_fallthru
        _
      // Predicated region
      $region33: #{transformer_forward.1} parent=23 // pred_check
        %p508 = pneg %p148
      $region34: #{transformer_forward.1} parent=23 // pred_check_branch
        %510 = sbr.rel (%p508) target = $region36
      $region35: #{transformer_forward.1} parent=23 // pred_region
        %p511 = scmp.lt.s32.totalorder %s30, 1
        %s512 = scalar_select %p511, %s30, 1
        %s513 = smul.addr %s512, 4
        %s514 = smul.addr %s513, 8
        %s515 = scalar_lea.vmem %s4, %s514
      $region36: #{transformer_forward.1} parent=23 // pred_fallthru
        _
      // Predicated region
      $region37: #{transformer_forward.1} parent=23 // pred_check
        %p516 = pneg %p174
      $region38: #{transformer_forward.1} parent=23 // pred_check_branch
        %518 = sbr.rel (%p516) target = $region40
      $region39: #{transformer_forward.1} parent=23 // pred_region
        %p519 = scmp.lt.s32.totalorder %s30, 1
        %s520 = scalar_select %p519, %s30, 1
        %s521 = scalar_lea.vmem %s5, %s520
      $region40: #{transformer_forward.1} parent=23 // pred_fallthru
        _
      // Predicated region
      $region41: #{transformer_forward.1} parent=23 // pred_check
        %p522 = pneg %p200
      $region42: #{transformer_forward.1} parent=23 // pred_check_branch
        %524 = sbr.rel (%p522) target = $region44
      $region43: #{transformer_forward.1} parent=23 // pred_region
        %p525 = scmp.lt.s32.totalorder %s30, 1
        %s526 = scalar_select %p525, %s30, 1
        %s527 = smul.addr %s526, 4
        %s528 = smul.addr %s527, 8
        %s529 = scalar_lea.vmem %s6, %s528
      $region44: #{transformer_forward.1} parent=23 // pred_fallthru
        _
      // Predicated region
      $region45: #{transformer_forward.1} parent=23 // pred_check
        %p530 = pneg %p226
      $region46: #{transformer_forward.1} parent=23 // pred_check_branch
        %532 = sbr.rel (%p530) target = $region48
      $region47: #{transformer_forward.1} parent=23 // pred_region
        %p533 = scmp.lt.s32.totalorder %s30, 1
        %s534 = scalar_select %p533, %s30, 1
        %s535 = scalar_lea.vmem %s7, %s534
      $region48: #{transformer_forward.1} parent=23 // pred_fallthru
        _
      // Predicated region
      $region49: #{transformer_forward.1} parent=23 // pred_check
        %p536 = pneg %p252
      $region50: #{transformer_forward.1} parent=23 // pred_check_branch
        %538 = sbr.rel (%p536) target = $region52
      $region51: #{transformer_forward.1} parent=23 // pred_region
        %p539 = scmp.lt.s32.totalorder %s30, 1
        %s540 = scalar_select %p539, %s30, 1
        %s541 = scalar_lea.vmem %s8, %s540
      $region52: #{transformer_forward.1} parent=23 // pred_fallthru
        _
      // Predicated region
      $region53: #{transformer_forward.1} parent=23 // pred_check
        %p542 = pneg %p278
      $region54: #{transformer_forward.1} parent=23 // pred_check_branch
        %544 = sbr.rel (%p542) target = $region56
      $region55: #{transformer_forward.1} parent=23 // pred_region
        %p545 = scmp.lt.s32.totalorder %s30, 1
        %s546 = scalar_select %p545, %s30, 1
        %s547 = scalar_lea.vmem %s9, %s546
      $region56: #{transformer_forward.1} parent=23 // pred_fallthru
        _
      // Predicated region
      $region57: #{transformer_forward.1} parent=23 // pred_check
        %p548 = pneg %p304
      $region58: #{transformer_forward.1} parent=23 // pred_check_branch
        %550 = sbr.rel (%p548) target = $region60
      $region59: #{transformer_forward.1} parent=23 // pred_region
        %p551 = scmp.lt.s32.totalorder %s30, 1
        %s552 = scalar_select %p551, %s30, 1
        %s553 = smul.addr %s552, 64
        %s554 = smul.addr %s553, 8
        %s555 = scalar_lea.vmem %s10, %s554
      $region60: #{transformer_forward.1} parent=23 // pred_fallthru
        _
      // Predicated region
      $region61: #{transformer_forward.1} parent=23 // pred_check
        %p556 = pneg %p330
      $region62: #{transformer_forward.1} parent=23 // pred_check_branch
        %558 = sbr.rel (%p556) target = $region64
      $region63: #{transformer_forward.1} parent=23 // pred_region
        %p559 = scmp.lt.s32.totalorder %s30, 1
        %s560 = scalar_select %p559, %s30, 1
        %s561 = smul.addr %s560, 16
        %s562 = scalar_lea.vmem %s11, %s561
      $region64: #{transformer_forward.1} parent=23 // pred_fallthru
        _
      // Predicated region
      $region65: #{transformer_forward.1} parent=23 // pred_check
        %p563 = pneg %p356
      $region66: #{transformer_forward.1} parent=23 // pred_check_branch
        %565 = sbr.rel (%p563) target = $region68
      $region67: #{transformer_forward.1} parent=23 // pred_region
        %p566 = scmp.lt.s32.totalorder %s30, 1
        %s567 = scalar_select %p566, %s30, 1
        %s568 = smul.addr %s567, 256
        %s569 = smul.addr %s568, 8
        %s570 = scalar_lea.vmem %s12, %s569
      $region68: #{transformer_forward.1} parent=23 // pred_fallthru
        _
      // Predicated region
      $region69: #{transformer_forward.1} parent=23 // pred_check
        %p571 = pneg %p382
      $region70: #{transformer_forward.1} parent=23 // pred_check_branch
        %573 = sbr.rel (%p571) target = $region72
      $region71: #{transformer_forward.1} parent=23 // pred_region
        %p574 = scmp.lt.s32.totalorder %s30, 1
        %s575 = scalar_select %p574, %s30, 1
        %s576 = scalar_lea.vmem %s13, %s575
      $region72: #{transformer_forward.1} parent=23 // pred_fallthru
        _
      // Predicated region
      $region73: #{transformer_forward.1} parent=23 // pred_check
        %p577 = pneg %p408
      $region74: #{transformer_forward.1} parent=23 // pred_check_branch
        %579 = sbr.rel (%p577) target = $region76
      $region75: #{transformer_forward.1} parent=23 // pred_region
        %p580 = scmp.lt.s32.totalorder %s30, 1
        %s581 = scalar_select %p580, %s30, 1
        %s582 = scalar_lea.vmem %s14, %s581
      $region76: #{transformer_forward.1} parent=23 // pred_fallthru
        _
      // Predicated region
      $region77: #{transformer_forward.1} parent=23 // pred_check
        %p583 = pneg %p434
      $region78: #{transformer_forward.1} parent=23 // pred_check_branch
        %585 = sbr.rel (%p583) target = $region80
      $region79: #{transformer_forward.1} parent=23 // pred_region
        %p586 = scmp.lt.s32.totalorder %s30, 1
        %s587 = scalar_select %p586, %s30, 1
        %s588 = scalar_lea.vmem %s15, %s587
      $region80: #{transformer_forward.1} parent=23 // pred_fallthru
        _
    $region24: #{transformer_forward.1} parent=5 // pred_fallthru
      _
    %p589 = scmp.le.s32.totalorder 1, %s22
    %p590 = scmp.lt.s32.totalorder %s22, 5
    %p591 = pnand %p589, %p590
    %p592 = pneg %p591
    // Predicated region
    $region81: #{transformer_forward.1} parent=5 // pred_check
      _
    $region82: #{transformer_forward.1} parent=5 // pred_check_branch
      %594 = sbr.rel (%p591) target = $region84
    $region83: #{transformer_forward.1} parent=5 // pred_region
      %s595 = ssub.s32 %s22, 1
      %s596 = smul.u32 4, %s31
      %p597 = scmp.lt.s32.totalorder %s596, 7
      %s598 = scalar_select %p597, %s596, 7
      %s599 = smul.addr %s598, 2
      %s600 = scalar_lea.vmem %s0, %s599
      %p601 = pneg %p60
      %p602 = pneg %p57
      %s603 = smul.u32 4, %s31
      %p604 = scmp.lt.s32.totalorder %s603, 7
      %s605 = scalar_select %p604, %s603, 7
      %s606 = scalar_lea.vmem %s1, %s605
      %p607 = pneg %p86
      %p608 = pneg %p83
      %p609 = pneg %p107
      %p610 = pneg %p104
      %p611 = pneg %p128
      %p612 = pneg %p125
      %p613 = scmp.lt.s32.totalorder %s32, 1
      %s614 = scalar_select %p613, %s32, 1
      %s615 = smul.addr %s614, 4
      %s616 = smul.addr %s615, 8
      %s617 = scalar_lea.vmem %s4, %s616
      %p618 = pneg %p154
      %p619 = pneg %p151
      %p620 = scmp.lt.s32.totalorder %s32, 1
      %s621 = scalar_select %p620, %s32, 1
      %s622 = scalar_lea.vmem %s5, %s621
      %p623 = pneg %p180
      %p624 = pneg %p177
      %p625 = scmp.lt.s32.totalorder %s32, 1
      %s626 = scalar_select %p625, %s32, 1
      %s627 = smul.addr %s626, 4
      %s628 = smul.addr %s627, 8
      %s629 = scalar_lea.vmem %s6, %s628
      %p630 = pneg %p206
      %p631 = pneg %p203
      %p632 = scmp.lt.s32.totalorder %s32, 1
      %s633 = scalar_select %p632, %s32, 1
      %s634 = scalar_lea.vmem %s7, %s633
      %p635 = pneg %p232
      %p636 = pneg %p229
      %p637 = scmp.lt.s32.totalorder %s32, 1
      %s638 = scalar_select %p637, %s32, 1
      %s639 = scalar_lea.vmem %s8, %s638
      %p640 = pneg %p258
      %p641 = pneg %p255
      %p642 = scmp.lt.s32.totalorder %s32, 1
      %s643 = scalar_select %p642, %s32, 1
      %s644 = scalar_lea.vmem %s9, %s643
      %p645 = pneg %p284
      %p646 = pneg %p281
      %p647 = scmp.lt.s32.totalorder %s32, 1
      %s648 = scalar_select %p647, %s32, 1
      %s649 = smul.addr %s648, 64
      %s650 = smul.addr %s649, 8
      %s651 = scalar_lea.vmem %s10, %s650
      %p652 = pneg %p310
      %p653 = pneg %p307
      %p654 = scmp.lt.s32.totalorder %s32, 1
      %s655 = scalar_select %p654, %s32, 1
      %s656 = smul.addr %s655, 16
      %s657 = scalar_lea.vmem %s11, %s656
      %p658 = pneg %p336
      %p659 = pneg %p333
      %p660 = scmp.lt.s32.totalorder %s32, 1
      %s661 = scalar_select %p660, %s32, 1
      %s662 = smul.addr %s661, 256
      %s663 = smul.addr %s662, 8
      %s664 = scalar_lea.vmem %s12, %s663
      %p665 = pneg %p362
      %p666 = pneg %p359
      %p667 = scmp.lt.s32.totalorder %s32, 1
      %s668 = scalar_select %p667, %s32, 1
      %s669 = scalar_lea.vmem %s13, %s668
      %p670 = pneg %p388
      %p671 = pneg %p385
      %p672 = scmp.lt.s32.totalorder %s32, 1
      %s673 = scalar_select %p672, %s32, 1
      %s674 = scalar_lea.vmem %s14, %s673
      %p675 = pneg %p414
      %p676 = pneg %p411
      %p677 = scmp.lt.s32.totalorder %s32, 1
      %s678 = scalar_select %p677, %s32, 1
      %s679 = scalar_lea.vmem %s15, %s678
      %p680 = pneg %p440
      %p681 = pneg %p437
      %p682 = pneg %p466
      %p683 = pneg %p463
      %p684 = scmp.lt.s32.totalorder %s31, 1
      %s685 = scalar_select %p684, %s31, 1
      %s686 = smul.addr %s685, 2
      %s687 = scalar_lea.vmem %s16, %s686
      %s688 = smul.u32 4, %s31
      %p689 = scmp.lt.s32.totalorder %s688, 7
      %s690 = scalar_select %p689, %s688, 7
      %s691 = smul.addr %s690, 2
      %s692 = scalar_lea.vmem %s0, %s691
      %s693 = smul.u32 4, %s31
      %s694 = smul.u32 4, %s31
      %p695 = scmp.lt.s32.totalorder %s694, 7
      %s696 = scalar_select %p695, %s694, 7
      %s697 = scalar_lea.vmem %s1, %s696
      %s698 = smul.u32 4, %s31
      %p699 = scmp.lt.s32.totalorder %s32, 1
      %s700 = scalar_select %p699, %s32, 1
      %s701 = smul.addr %s700, 4
      %s702 = smul.addr %s701, 8
      %s703 = scalar_lea.vmem %s4, %s702
      %p704 = scmp.lt.s32.totalorder %s32, 1
      %s705 = scalar_select %p704, %s32, 1
      %s706 = scalar_lea.vmem %s5, %s705
      %p707 = scmp.lt.s32.totalorder %s32, 1
      %s708 = scalar_select %p707, %s32, 1
      %s709 = smul.addr %s708, 4
      %s710 = smul.addr %s709, 8
      %s711 = scalar_lea.vmem %s6, %s710
      %p712 = scmp.lt.s32.totalorder %s32, 1
      %s713 = scalar_select %p712, %s32, 1
      %s714 = scalar_lea.vmem %s7, %s713
      %p715 = scmp.lt.s32.totalorder %s32, 1
      %s716 = scalar_select %p715, %s32, 1
      %s717 = scalar_lea.vmem %s8, %s716
      %p718 = scmp.lt.s32.totalorder %s32, 1
      %s719 = scalar_select %p718, %s32, 1
      %s720 = scalar_lea.vmem %s9, %s719
      %p721 = scmp.lt.s32.totalorder %s32, 1
      %s722 = scalar_select %p721, %s32, 1
      %s723 = smul.addr %s722, 64
      %s724 = smul.addr %s723, 8
      %s725 = scalar_lea.vmem %s10, %s724
      %p726 = scmp.lt.s32.totalorder %s32, 1
      %s727 = scalar_select %p726, %s32, 1
      %s728 = smul.addr %s727, 16
      %s729 = scalar_lea.vmem %s11, %s728
      %p730 = scmp.lt.s32.totalorder %s32, 1
      %s731 = scalar_select %p730, %s32, 1
      %s732 = smul.addr %s731, 256
      %s733 = smul.addr %s732, 8
      %s734 = scalar_lea.vmem %s12, %s733
      %p735 = scmp.lt.s32.totalorder %s32, 1
      %s736 = scalar_select %p735, %s32, 1
      %s737 = scalar_lea.vmem %s13, %s736
      %p738 = scmp.lt.s32.totalorder %s32, 1
      %s739 = scalar_select %p738, %s32, 1
      %s740 = scalar_lea.vmem %s14, %s739
      %p741 = scmp.lt.s32.totalorder %s32, 1
      %s742 = scalar_select %p741, %s32, 1
      %s743 = scalar_lea.vmem %s15, %s742
      %p744 = scmp.lt.s32.totalorder %s31, 1
      %s745 = scalar_select %p744, %s31, 1
      %s746 = smul.addr %s745, 2
      %s747 = scalar_lea.vmem %s16, %s746
      %p749 = scmp.eq.s32.totalorder %s32, 0
      // Predicated region
      $region85: #{transformer_forward.1} parent=83 // pred_check
        %p750 = pneg %p749
      $region86: #{transformer_forward.1} parent=83 // pred_check_branch
        %752 = sbr.rel (%p750) target = $region88
      $region87: #{transformer_forward.1} parent=83 // pred_region
        %v753 = vld [vmem:[%s692] sm:$0x3]
        %v754 = vld [vmem:[%s692 + $0x2] sm:$0x3]
        %v755 = vld [vmem:[%s692 + $0x4] sm:$0x3]
        %v756 = vld [vmem:[%s692 + $0x6] sm:$0x3]
        %v757 = vld [vmem:[%s2] sm:$0xff]
        %v758 = vld [vmem:[%s2 + $0x8] sm:$0xff]
        %763 = vst [vmem:[#allocation1] ss:$4 sm:$0xff] %v753
        %s764 = scalar_lea.vmem [#allocation1], 1
        %765 = vst [vmem:[%s764] ss:$4 sm:$0xff] %v754
        %s766 = scalar_lea.vmem [#allocation1], 2
        %767 = vst [vmem:[%s766] ss:$4 sm:$0xff] %v755
        %s768 = scalar_lea.vmem [#allocation1], 3
        %769 = vst [vmem:[%s768] ss:$4 sm:$0xff] %v756
        %v770 = vld.sshfl [vmem:[#allocation1] sm:$0xff pattern:$0x73625140]
        %v772 = vpack.c.bf16 %v770, %v770
        %v773 = vpack.c.bf16 %v758, %v757
        %v774 = vld [vmem:[%s3] sm:$0x1]
        %v776 = vperm.slane %v774, 0
        %vm778 = vcmask 130048
        %v780 = vsel %vm778, %v772, 0
        %782 = vmatpush.bf16.msra.mxu0 0
        %783 = vmatpush.bf16.msra.mxu0 0
        %784 = vmatpush.bf16.msra.mxu0 0
        %785 = vmatpush.bf16.msra.mxu0 0
        %786 = vmatpush.bf16.msra.mxu0 0
        %787 = vmatpush.bf16.msra.mxu0 0
        %788 = vmatpush.bf16.msra.mxu0 0
        %789 = vmatpush.bf16.msra.mxu0 %v773
        %790 = vmatmul.bf16.gmra.mxu0 %v780
        %v791 = vpop.f32.mrf.mxu0
        %v792 = vadd.f32 %v776, %v791
        %v793 = vpop.f32.mrf.mxu0
        %794 = vdwg.mxu0
        %v796 = vrot.slane %v792, 2
        %v797 = vrot.slane %v792, 4
        %v798 = vrot.slane %v792, 6
        %v802 = vld [vmem:[%s697] sm:$0x1]
        %v803 = vld [vmem:[%s697 + $0x1] sm:$0x1]
        %v804 = vld [vmem:[%s697 + $0x2] sm:$0x1]
        %v805 = vld [vmem:[%s697 + $0x3] sm:$0x1]
        %v810 = vperm.slane %v802, 0
        %v811 = vperm.slane %v803, 0
        %v812 = vperm.slane %v804, 0
        %v813 = vperm.slane %v805, 0
        %v818 = vadd.f32 %v792, %v810
        %v819 = vadd.f32 %v796, %v811
        %v820 = vadd.f32 %v797, %v812
        %v821 = vadd.f32 %v798, %v813
        %826 = vst [vmem:[#allocation1] ss:$4 sm:$0xff] %v818
        %s827 = scalar_lea.vmem [#allocation1], 1
        %828 = vst [vmem:[%s827] ss:$4 sm:$0xff] %v819
        %s829 = scalar_lea.vmem [#allocation1], 2
        %830 = vst [vmem:[%s829] ss:$4 sm:$0xff] %v820
        %s831 = scalar_lea.vmem [#allocation1], 3
        %832 = vst [vmem:[%s831] ss:$4 sm:$0xff] %v821
        %v833 = vld.sshfl [vmem:[#allocation1] sm:$0xff pattern:$0x73625140]
        %vm835 = vcmask 261120
        %836 = vst.msk [vmem:[#allocation2] sm:$0xff] %vm835, %v833
      $region88: #{transformer_forward.1} parent=83 // pred_fallthru
        _
      %v837 = vld [vmem:[#allocation2] sm:$0xff]
      %v838 = vld [vmem:[%s703] sm:$0xff]
      %v839 = vld [vmem:[%s703 + $0x8] sm:$0xff]
      %v840 = vld [vmem:[%s703 + $0x10] sm:$0xff]
      %v841 = vld [vmem:[%s703 + $0x18] sm:$0xff]
      %v842 = vpack.c.bf16 %v837, %v837
      %v843 = vpack.c.bf16 %v839, %v838
      %v844 = vpack.c.bf16 %v841, %v840
      %v845 = vld [vmem:[%s706] sm:$0x1]
      %v847 = vperm.slane %v845, 0
      %vm849 = vcmask 261120
      %v851 = vsel %vm849, %v842, 0
      %853 = vmatpush.bf16.msra.mxu0 0
      %854 = vmatpush.bf16.msra.mxu0 0
      %855 = vmatpush.bf16.msra.mxu0 0
      %856 = vmatpush.bf16.msra.mxu0 0
      %857 = vmatpush.bf16.msra.mxu0 0
      %858 = vmatpush.bf16.msra.mxu0 0
      %859 = vmatpush.bf16.msra.mxu0 %v844
      %860 = vmatpush.bf16.msra.mxu0 %v843
      %861 = vmatmul.bf16.gmra.mxu0 %v851
      %v862 = vpop.f32.mrf.mxu0
      %v863 = vadd.f32 %v847, %v862
      %v864 = vpop.f32.mrf.mxu0
      %865 = vdwg.mxu0
      %v867 = vrot.slane %v863, 2
      %v868 = vrot.slane %v863, 4
      %v869 = vrot.slane %v863, 6
      %v873 = vpack.c.bf16 %v863, %v863
      %v874 = vpack.c.bf16 %v867, %v867
      %v875 = vpack.c.bf16 %v868, %v868
      %v876 = vpack.c.bf16 %v869, %v869
      %v878 = vunpack.c.l.b16 %v873
      %v879 = vpack.c.b16 %v878, %v878
      %880 = vrot.lane.b32.xlu0 %v879, 96
      %v881 = vpop.permute.xlu0 %880
      %vm882 = vcmask 64512
      %v884 = vsel %vm882, %v873, 0
      %v887 = vsel %vm882, %v881, 0
      %889 = vmatpush.bf16.xpose.msra.mxu0 0
      %890 = vmatpush.bf16.xpose.msra.mxu0 0
      %891 = vmatpush.bf16.xpose.msra.mxu0 0
      %892 = vmatpush.bf16.xpose.msra.mxu0 0
      %893 = vmatpush.bf16.xpose.msra.mxu0 0
      %894 = vmatpush.bf16.xpose.msra.mxu0 0
      %895 = vmatpush.bf16.xpose.msra.mxu0 0
      %896 = vmatpush.bf16.xpose.msra.mxu0 %v887
      %897 = vmatmul.bf16.gmra.mxu0 %v884
      %v898 = vpop.f32.mrf.mxu0
      %v899 = vadd.f32 0.0, %v898
      %v900 = vpop.f32.mrf.mxu0
      %901 = vdwg.mxu0
      %v903 = vunpack.c.l.b16 %v874
      %v904 = vpack.c.b16 %v903, %v903
      %905 = vrot.lane.b32.xlu0 %v904, 96
      %v906 = vpop.permute.xlu0 %905
      %v908 = vsel %vm882, %v874, 0
      %v911 = vsel %vm882, %v906, 0
      %913 = vmatpush.bf16.xpose.msra.mxu0 0
      %914 = vmatpush.bf16.xpose.msra.mxu0 0
      %915 = vmatpush.bf16.xpose.msra.mxu0 0
      %916 = vmatpush.bf16.xpose.msra.mxu0 0
      %917 = vmatpush.bf16.xpose.msra.mxu0 0
      %918 = vmatpush.bf16.xpose.msra.mxu0 0
      %919 = vmatpush.bf16.xpose.msra.mxu0 0
      %920 = vmatpush.bf16.xpose.msra.mxu0 %v911
      %921 = vmatmul.bf16.gmra.mxu0 %v908
      %v922 = vpop.f32.mrf.mxu0
      %v923 = vadd.f32 0.0, %v922
      %v924 = vpop.f32.mrf.mxu0
      %925 = vdwg.mxu0
      %v927 = vunpack.c.l.b16 %v875
      %v928 = vpack.c.b16 %v927, %v927
      %929 = vrot.lane.b32.xlu0 %v928, 96
      %v930 = vpop.permute.xlu0 %929
      %v932 = vsel %vm882, %v875, 0
      %v935 = vsel %vm882, %v930, 0
      %937 = vmatpush.bf16.xpose.msra.mxu0 0
      %938 = vmatpush.bf16.xpose.msra.mxu0 0
      %939 = vmatpush.bf16.xpose.msra.mxu0 0
      %940 = vmatpush.bf16.xpose.msra.mxu0 0
      %941 = vmatpush.bf16.xpose.msra.mxu0 0
      %942 = vmatpush.bf16.xpose.msra.mxu0 0
      %943 = vmatpush.bf16.xpose.msra.mxu0 0
      %944 = vmatpush.bf16.xpose.msra.mxu0 %v935
      %945 = vmatmul.bf16.gmra.mxu0 %v932
      %v946 = vpop.f32.mrf.mxu0
      %v947 = vadd.f32 0.0, %v946
      %v948 = vpop.f32.mrf.mxu0
      %949 = vdwg.mxu0
      %v951 = vunpack.c.l.b16 %v876
      %v952 = vpack.c.b16 %v951, %v951
      %953 = vrot.lane.b32.xlu0 %v952, 96
      %v954 = vpop.permute.xlu0 %953
      %v956 = vsel %vm882, %v876, 0
      %v959 = vsel %vm882, %v954, 0
      %961 = vmatpush.bf16.xpose.msra.mxu0 0
      %962 = vmatpush.bf16.xpose.msra.mxu0 0
      %963 = vmatpush.bf16.xpose.msra.mxu0 0
      %964 = vmatpush.bf16.xpose.msra.mxu0 0
      %965 = vmatpush.bf16.xpose.msra.mxu0 0
      %966 = vmatpush.bf16.xpose.msra.mxu0 0
      %967 = vmatpush.bf16.xpose.msra.mxu0 0
      %968 = vmatpush.bf16.xpose.msra.mxu0 %v959
      %969 = vmatmul.bf16.gmra.mxu0 %v956
      %v970 = vpop.f32.mrf.mxu0
      %v971 = vadd.f32 0.0, %v970
      %v972 = vpop.f32.mrf.mxu0
      %973 = vdwg.mxu0
      %v974 = vmul.f32 %v899, 0.35355338
      %v975 = vmul.f32 %v923, 0.35355338
      %v976 = vmul.f32 %v947, 0.35355338
      %v977 = vmul.f32 %v971, 0.35355338
      %vm978 = vcmask 9216
      %v979 = vsel %vm978, %v974, -inf
      %980 = vmax.xlane.f32.xlu0 %v979
      %v981 = vpop.xlane.xlu0 %980
      %v982 = vsel %vm978, %v975, -inf
      %983 = vmax.xlane.f32.xlu0 %v982
      %v984 = vpop.xlane.xlu0 %983
      %v985 = vsel %vm978, %v976, -inf
      %986 = vmax.xlane.f32.xlu0 %v985
      %v987 = vpop.xlane.xlu0 %986
      %v988 = vsel %vm978, %v977, -inf
      %989 = vmax.xlane.f32.xlu0 %v988
      %v990 = vpop.xlane.xlu0 %989
      %v991 = vsub.f32 %v974, %v981
      %v992 = vsub.f32 %v975, %v984
      %v993 = vsub.f32 %v976, %v987
      %v994 = vsub.f32 %v977, %v990
      %v995 = vmul.f32 %v991, 1.442695
      %v996 = vpow.pop %v995
      %v997 = vmul.f32 %v992, 1.442695
      %v998 = vpow.pop %v997
      %v999 = vmul.f32 %v993, 1.442695
      %v1000 = vpow.pop %v999
      %v1001 = vmul.f32 %v994, 1.442695
      %v1002 = vpow.pop %v1001
      %v1003 = vsel %vm978, %v996, 0.0
      %1004 = vadd.xlane.f32.xlu0 %v1003
      %v1005 = vpop.xlane.xlu0 %1004
      %v1006 = vsel %vm978, %v998, 0.0
      %1007 = vadd.xlane.f32.xlu0 %v1006
      %v1008 = vpop.xlane.xlu0 %1007
      %v1009 = vsel %vm978, %v1000, 0.0
      %1010 = vadd.xlane.f32.xlu0 %v1009
      %v1011 = vpop.xlane.xlu0 %1010
      %v1012 = vsel %vm978, %v1002, 0.0
      %1013 = vadd.xlane.f32.xlu0 %v1012
      %v1014 = vpop.xlane.xlu0 %1013
      %v1015 = vrcp.pop %v1005
      %v1016 = vrcp.pop %v1008
      %v1017 = vrcp.pop %v1011
      %v1018 = vrcp.pop %v1014
      %v1019 = vmul.f32 %v996, %v1015
      %v1020 = vmul.f32 %v998, %v1016
      %v1021 = vmul.f32 %v1000, %v1017
      %v1022 = vmul.f32 %v1002, %v1018
      %v1023 = vpack.c.bf16 %v1019, %v1019
      %v1024 = vpack.c.bf16 %v1020, %v1020
      %v1025 = vpack.c.bf16 %v1021, %v1021
      %v1026 = vpack.c.bf16 %v1022, %v1022
      %1027 = vrot.lane.b32.xlu0 %v879, 64
      %v1028 = vpop.permute.xlu0 %1027
      %vm1029 = vcmask 15360
      %v1031 = vsel %vm1029, %v1023, 0
      %vm1033 = vcmask 1040384
      %v1035 = vsel %vm1033, %v1028, 0
      %1037 = vmatpush.bf16.msra.mxu0 0
      %1038 = vmatpush.bf16.msra.mxu0 0
      %1039 = vmatpush.bf16.msra.mxu0 0
      %1040 = vmatpush.bf16.msra.mxu0 0
      %1041 = vmatpush.bf16.msra.mxu0 0
      %1042 = vmatpush.bf16.msra.mxu0 0
      %1043 = vmatpush.bf16.msra.mxu0 0
      %1044 = vmatpush.bf16.msra.mxu0 %v1035
      %1045 = vmatmul.bf16.gmra.mxu0 %v1031
      %v1046 = vpop.f32.mrf.mxu0
      %v1047 = vadd.f32 0.0, %v1046
      %v1048 = vpop.f32.mrf.mxu0
      %1049 = vdwg.mxu0
      %1050 = vrot.lane.b32.xlu0 %v904, 64
      %v1051 = vpop.permute.xlu0 %1050
      %v1053 = vsel %vm1029, %v1024, 0
      %v1056 = vsel %vm1033, %v1051, 0
      %1058 = vmatpush.bf16.msra.mxu0 0
      %1059 = vmatpush.bf16.msra.mxu0 0
      %1060 = vmatpush.bf16.msra.mxu0 0
      %1061 = vmatpush.bf16.msra.mxu0 0
      %1062 = vmatpush.bf16.msra.mxu0 0
      %1063 = vmatpush.bf16.msra.mxu0 0
      %1064 = vmatpush.bf16.msra.mxu0 0
      %1065 = vmatpush.bf16.msra.mxu0 %v1056
      %1066 = vmatmul.bf16.gmra.mxu0 %v1053
      %v1067 = vpop.f32.mrf.mxu0
      %v1068 = vadd.f32 0.0, %v1067
      %v1069 = vpop.f32.mrf.mxu0
      %1070 = vdwg.mxu0
      %1071 = vrot.lane.b32.xlu0 %v928, 64
      %v1072 = vpop.permute.xlu0 %1071
      %v1074 = vsel %vm1029, %v1025, 0
      %v1077 = vsel %vm1033, %v1072, 0
      %1079 = vmatpush.bf16.msra.mxu0 0
      %1080 = vmatpush.bf16.msra.mxu0 0
      %1081 = vmatpush.bf16.msra.mxu0 0
      %1082 = vmatpush.bf16.msra.mxu0 0
      %1083 = vmatpush.bf16.msra.mxu0 0
      %1084 = vmatpush.bf16.msra.mxu0 0
      %1085 = vmatpush.bf16.msra.mxu0 0
      %1086 = vmatpush.bf16.msra.mxu0 %v1077
      %1087 = vmatmul.bf16.gmra.mxu0 %v1074
      %v1088 = vpop.f32.mrf.mxu0
      %v1089 = vadd.f32 0.0, %v1088
      %v1090 = vpop.f32.mrf.mxu0
      %1091 = vdwg.mxu0
      %1092 = vrot.lane.b32.xlu0 %v952, 64
      %v1093 = vpop.permute.xlu0 %1092
      %v1095 = vsel %vm1029, %v1026, 0
      %v1098 = vsel %vm1033, %v1093, 0
      %1100 = vmatpush.bf16.msra.mxu0 0
      %1101 = vmatpush.bf16.msra.mxu0 0
      %1102 = vmatpush.bf16.msra.mxu0 0
      %1103 = vmatpush.bf16.msra.mxu0 0
      %1104 = vmatpush.bf16.msra.mxu0 0
      %1105 = vmatpush.bf16.msra.mxu0 0
      %1106 = vmatpush.bf16.msra.mxu0 0
      %1107 = vmatpush.bf16.msra.mxu0 %v1098
      %1108 = vmatmul.bf16.gmra.mxu0 %v1095
      %v1109 = vpop.f32.mrf.mxu0
      %v1110 = vadd.f32 0.0, %v1109
      %v1111 = vpop.f32.mrf.mxu0
      %1112 = vdwg.mxu0
      %1113 = vrot.lane.b32.xlu0 %v879, 120
      %v1114 = vpop.permute.xlu0 %1113
      %1115 = vrot.lane.b32.xlu0 %v879, 88
      %v1116 = vpop.permute.xlu0 %1115
      %v1118 = vsel %vm882, %v1114, 0
      %v1121 = vsel %vm882, %v1116, 0
      %1123 = vmatpush.bf16.xpose.msra.mxu0 0
      %1124 = vmatpush.bf16.xpose.msra.mxu0 0
      %1125 = vmatpush.bf16.xpose.msra.mxu0 0
      %1126 = vmatpush.bf16.xpose.msra.mxu0 0
      %1127 = vmatpush.bf16.xpose.msra.mxu0 0
      %1128 = vmatpush.bf16.xpose.msra.mxu0 0
      %1129 = vmatpush.bf16.xpose.msra.mxu0 0
      %1130 = vmatpush.bf16.xpose.msra.mxu0 %v1121
      %1131 = vmatmul.bf16.gmra.mxu0 %v1118
      %v1132 = vpop.f32.mrf.mxu0
      %v1133 = vadd.f32 0.0, %v1132
      %v1134 = vpop.f32.mrf.mxu0
      %1135 = vdwg.mxu0
      %1136 = vrot.lane.b32.xlu0 %v904, 120
      %v1137 = vpop.permute.xlu0 %1136
      %1138 = vrot.lane.b32.xlu0 %v904, 88
      %v1139 = vpop.permute.xlu0 %1138
      %v1141 = vsel %vm882, %v1137, 0
      %v1144 = vsel %vm882, %v1139, 0
      %1146 = vmatpush.bf16.xpose.msra.mxu0 0
      %1147 = vmatpush.bf16.xpose.msra.mxu0 0
      %1148 = vmatpush.bf16.xpose.msra.mxu0 0
      %1149 = vmatpush.bf16.xpose.msra.mxu0 0
      %1150 = vmatpush.bf16.xpose.msra.mxu0 0
      %1151 = vmatpush.bf16.xpose.msra.mxu0 0
      %1152 = vmatpush.bf16.xpose.msra.mxu0 0
      %1153 = vmatpush.bf16.xpose.msra.mxu0 %v1144
      %1154 = vmatmul.bf16.gmra.mxu0 %v1141
      %v1155 = vpop.f32.mrf.mxu0
      %v1156 = vadd.f32 0.0, %v1155
      %v1157 = vpop.f32.mrf.mxu0
      %1158 = vdwg.mxu0
      %1159 = vrot.lane.b32.xlu0 %v928, 120
      %v1160 = vpop.permute.xlu0 %1159
      %1161 = vrot.lane.b32.xlu0 %v928, 88
      %v1162 = vpop.permute.xlu0 %1161
      %v1164 = vsel %vm882, %v1160, 0
      %v1167 = vsel %vm882, %v1162, 0
      %1169 = vmatpush.bf16.xpose.msra.mxu0 0
      %1170 = vmatpush.bf16.xpose.msra.mxu0 0
      %1171 = vmatpush.bf16.xpose.msra.mxu0 0
      %1172 = vmatpush.bf16.xpose.msra.mxu0 0
      %1173 = vmatpush.bf16.xpose.msra.mxu0 0
      %1174 = vmatpush.bf16.xpose.msra.mxu0 0
      %1175 = vmatpush.bf16.xpose.msra.mxu0 0
      %1176 = vmatpush.bf16.xpose.msra.mxu0 %v1167
      %1177 = vmatmul.bf16.gmra.mxu0 %v1164
      %v1178 = vpop.f32.mrf.mxu0
      %v1179 = vadd.f32 0.0, %v1178
      %v1180 = vpop.f32.mrf.mxu0
      %1181 = vdwg.mxu0
      %1182 = vrot.lane.b32.xlu0 %v952, 120
      %v1183 = vpop.permute.xlu0 %1182
      %1184 = vrot.lane.b32.xlu0 %v952, 88
      %v1185 = vpop.permute.xlu0 %1184
      %v1187 = vsel %vm882, %v1183, 0
      %v1190 = vsel %vm882, %v1185, 0
      %1192 = vmatpush.bf16.xpose.msra.mxu0 0
      %1193 = vmatpush.bf16.xpose.msra.mxu0 0
      %1194 = vmatpush.bf16.xpose.msra.mxu0 0
      %1195 = vmatpush.bf16.xpose.msra.mxu0 0
      %1196 = vmatpush.bf16.xpose.msra.mxu0 0
      %1197 = vmatpush.bf16.xpose.msra.mxu0 0
      %1198 = vmatpush.bf16.xpose.msra.mxu0 0
      %1199 = vmatpush.bf16.xpose.msra.mxu0 %v1190
      %1200 = vmatmul.bf16.gmra.mxu0 %v1187
      %v1201 = vpop.f32.mrf.mxu0
      %v1202 = vadd.f32 0.0, %v1201
      %v1203 = vpop.f32.mrf.mxu0
      %1204 = vdwg.mxu0
      %v1205 = vmul.f32 %v1133, 0.35355338
      %v1206 = vmul.f32 %v1156, 0.35355338
      %v1207 = vmul.f32 %v1179, 0.35355338
      %v1208 = vmul.f32 %v1202, 0.35355338
      %v1209 = vsel %vm978, %v1205, -inf
      %1210 = vmax.xlane.f32.xlu0 %v1209
      %v1211 = vpop.xlane.xlu0 %1210
      %v1212 = vsel %vm978, %v1206, -inf
      %1213 = vmax.xlane.f32.xlu0 %v1212
      %v1214 = vpop.xlane.xlu0 %1213
      %v1215 = vsel %vm978, %v1207, -inf
      %1216 = vmax.xlane.f32.xlu0 %v1215
      %v1217 = vpop.xlane.xlu0 %1216
      %v1218 = vsel %vm978, %v1208, -inf
      %1219 = vmax.xlane.f32.xlu0 %v1218
      %v1220 = vpop.xlane.xlu0 %1219
      %v1221 = vsub.f32 %v1205, %v1211
      %v1222 = vsub.f32 %v1206, %v1214
      %v1223 = vsub.f32 %v1207, %v1217
      %v1224 = vsub.f32 %v1208, %v1220
      %v1225 = vmul.f32 %v1221, 1.442695
      %v1226 = vpow.pop %v1225
      %v1227 = vmul.f32 %v1222, 1.442695
      %v1228 = vpow.pop %v1227
      %v1229 = vmul.f32 %v1223, 1.442695
      %v1230 = vpow.pop %v1229
      %v1231 = vmul.f32 %v1224, 1.442695
      %v1232 = vpow.pop %v1231
      %v1233 = vsel %vm978, %v1226, 0.0
      %1234 = vadd.xlane.f32.xlu0 %v1233
      %v1235 = vpop.xlane.xlu0 %1234
      %v1236 = vsel %vm978, %v1228, 0.0
      %1237 = vadd.xlane.f32.xlu0 %v1236
      %v1238 = vpop.xlane.xlu0 %1237
      %v1239 = vsel %vm978, %v1230, 0.0
      %1240 = vadd.xlane.f32.xlu0 %v1239
      %v1241 = vpop.xlane.xlu0 %1240
      %v1242 = vsel %vm978, %v1232, 0.0
      %1243 = vadd.xlane.f32.xlu0 %v1242
      %v1244 = vpop.xlane.xlu0 %1243
      %v1245 = vrcp.pop %v1235
      %v1246 = vrcp.pop %v1238
      %v1247 = vrcp.pop %v1241
      %v1248 = vrcp.pop %v1244
      %v1249 = vmul.f32 %v1226, %v1245
      %v1250 = vmul.f32 %v1228, %v1246
      %v1251 = vmul.f32 %v1230, %v1247
      %v1252 = vmul.f32 %v1232, %v1248
      %v1253 = vpack.c.bf16 %v1249, %v1249
      %v1254 = vpack.c.bf16 %v1250, %v1250
      %v1255 = vpack.c.bf16 %v1251, %v1251
      %v1256 = vpack.c.bf16 %v1252, %v1252
      %1257 = vrot.lane.b32.xlu0 %v879, 56
      %v1258 = vpop.permute.xlu0 %1257
      %v1260 = vsel %vm1029, %v1253, 0
      %v1263 = vsel %vm1033, %v1258, 0
      %1265 = vmatpush.bf16.msra.mxu0 0
      %1266 = vmatpush.bf16.msra.mxu0 0
      %1267 = vmatpush.bf16.msra.mxu0 0
      %1268 = vmatpush.bf16.msra.mxu0 0
      %1269 = vmatpush.bf16.msra.mxu0 0
      %1270 = vmatpush.bf16.msra.mxu0 0
      %1271 = vmatpush.bf16.msra.mxu0 0
      %1272 = vmatpush.bf16.msra.mxu0 %v1263
      %1273 = vmatmul.bf16.gmra.mxu0 %v1260
      %v1274 = vpop.f32.mrf.mxu0
      %v1275 = vadd.f32 0.0, %v1274
      %v1276 = vpop.f32.mrf.mxu0
      %1277 = vdwg.mxu0
      %1278 = vrot.lane.b32.xlu0 %v904, 56
      %v1279 = vpop.permute.xlu0 %1278
      %v1281 = vsel %vm1029, %v1254, 0
      %v1284 = vsel %vm1033, %v1279, 0
      %1286 = vmatpush.bf16.msra.mxu0 0
      %1287 = vmatpush.bf16.msra.mxu0 0
      %1288 = vmatpush.bf16.msra.mxu0 0
      %1289 = vmatpush.bf16.msra.mxu0 0
      %1290 = vmatpush.bf16.msra.mxu0 0
      %1291 = vmatpush.bf16.msra.mxu0 0
      %1292 = vmatpush.bf16.msra.mxu0 0
      %1293 = vmatpush.bf16.msra.mxu0 %v1284
      %1294 = vmatmul.bf16.gmra.mxu0 %v1281
      %v1295 = vpop.f32.mrf.mxu0
      %v1296 = vadd.f32 0.0, %v1295
      %v1297 = vpop.f32.mrf.mxu0
      %1298 = vdwg.mxu0
      %1299 = vrot.lane.b32.xlu0 %v928, 56
      %v1300 = vpop.permute.xlu0 %1299
      %v1302 = vsel %vm1029, %v1255, 0
      %v1305 = vsel %vm1033, %v1300, 0
      %1307 = vmatpush.bf16.msra.mxu0 0
      %1308 = vmatpush.bf16.msra.mxu0 0
      %1309 = vmatpush.bf16.msra.mxu0 0
      %1310 = vmatpush.bf16.msra.mxu0 0
      %1311 = vmatpush.bf16.msra.mxu0 0
      %1312 = vmatpush.bf16.msra.mxu0 0
      %1313 = vmatpush.bf16.msra.mxu0 0
      %1314 = vmatpush.bf16.msra.mxu0 %v1305
      %1315 = vmatmul.bf16.gmra.mxu0 %v1302
      %v1316 = vpop.f32.mrf.mxu0
      %v1317 = vadd.f32 0.0, %v1316
      %v1318 = vpop.f32.mrf.mxu0
      %1319 = vdwg.mxu0
      %1320 = vrot.lane.b32.xlu0 %v952, 56
      %v1321 = vpop.permute.xlu0 %1320
      %v1323 = vsel %vm1029, %v1256, 0
      %v1326 = vsel %vm1033, %v1321, 0
      %1328 = vmatpush.bf16.msra.mxu0 0
      %1329 = vmatpush.bf16.msra.mxu0 0
      %1330 = vmatpush.bf16.msra.mxu0 0
      %1331 = vmatpush.bf16.msra.mxu0 0
      %1332 = vmatpush.bf16.msra.mxu0 0
      %1333 = vmatpush.bf16.msra.mxu0 0
      %1334 = vmatpush.bf16.msra.mxu0 0
      %1335 = vmatpush.bf16.msra.mxu0 %v1326
      %1336 = vmatmul.bf16.gmra.mxu0 %v1323
      %v1337 = vpop.f32.mrf.mxu0
      %v1338 = vadd.f32 0.0, %v1337
      %v1339 = vpop.f32.mrf.mxu0
      %1340 = vdwg.mxu0
      %1341 = vrot.lane.b32.xlu0 %v879, 112
      %v1342 = vpop.permute.xlu0 %1341
      %1343 = vrot.lane.b32.xlu0 %v879, 80
      %v1344 = vpop.permute.xlu0 %1343
      %v1346 = vsel %vm882, %v1342, 0
      %v1349 = vsel %vm882, %v1344, 0
      %1351 = vmatpush.bf16.xpose.msra.mxu0 0
      %1352 = vmatpush.bf16.xpose.msra.mxu0 0
      %1353 = vmatpush.bf16.xpose.msra.mxu0 0
      %1354 = vmatpush.bf16.xpose.msra.mxu0 0
      %1355 = vmatpush.bf16.xpose.msra.mxu0 0
      %1356 = vmatpush.bf16.xpose.msra.mxu0 0
      %1357 = vmatpush.bf16.xpose.msra.mxu0 0
      %1358 = vmatpush.bf16.xpose.msra.mxu0 %v1349
      %1359 = vmatmul.bf16.gmra.mxu0 %v1346
      %v1360 = vpop.f32.mrf.mxu0
      %v1361 = vadd.f32 0.0, %v1360
      %v1362 = vpop.f32.mrf.mxu0
      %1363 = vdwg.mxu0
      %1364 = vrot.lane.b32.xlu0 %v904, 112
      %v1365 = vpop.permute.xlu0 %1364
      %1366 = vrot.lane.b32.xlu0 %v904, 80
      %v1367 = vpop.permute.xlu0 %1366
      %v1369 = vsel %vm882, %v1365, 0
      %v1372 = vsel %vm882, %v1367, 0
      %1374 = vmatpush.bf16.xpose.msra.mxu0 0
      %1375 = vmatpush.bf16.xpose.msra.mxu0 0
      %1376 = vmatpush.bf16.xpose.msra.mxu0 0
      %1377 = vmatpush.bf16.xpose.msra.mxu0 0
      %1378 = vmatpush.bf16.xpose.msra.mxu0 0
      %1379 = vmatpush.bf16.xpose.msra.mxu0 0
      %1380 = vmatpush.bf16.xpose.msra.mxu0 0
      %1381 = vmatpush.bf16.xpose.msra.mxu0 %v1372
      %1382 = vmatmul.bf16.gmra.mxu0 %v1369
      %v1383 = vpop.f32.mrf.mxu0
      %v1384 = vadd.f32 0.0, %v1383
      %v1385 = vpop.f32.mrf.mxu0
      %1386 = vdwg.mxu0
      %1387 = vrot.lane.b32.xlu0 %v928, 112
      %v1388 = vpop.permute.xlu0 %1387
      %1389 = vrot.lane.b32.xlu0 %v928, 80
      %v1390 = vpop.permute.xlu0 %1389
      %v1392 = vsel %vm882, %v1388, 0
      %v1395 = vsel %vm882, %v1390, 0
      %1397 = vmatpush.bf16.xpose.msra.mxu0 0
      %1398 = vmatpush.bf16.xpose.msra.mxu0 0
      %1399 = vmatpush.bf16.xpose.msra.mxu0 0
      %1400 = vmatpush.bf16.xpose.msra.mxu0 0
      %1401 = vmatpush.bf16.xpose.msra.mxu0 0
      %1402 = vmatpush.bf16.xpose.msra.mxu0 0
      %1403 = vmatpush.bf16.xpose.msra.mxu0 0
      %1404 = vmatpush.bf16.xpose.msra.mxu0 %v1395
      %1405 = vmatmul.bf16.gmra.mxu0 %v1392
      %v1406 = vpop.f32.mrf.mxu0
      %v1407 = vadd.f32 0.0, %v1406
      %v1408 = vpop.f32.mrf.mxu0
      %1409 = vdwg.mxu0
      %1410 = vrot.lane.b32.xlu0 %v952, 112
      %v1411 = vpop.permute.xlu0 %1410
      %1412 = vrot.lane.b32.xlu0 %v952, 80
      %v1413 = vpop.permute.xlu0 %1412
      %v1415 = vsel %vm882, %v1411, 0
      %v1418 = vsel %vm882, %v1413, 0
      %1420 = vmatpush.bf16.xpose.msra.mxu0 0
      %1421 = vmatpush.bf16.xpose.msra.mxu0 0
      %1422 = vmatpush.bf16.xpose.msra.mxu0 0
      %1423 = vmatpush.bf16.xpose.msra.mxu0 0
      %1424 = vmatpush.bf16.xpose.msra.mxu0 0
      %1425 = vmatpush.bf16.xpose.msra.mxu0 0
      %1426 = vmatpush.bf16.xpose.msra.mxu0 0
      %1427 = vmatpush.bf16.xpose.msra.mxu0 %v1418
      %1428 = vmatmul.bf16.gmra.mxu0 %v1415
      %v1429 = vpop.f32.mrf.mxu0
      %v1430 = vadd.f32 0.0, %v1429
      %v1431 = vpop.f32.mrf.mxu0
      %1432 = vdwg.mxu0
      %v1433 = vmul.f32 %v1361, 0.35355338
      %v1434 = vmul.f32 %v1384, 0.35355338
      %v1435 = vmul.f32 %v1407, 0.35355338
      %v1436 = vmul.f32 %v1430, 0.35355338
      %v1437 = vsel %vm978, %v1433, -inf
      %1438 = vmax.xlane.f32.xlu0 %v1437
      %v1439 = vpop.xlane.xlu0 %1438
      %v1440 = vsel %vm978, %v1434, -inf
      %1441 = vmax.xlane.f32.xlu0 %v1440
      %v1442 = vpop.xlane.xlu0 %1441
      %v1443 = vsel %vm978, %v1435, -inf
      %1444 = vmax.xlane.f32.xlu0 %v1443
      %v1445 = vpop.xlane.xlu0 %1444
      %v1446 = vsel %vm978, %v1436, -inf
      %1447 = vmax.xlane.f32.xlu0 %v1446
      %v1448 = vpop.xlane.xlu0 %1447
      %v1449 = vsub.f32 %v1433, %v1439
      %v1450 = vsub.f32 %v1434, %v1442
      %v1451 = vsub.f32 %v1435, %v1445
      %v1452 = vsub.f32 %v1436, %v1448
      %v1453 = vmul.f32 %v1449, 1.442695
      %v1454 = vpow.pop %v1453
      %v1455 = vmul.f32 %v1450, 1.442695
      %v1456 = vpow.pop %v1455
      %v1457 = vmul.f32 %v1451, 1.442695
      %v1458 = vpow.pop %v1457
      %v1459 = vmul.f32 %v1452, 1.442695
      %v1460 = vpow.pop %v1459
      %v1461 = vsel %vm978, %v1454, 0.0
      %1462 = vadd.xlane.f32.xlu0 %v1461
      %v1463 = vpop.xlane.xlu0 %1462
      %v1464 = vsel %vm978, %v1456, 0.0
      %1465 = vadd.xlane.f32.xlu0 %v1464
      %v1466 = vpop.xlane.xlu0 %1465
      %v1467 = vsel %vm978, %v1458, 0.0
      %1468 = vadd.xlane.f32.xlu0 %v1467
      %v1469 = vpop.xlane.xlu0 %1468
      %v1470 = vsel %vm978, %v1460, 0.0
      %1471 = vadd.xlane.f32.xlu0 %v1470
      %v1472 = vpop.xlane.xlu0 %1471
      %v1473 = vrcp.pop %v1463
      %v1474 = vrcp.pop %v1466
      %v1475 = vrcp.pop %v1469
      %v1476 = vrcp.pop %v1472
      %v1477 = vmul.f32 %v1454, %v1473
      %v1478 = vmul.f32 %v1456, %v1474
      %v1479 = vmul.f32 %v1458, %v1475
      %v1480 = vmul.f32 %v1460, %v1476
      %v1481 = vpack.c.bf16 %v1477, %v1477
      %v1482 = vpack.c.bf16 %v1478, %v1478
      %v1483 = vpack.c.bf16 %v1479, %v1479
      %v1484 = vpack.c.bf16 %v1480, %v1480
      %1485 = vrot.lane.b32.xlu0 %v879, 48
      %v1486 = vpop.permute.xlu0 %1485
      %v1488 = vsel %vm1029, %v1481, 0
      %v1491 = vsel %vm1033, %v1486, 0
      %1493 = vmatpush.bf16.msra.mxu0 0
      %1494 = vmatpush.bf16.msra.mxu0 0
      %1495 = vmatpush.bf16.msra.mxu0 0
      %1496 = vmatpush.bf16.msra.mxu0 0
      %1497 = vmatpush.bf16.msra.mxu0 0
      %1498 = vmatpush.bf16.msra.mxu0 0
      %1499 = vmatpush.bf16.msra.mxu0 0
      %1500 = vmatpush.bf16.msra.mxu0 %v1491
      %1501 = vmatmul.bf16.gmra.mxu0 %v1488
      %v1502 = vpop.f32.mrf.mxu0
      %v1503 = vadd.f32 0.0, %v1502
      %v1504 = vpop.f32.mrf.mxu0
      %1505 = vdwg.mxu0
      %1506 = vrot.lane.b32.xlu0 %v904, 48
      %v1507 = vpop.permute.xlu0 %1506
      %v1509 = vsel %vm1029, %v1482, 0
      %v1512 = vsel %vm1033, %v1507, 0
      %1514 = vmatpush.bf16.msra.mxu0 0
      %1515 = vmatpush.bf16.msra.mxu0 0
      %1516 = vmatpush.bf16.msra.mxu0 0
      %1517 = vmatpush.bf16.msra.mxu0 0
      %1518 = vmatpush.bf16.msra.mxu0 0
      %1519 = vmatpush.bf16.msra.mxu0 0
      %1520 = vmatpush.bf16.msra.mxu0 0
      %1521 = vmatpush.bf16.msra.mxu0 %v1512
      %1522 = vmatmul.bf16.gmra.mxu0 %v1509
      %v1523 = vpop.f32.mrf.mxu0
      %v1524 = vadd.f32 0.0, %v1523
      %v1525 = vpop.f32.mrf.mxu0
      %1526 = vdwg.mxu0
      %1527 = vrot.lane.b32.xlu0 %v928, 48
      %v1528 = vpop.permute.xlu0 %1527
      %v1530 = vsel %vm1029, %v1483, 0
      %v1533 = vsel %vm1033, %v1528, 0
      %1535 = vmatpush.bf16.msra.mxu0 0
      %1536 = vmatpush.bf16.msra.mxu0 0
      %1537 = vmatpush.bf16.msra.mxu0 0
      %1538 = vmatpush.bf16.msra.mxu0 0
      %1539 = vmatpush.bf16.msra.mxu0 0
      %1540 = vmatpush.bf16.msra.mxu0 0
      %1541 = vmatpush.bf16.msra.mxu0 0
      %1542 = vmatpush.bf16.msra.mxu0 %v1533
      %1543 = vmatmul.bf16.gmra.mxu0 %v1530
      %v1544 = vpop.f32.mrf.mxu0
      %v1545 = vadd.f32 0.0, %v1544
      %v1546 = vpop.f32.mrf.mxu0
      %1547 = vdwg.mxu0
      %1548 = vrot.lane.b32.xlu0 %v952, 48
      %v1549 = vpop.permute.xlu0 %1548
      %v1551 = vsel %vm1029, %v1484, 0
      %v1554 = vsel %vm1033, %v1549, 0
      %1556 = vmatpush.bf16.msra.mxu0 0
      %1557 = vmatpush.bf16.msra.mxu0 0
      %1558 = vmatpush.bf16.msra.mxu0 0
      %1559 = vmatpush.bf16.msra.mxu0 0
      %1560 = vmatpush.bf16.msra.mxu0 0
      %1561 = vmatpush.bf16.msra.mxu0 0
      %1562 = vmatpush.bf16.msra.mxu0 0
      %1563 = vmatpush.bf16.msra.mxu0 %v1554
      %1564 = vmatmul.bf16.gmra.mxu0 %v1551
      %v1565 = vpop.f32.mrf.mxu0
      %v1566 = vadd.f32 0.0, %v1565
      %v1567 = vpop.f32.mrf.mxu0
      %1568 = vdwg.mxu0
      %1569 = vrot.lane.b32.xlu0 %v879, 104
      %v1570 = vpop.permute.xlu0 %1569
      %1571 = vrot.lane.b32.xlu0 %v879, 72
      %v1572 = vpop.permute.xlu0 %1571
      %v1574 = vsel %vm882, %v1570, 0
      %v1577 = vsel %vm882, %v1572, 0
      %1579 = vmatpush.bf16.xpose.msra.mxu0 0
      %1580 = vmatpush.bf16.xpose.msra.mxu0 0
      %1581 = vmatpush.bf16.xpose.msra.mxu0 0
      %1582 = vmatpush.bf16.xpose.msra.mxu0 0
      %1583 = vmatpush.bf16.xpose.msra.mxu0 0
      %1584 = vmatpush.bf16.xpose.msra.mxu0 0
      %1585 = vmatpush.bf16.xpose.msra.mxu0 0
      %1586 = vmatpush.bf16.xpose.msra.mxu0 %v1577
      %1587 = vmatmul.bf16.gmra.mxu0 %v1574
      %v1588 = vpop.f32.mrf.mxu0
      %v1589 = vadd.f32 0.0, %v1588
      %v1590 = vpop.f32.mrf.mxu0
      %1591 = vdwg.mxu0
      %1592 = vrot.lane.b32.xlu0 %v904, 104
      %v1593 = vpop.permute.xlu0 %1592
      %1594 = vrot.lane.b32.xlu0 %v904, 72
      %v1595 = vpop.permute.xlu0 %1594
      %v1597 = vsel %vm882, %v1593, 0
      %v1600 = vsel %vm882, %v1595, 0
      %1602 = vmatpush.bf16.xpose.msra.mxu0 0
      %1603 = vmatpush.bf16.xpose.msra.mxu0 0
      %1604 = vmatpush.bf16.xpose.msra.mxu0 0
      %1605 = vmatpush.bf16.xpose.msra.mxu0 0
      %1606 = vmatpush.bf16.xpose.msra.mxu0 0
      %1607 = vmatpush.bf16.xpose.msra.mxu0 0
      %1608 = vmatpush.bf16.xpose.msra.mxu0 0
      %1609 = vmatpush.bf16.xpose.msra.mxu0 %v1600
      %1610 = vmatmul.bf16.gmra.mxu0 %v1597
      %v1611 = vpop.f32.mrf.mxu0
      %v1612 = vadd.f32 0.0, %v1611
      %v1613 = vpop.f32.mrf.mxu0
      %1614 = vdwg.mxu0
      %1615 = vrot.lane.b32.xlu0 %v928, 104
      %v1616 = vpop.permute.xlu0 %1615
      %1617 = vrot.lane.b32.xlu0 %v928, 72
      %v1618 = vpop.permute.xlu0 %1617
      %v1620 = vsel %vm882, %v1616, 0
      %v1623 = vsel %vm882, %v1618, 0
      %1625 = vmatpush.bf16.xpose.msra.mxu0 0
      %1626 = vmatpush.bf16.xpose.msra.mxu0 0
      %1627 = vmatpush.bf16.xpose.msra.mxu0 0
      %1628 = vmatpush.bf16.xpose.msra.mxu0 0
      %1629 = vmatpush.bf16.xpose.msra.mxu0 0
      %1630 = vmatpush.bf16.xpose.msra.mxu0 0
      %1631 = vmatpush.bf16.xpose.msra.mxu0 0
      %1632 = vmatpush.bf16.xpose.msra.mxu0 %v1623
      %1633 = vmatmul.bf16.gmra.mxu0 %v1620
      %v1634 = vpop.f32.mrf.mxu0
      %v1635 = vadd.f32 0.0, %v1634
      %v1636 = vpop.f32.mrf.mxu0
      %1637 = vdwg.mxu0
      %1638 = vrot.lane.b32.xlu0 %v952, 104
      %v1639 = vpop.permute.xlu0 %1638
      %1640 = vrot.lane.b32.xlu0 %v952, 72
      %v1641 = vpop.permute.xlu0 %1640
      %v1643 = vsel %vm882, %v1639, 0
      %v1646 = vsel %vm882, %v1641, 0
      %1648 = vmatpush.bf16.xpose.msra.mxu0 0
      %1649 = vmatpush.bf16.xpose.msra.mxu0 0
      %1650 = vmatpush.bf16.xpose.msra.mxu0 0
      %1651 = vmatpush.bf16.xpose.msra.mxu0 0
      %1652 = vmatpush.bf16.xpose.msra.mxu0 0
      %1653 = vmatpush.bf16.xpose.msra.mxu0 0
      %1654 = vmatpush.bf16.xpose.msra.mxu0 0
      %1655 = vmatpush.bf16.xpose.msra.mxu0 %v1646
      %1656 = vmatmul.bf16.gmra.mxu0 %v1643
      %v1657 = vpop.f32.mrf.mxu0
      %v1658 = vadd.f32 0.0, %v1657
      %v1659 = vpop.f32.mrf.mxu0
      %1660 = vdwg.mxu0
      %v1661 = vmul.f32 %v1589, 0.35355338
      %v1662 = vmul.f32 %v1612, 0.35355338
      %v1663 = vmul.f32 %v1635, 0.35355338
      %v1664 = vmul.f32 %v1658, 0.35355338
      %v1665 = vsel %vm978, %v1661, -inf
      %1666 = vmax.xlane.f32.xlu0 %v1665
      %v1667 = vpop.xlane.xlu0 %1666
      %v1668 = vsel %vm978, %v1662, -inf
      %1669 = vmax.xlane.f32.xlu0 %v1668
      %v1670 = vpop.xlane.xlu0 %1669
      %v1671 = vsel %vm978, %v1663, -inf
      %1672 = vmax.xlane.f32.xlu0 %v1671
      %v1673 = vpop.xlane.xlu0 %1672
      %v1674 = vsel %vm978, %v1664, -inf
      %1675 = vmax.xlane.f32.xlu0 %v1674
      %v1676 = vpop.xlane.xlu0 %1675
      %v1677 = vsub.f32 %v1661, %v1667
      %v1678 = vsub.f32 %v1662, %v1670
      %v1679 = vsub.f32 %v1663, %v1673
      %v1680 = vsub.f32 %v1664, %v1676
      %v1681 = vmul.f32 %v1677, 1.442695
      %v1682 = vpow.pop %v1681
      %v1683 = vmul.f32 %v1678, 1.442695
      %v1684 = vpow.pop %v1683
      %v1685 = vmul.f32 %v1679, 1.442695
      %v1686 = vpow.pop %v1685
      %v1687 = vmul.f32 %v1680, 1.442695
      %v1688 = vpow.pop %v1687
      %v1689 = vsel %vm978, %v1682, 0.0
      %1690 = vadd.xlane.f32.xlu0 %v1689
      %v1691 = vpop.xlane.xlu0 %1690
      %v1692 = vsel %vm978, %v1684, 0.0
      %1693 = vadd.xlane.f32.xlu0 %v1692
      %v1694 = vpop.xlane.xlu0 %1693
      %v1695 = vsel %vm978, %v1686, 0.0
      %1696 = vadd.xlane.f32.xlu0 %v1695
      %v1697 = vpop.xlane.xlu0 %1696
      %v1698 = vsel %vm978, %v1688, 0.0
      %1699 = vadd.xlane.f32.xlu0 %v1698
      %v1700 = vpop.xlane.xlu0 %1699
      %v1701 = vrcp.pop %v1691
      %v1702 = vrcp.pop %v1694
      %v1703 = vrcp.pop %v1697
      %v1704 = vrcp.pop %v1700
      %v1705 = vmul.f32 %v1682, %v1701
      %v1706 = vmul.f32 %v1684, %v1702
      %v1707 = vmul.f32 %v1686, %v1703
      %v1708 = vmul.f32 %v1688, %v1704
      %v1709 = vpack.c.bf16 %v1705, %v1705
      %v1710 = vpack.c.bf16 %v1706, %v1706
      %v1711 = vpack.c.bf16 %v1707, %v1707
      %v1712 = vpack.c.bf16 %v1708, %v1708
      %1713 = vrot.lane.b32.xlu0 %v879, 40
      %v1714 = vpop.permute.xlu0 %1713
      %v1716 = vsel %vm1029, %v1709, 0
      %v1719 = vsel %vm1033, %v1714, 0
      %1721 = vmatpush.bf16.msra.mxu0 0
      %1722 = vmatpush.bf16.msra.mxu0 0
      %1723 = vmatpush.bf16.msra.mxu0 0
      %1724 = vmatpush.bf16.msra.mxu0 0
      %1725 = vmatpush.bf16.msra.mxu0 0
      %1726 = vmatpush.bf16.msra.mxu0 0
      %1727 = vmatpush.bf16.msra.mxu0 0
      %1728 = vmatpush.bf16.msra.mxu0 %v1719
      %1729 = vmatmul.bf16.gmra.mxu0 %v1716
      %v1730 = vpop.f32.mrf.mxu0
      %v1731 = vadd.f32 0.0, %v1730
      %v1732 = vpop.f32.mrf.mxu0
      %1733 = vdwg.mxu0
      %1734 = vrot.lane.b32.xlu0 %v904, 40
      %v1735 = vpop.permute.xlu0 %1734
      %v1737 = vsel %vm1029, %v1710, 0
      %v1740 = vsel %vm1033, %v1735, 0
      %1742 = vmatpush.bf16.msra.mxu0 0
      %1743 = vmatpush.bf16.msra.mxu0 0
      %1744 = vmatpush.bf16.msra.mxu0 0
      %1745 = vmatpush.bf16.msra.mxu0 0
      %1746 = vmatpush.bf16.msra.mxu0 0
      %1747 = vmatpush.bf16.msra.mxu0 0
      %1748 = vmatpush.bf16.msra.mxu0 0
      %1749 = vmatpush.bf16.msra.mxu0 %v1740
      %1750 = vmatmul.bf16.gmra.mxu0 %v1737
      %v1751 = vpop.f32.mrf.mxu0
      %v1752 = vadd.f32 0.0, %v1751
      %v1753 = vpop.f32.mrf.mxu0
      %1754 = vdwg.mxu0
      %1755 = vrot.lane.b32.xlu0 %v928, 40
      %v1756 = vpop.permute.xlu0 %1755
      %v1758 = vsel %vm1029, %v1711, 0
      %v1761 = vsel %vm1033, %v1756, 0
      %1763 = vmatpush.bf16.msra.mxu0 0
      %1764 = vmatpush.bf16.msra.mxu0 0
      %1765 = vmatpush.bf16.msra.mxu0 0
      %1766 = vmatpush.bf16.msra.mxu0 0
      %1767 = vmatpush.bf16.msra.mxu0 0
      %1768 = vmatpush.bf16.msra.mxu0 0
      %1769 = vmatpush.bf16.msra.mxu0 0
      %1770 = vmatpush.bf16.msra.mxu0 %v1761
      %1771 = vmatmul.bf16.gmra.mxu0 %v1758
      %v1772 = vpop.f32.mrf.mxu0
      %v1773 = vadd.f32 0.0, %v1772
      %v1774 = vpop.f32.mrf.mxu0
      %1775 = vdwg.mxu0
      %1776 = vrot.lane.b32.xlu0 %v952, 40
      %v1777 = vpop.permute.xlu0 %1776
      %v1779 = vsel %vm1029, %v1712, 0
      %v1782 = vsel %vm1033, %v1777, 0
      %1784 = vmatpush.bf16.msra.mxu0 0
      %1785 = vmatpush.bf16.msra.mxu0 0
      %1786 = vmatpush.bf16.msra.mxu0 0
      %1787 = vmatpush.bf16.msra.mxu0 0
      %1788 = vmatpush.bf16.msra.mxu0 0
      %1789 = vmatpush.bf16.msra.mxu0 0
      %1790 = vmatpush.bf16.msra.mxu0 0
      %1791 = vmatpush.bf16.msra.mxu0 %v1782
      %1792 = vmatmul.bf16.gmra.mxu0 %v1779
      %v1793 = vpop.f32.mrf.mxu0
      %v1794 = vadd.f32 0.0, %v1793
      %v1795 = vpop.f32.mrf.mxu0
      %1796 = vdwg.mxu0
      %1801 = vst [vmem:[#allocation1] ss:$4 sm:$0xff] %v1047
      %s1802 = scalar_lea.vmem [#allocation1], 1
      %1803 = vst [vmem:[%s1802] ss:$4 sm:$0xff] %v1068
      %s1804 = scalar_lea.vmem [#allocation1], 2
      %1805 = vst [vmem:[%s1804] ss:$4 sm:$0xff] %v1089
      %s1806 = scalar_lea.vmem [#allocation1], 3
      %1807 = vst [vmem:[%s1806] ss:$4 sm:$0xff] %v1110
      %v1808 = vld.sshfl [vmem:[#allocation1] sm:$0xff pattern:$0x73625140]
      %1814 = vst [vmem:[#allocation1] ss:$4 sm:$0xff] %v1275
      %s1815 = scalar_lea.vmem [#allocation1], 1
      %1816 = vst [vmem:[%s1815] ss:$4 sm:$0xff] %v1296
      %s1817 = scalar_lea.vmem [#allocation1], 2
      %1818 = vst [vmem:[%s1817] ss:$4 sm:$0xff] %v1317
      %s1819 = scalar_lea.vmem [#allocation1], 3
      %1820 = vst [vmem:[%s1819] ss:$4 sm:$0xff] %v1338
      %v1821 = vld.sshfl [vmem:[#allocation1] sm:$0xff pattern:$0x73625140]
      %1822 = vrot.lane.b32.xlu0 %v1821, 8
      %v1823 = vpop.permute.xlu0 %1822
      %1829 = vst [vmem:[#allocation1] ss:$4 sm:$0xff] %v1503
      %s1830 = scalar_lea.vmem [#allocation1], 1
      %1831 = vst [vmem:[%s1830] ss:$4 sm:$0xff] %v1524
      %s1832 = scalar_lea.vmem [#allocation1], 2
      %1833 = vst [vmem:[%s1832] ss:$4 sm:$0xff] %v1545
      %s1834 = scalar_lea.vmem [#allocation1], 3
      %1835 = vst [vmem:[%s1834] ss:$4 sm:$0xff] %v1566
      %v1836 = vld.sshfl [vmem:[#allocation1] sm:$0xff pattern:$0x73625140]
      %1837 = vrot.lane.b32.xlu0 %v1836, 16
      %v1838 = vpop.permute.xlu0 %1837
      %1844 = vst [vmem:[#allocation1] ss:$4 sm:$0xff] %v1731
      %s1845 = scalar_lea.vmem [#allocation1], 1
      %1846 = vst [vmem:[%s1845] ss:$4 sm:$0xff] %v1752
      %s1847 = scalar_lea.vmem [#allocation1], 2
      %1848 = vst [vmem:[%s1847] ss:$4 sm:$0xff] %v1773
      %s1849 = scalar_lea.vmem [#allocation1], 3
      %1850 = vst [vmem:[%s1849] ss:$4 sm:$0xff] %v1794
      %v1851 = vld.sshfl [vmem:[#allocation1] sm:$0xff pattern:$0x73625140]
      %1852 = vrot.lane.b32.xlu0 %v1851, 24
      %v1853 = vpop.permute.xlu0 %1852
      %v1855 = vsel %vm882, %v1808, %v1823
      %vm1856 = vcmask 130048
      %v1857 = vsel %vm1856, %v1855, %v1838
      %vm1858 = vcmask 195584
      %v1859 = vsel %vm1858, %v1857, %v1853
      %v1860 = vld [vmem:[%s711] sm:$0xff]
      %v1861 = vld [vmem:[%s711 + $0x8] sm:$0xff]
      %v1862 = vld [vmem:[%s711 + $0x10] sm:$0xff]
      %v1863 = vld [vmem:[%s711 + $0x18] sm:$0xff]
      %v1864 = vpack.c.bf16 %v1859, %v1859
      %v1865 = vpack.c.bf16 %v1861, %v1860
      %v1866 = vpack.c.bf16 %v1863, %v1862
      %v1867 = vld [vmem:[%s714] sm:$0x1]
      %v1869 = vperm.slane %v1867, 0
      %v1872 = vsel %vm849, %v1864, 0
      %1874 = vmatpush.bf16.msra.mxu0 0
      %1875 = vmatpush.bf16.msra.mxu0 0
      %1876 = vmatpush.bf16.msra.mxu0 0
      %1877 = vmatpush.bf16.msra.mxu0 0
      %1878 = vmatpush.bf16.msra.mxu0 0
      %1879 = vmatpush.bf16.msra.mxu0 0
      %1880 = vmatpush.bf16.msra.mxu0 %v1866
      %1881 = vmatpush.bf16.msra.mxu0 %v1865
      %1882 = vmatmul.bf16.gmra.mxu0 %v1872
      %v1883 = vpop.f32.mrf.mxu0
      %v1884 = vadd.f32 %v1869, %v1883
      %v1885 = vpop.f32.mrf.mxu0
      %1886 = vdwg.mxu0
      %v1887 = vadd.f32 %v837, %v1884
      %v1888 = vld [vmem:[%s717] sm:$0x1]
      %v1889 = vld [vmem:[%s720] sm:$0x1]
      %v1890 = vsel %vm849, %v1887, 0.0
      %1891 = vadd.xlane.f32.xlu0 %v1890
      %v1892 = vpop.xlane.xlu0 %1891
      %v1893 = vrcp.pop 32.0
      %v1894 = vmul.f32 32.0, %v1893
      %v1895 = vsub.f32 1.0, %v1894
      %v1896 = vmul.f32 %v1893, %v1895
      %v1897 = vadd.f32 %v1893, %v1896
      %vm1898 = vweird.f32 %v1893
      %v1899 = vsel %vm1898, %v1893, %v1897
      %v1900 = vmul.f32 %v1892, %v1899
      %v1901 = vsub.f32 %v1887, %v1900
      %v1902 = vmul.f32 %v1901, %v1901
      %v1903 = vsel %vm849, %v1902, 0.0
      %1904 = vadd.xlane.f32.xlu0 %v1903
      %v1905 = vpop.xlane.xlu0 %1904
      %v1906 = vmul.f32 %v1905, %v1899
      %v1907 = vadd.f32 %v1906, 1e-05
      %v1908 = vrsqrt.pop %v1907
      %v1909 = vmul.f32 %v1908, %v1907
      %v1910 = vmul.f32 %v1909, %v1908
      %v1911 = vmul.f32 0.5, %v1910
      %v1912 = vsub.f32 1.5, %v1911
      %v1913 = vmul.f32 %v1908, %v1912
      %vm1914 = vweird.f32 %v1907
      %vm1915 = vweird.f32 %v1908
      %vm1916 = vmor %vm1914, %vm1915
      %v1917 = vsel %vm1916, %v1908, %v1913
      %v1918 = vmul.f32 %v1901, %v1917
      %v1920 = vperm.slane %v1888, 0
      %v1922 = vmul.f32 %v1918, %v1920
      %v1924 = vperm.slane %v1889, 0
      %v1926 = vadd.f32 %v1922, %v1924
      %v1927 = vld [vmem:[%s725] sm:$0xff]
      %v1928 = vld [vmem:[%s725 + $0x8] sm:$0xff]
      %v1929 = vld [vmem:[%s725 + $0x10] sm:$0xff]
      %v1930 = vld [vmem:[%s725 + $0x18] sm:$0xff]
      %v1931 = vld [vmem:[%s725 + $0x20] sm:$0xff]
      %v1932 = vld [vmem:[%s725 + $0x28] sm:$0xff]
      %v1933 = vld [vmem:[%s725 + $0x30] sm:$0xff]
      %v1934 = vld [vmem:[%s725 + $0x38] sm:$0xff]
      %v1935 = vld [vmem:[%s725 + $0x40] sm:$0xff]
      %v1936 = vld [vmem:[%s725 + $0x48] sm:$0xff]
      %v1937 = vld [vmem:[%s725 + $0x50] sm:$0xff]
      %v1938 = vld [vmem:[%s725 + $0x58] sm:$0xff]
      %v1939 = vld [vmem:[%s725 + $0x60] sm:$0xff]
      %v1940 = vld [vmem:[%s725 + $0x68] sm:$0xff]
      %v1941 = vld [vmem:[%s725 + $0x70] sm:$0xff]
      %v1942 = vld [vmem:[%s725 + $0x78] sm:$0xff]
      %v1943 = vld [vmem:[%s725 + $0x80] sm:$0xff]
      %v1944 = vld [vmem:[%s725 + $0x88] sm:$0xff]
      %v1945 = vld [vmem:[%s725 + $0x90] sm:$0xff]
      %v1946 = vld [vmem:[%s725 + $0x98] sm:$0xff]
      %v1947 = vld [vmem:[%s725 + $0xa0] sm:$0xff]
      %v1948 = vld [vmem:[%s725 + $0xa8] sm:$0xff]
      %v1949 = vld [vmem:[%s725 + $0xb0] sm:$0xff]
      %v1950 = vld [vmem:[%s725 + $0xb8] sm:$0xff]
      %v1951 = vld [vmem:[%s725 + $0xc0] sm:$0xff]
      %v1952 = vld [vmem:[%s725 + $0xc8] sm:$0xff]
      %v1953 = vld [vmem:[%s725 + $0xd0] sm:$0xff]
      %v1954 = vld [vmem:[%s725 + $0xd8] sm:$0xff]
      %v1955 = vld [vmem:[%s725 + $0xe0] sm:$0xff]
      %v1956 = vld [vmem:[%s725 + $0xe8] sm:$0xff]
      %v1957 = vld [vmem:[%s725 + $0xf0] sm:$0xff]
      %v1958 = vld [vmem:[%s725 + $0xf8] sm:$0xff]
      %v1959 = vld [vmem:[%s725 + $0x100] sm:$0xff]
      %v1960 = vld [vmem:[%s725 + $0x108] sm:$0xff]
      %v1961 = vld [vmem:[%s725 + $0x110] sm:$0xff]
      %v1962 = vld [vmem:[%s725 + $0x118] sm:$0xff]
      %v1963 = vld [vmem:[%s725 + $0x120] sm:$0xff]
      %v1964 = vld [vmem:[%s725 + $0x128] sm:$0xff]
      %v1965 = vld [vmem:[%s725 + $0x130] sm:$0xff]
      %v1966 = vld [vmem:[%s725 + $0x138] sm:$0xff]
      %v1967 = vld [vmem:[%s725 + $0x140] sm:$0xff]
      %v1968 = vld [vmem:[%s725 + $0x148] sm:$0xff]
      %v1969 = vld [vmem:[%s725 + $0x150] sm:$0xff]
      %v1970 = vld [vmem:[%s725 + $0x158] sm:$0xff]
      %v1971 = vld [vmem:[%s725 + $0x160] sm:$0xff]
      %v1972 = vld [vmem:[%s725 + $0x168] sm:$0xff]
      %v1973 = vld [vmem:[%s725 + $0x170] sm:$0xff]
      %v1974 = vld [vmem:[%s725 + $0x178] sm:$0xff]
      %v1975 = vld [vmem:[%s725 + $0x180] sm:$0xff]
      %v1976 = vld [vmem:[%s725 + $0x188] sm:$0xff]
      %v1977 = vld [vmem:[%s725 + $0x190] sm:$0xff]
      %v1978 = vld [vmem:[%s725 + $0x198] sm:$0xff]
      %v1979 = vld [vmem:[%s725 + $0x1a0] sm:$0xff]
      %v1980 = vld [vmem:[%s725 + $0x1a8] sm:$0xff]
      %v1981 = vld [vmem:[%s725 + $0x1b0] sm:$0xff]
      %v1982 = vld [vmem:[%s725 + $0x1b8] sm:$0xff]
      %v1983 = vld [vmem:[%s725 + $0x1c0] sm:$0xff]
      %v1984 = vld [vmem:[%s725 + $0x1c8] sm:$0xff]
      %v1985 = vld [vmem:[%s725 + $0x1d0] sm:$0xff]
      %v1986 = vld [vmem:[%s725 + $0x1d8] sm:$0xff]
      %v1987 = vld [vmem:[%s725 + $0x1e0] sm:$0xff]
      %v1988 = vld [vmem:[%s725 + $0x1e8] sm:$0xff]
      %v1989 = vld [vmem:[%s725 + $0x1f0] sm:$0xff]
      %v1990 = vld [vmem:[%s725 + $0x1f8] sm:$0xff]
      %v1991 = vpack.c.bf16 %v1926, %v1926
      %v1992 = vpack.c.bf16 %v1943, %v1927
      %v1993 = vpack.c.bf16 %v1944, %v1928
      %v1994 = vpack.c.bf16 %v1945, %v1929
      %v1995 = vpack.c.bf16 %v1946, %v1930
      %v1996 = vpack.c.bf16 %v1947, %v1931
      %v1997 = vpack.c.bf16 %v1948, %v1932
      %v1998 = vpack.c.bf16 %v1949, %v1933
      %v1999 = vpack.c.bf16 %v1950, %v1934
      %v2000 = vpack.c.bf16 %v1951, %v1935
      %v2001 = vpack.c.bf16 %v1952, %v1936
      %v2002 = vpack.c.bf16 %v1953, %v1937
      %v2003 = vpack.c.bf16 %v1954, %v1938
      %v2004 = vpack.c.bf16 %v1955, %v1939
      %v2005 = vpack.c.bf16 %v1956, %v1940
      %v2006 = vpack.c.bf16 %v1957, %v1941
      %v2007 = vpack.c.bf16 %v1958, %v1942
      %v2008 = vpack.c.bf16 %v1975, %v1959
      %v2009 = vpack.c.bf16 %v1976, %v1960
      %v2010 = vpack.c.bf16 %v1977, %v1961
      %v2011 = vpack.c.bf16 %v1978, %v1962
      %v2012 = vpack.c.bf16 %v1979, %v1963
      %v2013 = vpack.c.bf16 %v1980, %v1964
      %v2014 = vpack.c.bf16 %v1981, %v1965
      %v2015 = vpack.c.bf16 %v1982, %v1966
      %v2016 = vpack.c.bf16 %v1983, %v1967
      %v2017 = vpack.c.bf16 %v1984, %v1968
      %v2018 = vpack.c.bf16 %v1985, %v1969
      %v2019 = vpack.c.bf16 %v1986, %v1970
      %v2020 = vpack.c.bf16 %v1987, %v1971
      %v2021 = vpack.c.bf16 %v1988, %v1972
      %v2022 = vpack.c.bf16 %v1989, %v1973
      %v2023 = vpack.c.bf16 %v1990, %v1974
      %v2024 = vld [vmem:[%s729] sm:$0xff]
      %v2025 = vld [vmem:[%s729 + $0x8] sm:$0xff]
      %v2028 = vperm.slane %v2024, 0
      %v2029 = vperm.slane %v2024, 1
      %v2030 = vperm.slane %v2024, 2
      %v2031 = vperm.slane %v2024, 3
      %v2032 = vperm.slane %v2024, 4
      %v2033 = vperm.slane %v2024, 5
      %v2034 = vperm.slane %v2024, 6
      %v2035 = vperm.slane %v2024, 7
      %v2036 = vperm.slane %v2025, 0
      %v2037 = vperm.slane %v2025, 1
      %v2038 = vperm.slane %v2025, 2
      %v2039 = vperm.slane %v2025, 3
      %v2040 = vperm.slane %v2025, 4
      %v2041 = vperm.slane %v2025, 5
      %v2042 = vperm.slane %v2025, 6
      %v2043 = vperm.slane %v2025, 7
      %v2061 = vsel %vm849, %v1991, 0
      %2063 = vmatpush.bf16.msra.mxu0 0
      %2064 = vmatpush.bf16.msra.mxu0 0
      %2065 = vmatpush.bf16.msra.mxu0 0
      %2066 = vmatpush.bf16.msra.mxu0 0
      %2067 = vmatpush.bf16.msra.mxu0 0
      %2068 = vmatpush.bf16.msra.mxu0 0
      %2069 = vmatpush.bf16.msra.mxu0 %v2008
      %2070 = vmatpush.bf16.msra.mxu0 %v1992
      %2071 = vmatmul.bf16.gmra.mxu0 %v2061
      %v2072 = vpop.f32.mrf.mxu0
      %v2073 = vadd.f32 %v2028, %v2072
      %v2074 = vpop.f32.mrf.mxu0
      %2075 = vdwg.mxu0
      %2076 = vmatpush.bf16.msra.mxu0 0
      %2077 = vmatpush.bf16.msra.mxu0 0
      %2078 = vmatpush.bf16.msra.mxu0 0
      %2079 = vmatpush.bf16.msra.mxu0 0
      %2080 = vmatpush.bf16.msra.mxu0 0
      %2081 = vmatpush.bf16.msra.mxu0 0
      %2082 = vmatpush.bf16.msra.mxu0 %v2009
      %2083 = vmatpush.bf16.msra.mxu0 %v1993
      %2084 = vmatmul.bf16.gmra.mxu0 %v2061
      %v2085 = vpop.f32.mrf.mxu0
      %v2086 = vadd.f32 %v2029, %v2085
      %v2087 = vpop.f32.mrf.mxu0
      %2088 = vdwg.mxu0
      %2089 = vmatpush.bf16.msra.mxu0 0
      %2090 = vmatpush.bf16.msra.mxu0 0
      %2091 = vmatpush.bf16.msra.mxu0 0
      %2092 = vmatpush.bf16.msra.mxu0 0
      %2093 = vmatpush.bf16.msra.mxu0 0
      %2094 = vmatpush.bf16.msra.mxu0 0
      %2095 = vmatpush.bf16.msra.mxu0 %v2010
      %2096 = vmatpush.bf16.msra.mxu0 %v1994
      %2097 = vmatmul.bf16.gmra.mxu0 %v2061
      %v2098 = vpop.f32.mrf.mxu0
      %v2099 = vadd.f32 %v2030, %v2098
      %v2100 = vpop.f32.mrf.mxu0
      %2101 = vdwg.mxu0
      %2102 = vmatpush.bf16.msra.mxu0 0
      %2103 = vmatpush.bf16.msra.mxu0 0
      %2104 = vmatpush.bf16.msra.mxu0 0
      %2105 = vmatpush.bf16.msra.mxu0 0
      %2106 = vmatpush.bf16.msra.mxu0 0
      %2107 = vmatpush.bf16.msra.mxu0 0
      %2108 = vmatpush.bf16.msra.mxu0 %v2011
      %2109 = vmatpush.bf16.msra.mxu0 %v1995
      %2110 = vmatmul.bf16.gmra.mxu0 %v2061
      %v2111 = vpop.f32.mrf.mxu0
      %v2112 = vadd.f32 %v2031, %v2111
      %v2113 = vpop.f32.mrf.mxu0
      %2114 = vdwg.mxu0
      %2115 = vmatpush.bf16.msra.mxu0 0
      %2116 = vmatpush.bf16.msra.mxu0 0
      %2117 = vmatpush.bf16.msra.mxu0 0
      %2118 = vmatpush.bf16.msra.mxu0 0
      %2119 = vmatpush.bf16.msra.mxu0 0
      %2120 = vmatpush.bf16.msra.mxu0 0
      %2121 = vmatpush.bf16.msra.mxu0 %v2012
      %2122 = vmatpush.bf16.msra.mxu0 %v1996
      %2123 = vmatmul.bf16.gmra.mxu0 %v2061
      %v2124 = vpop.f32.mrf.mxu0
      %v2125 = vadd.f32 %v2032, %v2124
      %v2126 = vpop.f32.mrf.mxu0
      %2127 = vdwg.mxu0
      %2128 = vmatpush.bf16.msra.mxu0 0
      %2129 = vmatpush.bf16.msra.mxu0 0
      %2130 = vmatpush.bf16.msra.mxu0 0
      %2131 = vmatpush.bf16.msra.mxu0 0
      %2132 = vmatpush.bf16.msra.mxu0 0
      %2133 = vmatpush.bf16.msra.mxu0 0
      %2134 = vmatpush.bf16.msra.mxu0 %v2013
      %2135 = vmatpush.bf16.msra.mxu0 %v1997
      %2136 = vmatmul.bf16.gmra.mxu0 %v2061
      %v2137 = vpop.f32.mrf.mxu0
      %v2138 = vadd.f32 %v2033, %v2137
      %v2139 = vpop.f32.mrf.mxu0
      %2140 = vdwg.mxu0
      %2141 = vmatpush.bf16.msra.mxu0 0
      %2142 = vmatpush.bf16.msra.mxu0 0
      %2143 = vmatpush.bf16.msra.mxu0 0
      %2144 = vmatpush.bf16.msra.mxu0 0
      %2145 = vmatpush.bf16.msra.mxu0 0
      %2146 = vmatpush.bf16.msra.mxu0 0
      %2147 = vmatpush.bf16.msra.mxu0 %v2014
      %2148 = vmatpush.bf16.msra.mxu0 %v1998
      %2149 = vmatmul.bf16.gmra.mxu0 %v2061
      %v2150 = vpop.f32.mrf.mxu0
      %v2151 = vadd.f32 %v2034, %v2150
      %v2152 = vpop.f32.mrf.mxu0
      %2153 = vdwg.mxu0
      %2154 = vmatpush.bf16.msra.mxu0 0
      %2155 = vmatpush.bf16.msra.mxu0 0
      %2156 = vmatpush.bf16.msra.mxu0 0
      %2157 = vmatpush.bf16.msra.mxu0 0
      %2158 = vmatpush.bf16.msra.mxu0 0
      %2159 = vmatpush.bf16.msra.mxu0 0
      %2160 = vmatpush.bf16.msra.mxu0 %v2015
      %2161 = vmatpush.bf16.msra.mxu0 %v1999
      %2162 = vmatmul.bf16.gmra.mxu0 %v2061
      %v2163 = vpop.f32.mrf.mxu0
      %v2164 = vadd.f32 %v2035, %v2163
      %v2165 = vpop.f32.mrf.mxu0
      %2166 = vdwg.mxu0
      %2167 = vmatpush.bf16.msra.mxu0 0
      %2168 = vmatpush.bf16.msra.mxu0 0
      %2169 = vmatpush.bf16.msra.mxu0 0
      %2170 = vmatpush.bf16.msra.mxu0 0
      %2171 = vmatpush.bf16.msra.mxu0 0
      %2172 = vmatpush.bf16.msra.mxu0 0
      %2173 = vmatpush.bf16.msra.mxu0 %v2016
      %2174 = vmatpush.bf16.msra.mxu0 %v2000
      %2175 = vmatmul.bf16.gmra.mxu0 %v2061
      %v2176 = vpop.f32.mrf.mxu0
      %v2177 = vadd.f32 %v2036, %v2176
      %v2178 = vpop.f32.mrf.mxu0
      %2179 = vdwg.mxu0
      %2180 = vmatpush.bf16.msra.mxu0 0
      %2181 = vmatpush.bf16.msra.mxu0 0
      %2182 = vmatpush.bf16.msra.mxu0 0
      %2183 = vmatpush.bf16.msra.mxu0 0
      %2184 = vmatpush.bf16.msra.mxu0 0
      %2185 = vmatpush.bf16.msra.mxu0 0
      %2186 = vmatpush.bf16.msra.mxu0 %v2017
      %2187 = vmatpush.bf16.msra.mxu0 %v2001
      %2188 = vmatmul.bf16.gmra.mxu0 %v2061
      %v2189 = vpop.f32.mrf.mxu0
      %v2190 = vadd.f32 %v2037, %v2189
      %v2191 = vpop.f32.mrf.mxu0
      %2192 = vdwg.mxu0
      %2193 = vmatpush.bf16.msra.mxu0 0
      %2194 = vmatpush.bf16.msra.mxu0 0
      %2195 = vmatpush.bf16.msra.mxu0 0
      %2196 = vmatpush.bf16.msra.mxu0 0
      %2197 = vmatpush.bf16.msra.mxu0 0
      %2198 = vmatpush.bf16.msra.mxu0 0
      %2199 = vmatpush.bf16.msra.mxu0 %v2018
      %2200 = vmatpush.bf16.msra.mxu0 %v2002
      %2201 = vmatmul.bf16.gmra.mxu0 %v2061
      %v2202 = vpop.f32.mrf.mxu0
      %v2203 = vadd.f32 %v2038, %v2202
      %v2204 = vpop.f32.mrf.mxu0
      %2205 = vdwg.mxu0
      %2206 = vmatpush.bf16.msra.mxu0 0
      %2207 = vmatpush.bf16.msra.mxu0 0
      %2208 = vmatpush.bf16.msra.mxu0 0
      %2209 = vmatpush.bf16.msra.mxu0 0
      %2210 = vmatpush.bf16.msra.mxu0 0
      %2211 = vmatpush.bf16.msra.mxu0 0
      %2212 = vmatpush.bf16.msra.mxu0 %v2019
      %2213 = vmatpush.bf16.msra.mxu0 %v2003
      %2214 = vmatmul.bf16.gmra.mxu0 %v2061
      %v2215 = vpop.f32.mrf.mxu0
      %v2216 = vadd.f32 %v2039, %v2215
      %v2217 = vpop.f32.mrf.mxu0
      %2218 = vdwg.mxu0
      %2219 = vmatpush.bf16.msra.mxu0 0
      %2220 = vmatpush.bf16.msra.mxu0 0
      %2221 = vmatpush.bf16.msra.mxu0 0
      %2222 = vmatpush.bf16.msra.mxu0 0
      %2223 = vmatpush.bf16.msra.mxu0 0
      %2224 = vmatpush.bf16.msra.mxu0 0
      %2225 = vmatpush.bf16.msra.mxu0 %v2020
      %2226 = vmatpush.bf16.msra.mxu0 %v2004
      %2227 = vmatmul.bf16.gmra.mxu0 %v2061
      %v2228 = vpop.f32.mrf.mxu0
      %v2229 = vadd.f32 %v2040, %v2228
      %v2230 = vpop.f32.mrf.mxu0
      %2231 = vdwg.mxu0
      %2232 = vmatpush.bf16.msra.mxu0 0
      %2233 = vmatpush.bf16.msra.mxu0 0
      %2234 = vmatpush.bf16.msra.mxu0 0
      %2235 = vmatpush.bf16.msra.mxu0 0
      %2236 = vmatpush.bf16.msra.mxu0 0
      %2237 = vmatpush.bf16.msra.mxu0 0
      %2238 = vmatpush.bf16.msra.mxu0 %v2021
      %2239 = vmatpush.bf16.msra.mxu0 %v2005
      %2240 = vmatmul.bf16.gmra.mxu0 %v2061
      %v2241 = vpop.f32.mrf.mxu0
      %v2242 = vadd.f32 %v2041, %v2241
      %v2243 = vpop.f32.mrf.mxu0
      %2244 = vdwg.mxu0
      %2245 = vmatpush.bf16.msra.mxu0 0
      %2246 = vmatpush.bf16.msra.mxu0 0
      %2247 = vmatpush.bf16.msra.mxu0 0
      %2248 = vmatpush.bf16.msra.mxu0 0
      %2249 = vmatpush.bf16.msra.mxu0 0
      %2250 = vmatpush.bf16.msra.mxu0 0
      %2251 = vmatpush.bf16.msra.mxu0 %v2022
      %2252 = vmatpush.bf16.msra.mxu0 %v2006
      %2253 = vmatmul.bf16.gmra.mxu0 %v2061
      %v2254 = vpop.f32.mrf.mxu0
      %v2255 = vadd.f32 %v2042, %v2254
      %v2256 = vpop.f32.mrf.mxu0
      %2257 = vdwg.mxu0
      %2258 = vmatpush.bf16.msra.mxu0 0
      %2259 = vmatpush.bf16.msra.mxu0 0
      %2260 = vmatpush.bf16.msra.mxu0 0
      %2261 = vmatpush.bf16.msra.mxu0 0
      %2262 = vmatpush.bf16.msra.mxu0 0
      %2263 = vmatpush.bf16.msra.mxu0 0
      %2264 = vmatpush.bf16.msra.mxu0 %v2023
      %2265 = vmatpush.bf16.msra.mxu0 %v2007
      %2266 = vmatmul.bf16.gmra.mxu0 %v2061
      %v2267 = vpop.f32.mrf.mxu0
      %v2268 = vadd.f32 %v2043, %v2267
      %v2269 = vpop.f32.mrf.mxu0
      %2270 = vdwg.mxu0
      %v2271 = vmax.f32 %v2073, 0.0
      %v2272 = vmax.f32 %v2086, 0.0
      %v2273 = vmax.f32 %v2099, 0.0
      %v2274 = vmax.f32 %v2112, 0.0
      %v2275 = vmax.f32 %v2125, 0.0
      %v2276 = vmax.f32 %v2138, 0.0
      %v2277 = vmax.f32 %v2151, 0.0
      %v2278 = vmax.f32 %v2164, 0.0
      %v2279 = vmax.f32 %v2177, 0.0
      %v2280 = vmax.f32 %v2190, 0.0
      %v2281 = vmax.f32 %v2203, 0.0
      %v2282 = vmax.f32 %v2216, 0.0
      %v2283 = vmax.f32 %v2229, 0.0
      %v2284 = vmax.f32 %v2242, 0.0
      %v2285 = vmax.f32 %v2255, 0.0
      %v2286 = vmax.f32 %v2268, 0.0
      %v2287 = vld [vmem:[%s734] sm:$0xff]
      %v2288 = vld [vmem:[%s734 + $0x8] sm:$0xff]
      %v2289 = vld [vmem:[%s734 + $0x10] sm:$0xff]
      %v2290 = vld [vmem:[%s734 + $0x18] sm:$0xff]
      %v2291 = vld [vmem:[%s734 + $0x20] sm:$0xff]
      %v2292 = vld [vmem:[%s734 + $0x28] sm:$0xff]
      %v2293 = vld [vmem:[%s734 + $0x30] sm:$0xff]
      %v2294 = vld [vmem:[%s734 + $0x38] sm:$0xff]
      %v2295 = vld [vmem:[%s734 + $0x40] sm:$0xff]
      %v2296 = vld [vmem:[%s734 + $0x48] sm:$0xff]
      %v2297 = vld [vmem:[%s734 + $0x50] sm:$0xff]
      %v2298 = vld [vmem:[%s734 + $0x58] sm:$0xff]
      %v2299 = vld [vmem:[%s734 + $0x60] sm:$0xff]
      %v2300 = vld [vmem:[%s734 + $0x68] sm:$0xff]
      %v2301 = vld [vmem:[%s734 + $0x70] sm:$0xff]
      %v2302 = vld [vmem:[%s734 + $0x78] sm:$0xff]
      %v2303 = vld [vmem:[%s734 + $0x80] sm:$0xff]
      %v2304 = vld [vmem:[%s734 + $0x88] sm:$0xff]
      %v2305 = vld [vmem:[%s734 + $0x90] sm:$0xff]
      %v2306 = vld [vmem:[%s734 + $0x98] sm:$0xff]
      %v2307 = vld [vmem:[%s734 + $0xa0] sm:$0xff]
      %v2308 = vld [vmem:[%s734 + $0xa8] sm:$0xff]
      %v2309 = vld [vmem:[%s734 + $0xb0] sm:$0xff]
      %v2310 = vld [vmem:[%s734 + $0xb8] sm:$0xff]
      %v2311 = vld [vmem:[%s734 + $0xc0] sm:$0xff]
      %v2312 = vld [vmem:[%s734 + $0xc8] sm:$0xff]
      %v2313 = vld [vmem:[%s734 + $0xd0] sm:$0xff]
      %v2314 = vld [vmem:[%s734 + $0xd8] sm:$0xff]
      %v2315 = vld [vmem:[%s734 + $0xe0] sm:$0xff]
      %v2316 = vld [vmem:[%s734 + $0xe8] sm:$0xff]
      %v2317 = vld [vmem:[%s734 + $0xf0] sm:$0xff]
      %v2318 = vld [vmem:[%s734 + $0xf8] sm:$0xff]
      %v2319 = vld [vmem:[%s734 + $0x100] sm:$0xff]
      %v2320 = vld [vmem:[%s734 + $0x108] sm:$0xff]
      %v2321 = vld [vmem:[%s734 + $0x110] sm:$0xff]
      %v2322 = vld [vmem:[%s734 + $0x118] sm:$0xff]
      %v2323 = vld [vmem:[%s734 + $0x120] sm:$0xff]
      %v2324 = vld [vmem:[%s734 + $0x128] sm:$0xff]
      %v2325 = vld [vmem:[%s734 + $0x130] sm:$0xff]
      %v2326 = vld [vmem:[%s734 + $0x138] sm:$0xff]
      %v2327 = vld [vmem:[%s734 + $0x140] sm:$0xff]
      %v2328 = vld [vmem:[%s734 + $0x148] sm:$0xff]
      %v2329 = vld [vmem:[%s734 + $0x150] sm:$0xff]
      %v2330 = vld [vmem:[%s734 + $0x158] sm:$0xff]
      %v2331 = vld [vmem:[%s734 + $0x160] sm:$0xff]
      %v2332 = vld [vmem:[%s734 + $0x168] sm:$0xff]
      %v2333 = vld [vmem:[%s734 + $0x170] sm:$0xff]
      %v2334 = vld [vmem:[%s734 + $0x178] sm:$0xff]
      %v2335 = vld [vmem:[%s734 + $0x180] sm:$0xff]
      %v2336 = vld [vmem:[%s734 + $0x188] sm:$0xff]
      %v2337 = vld [vmem:[%s734 + $0x190] sm:$0xff]
      %v2338 = vld [vmem:[%s734 + $0x198] sm:$0xff]
      %v2339 = vld [vmem:[%s734 + $0x1a0] sm:$0xff]
      %v2340 = vld [vmem:[%s734 + $0x1a8] sm:$0xff]
      %v2341 = vld [vmem:[%s734 + $0x1b0] sm:$0xff]
      %v2342 = vld [vmem:[%s734 + $0x1b8] sm:$0xff]
      %v2343 = vld [vmem:[%s734 + $0x1c0] sm:$0xff]
      %v2344 = vld [vmem:[%s734 + $0x1c8] sm:$0xff]
      %v2345 = vld [vmem:[%s734 + $0x1d0] sm:$0xff]
      %v2346 = vld [vmem:[%s734 + $0x1d8] sm:$0xff]
      %v2347 = vld [vmem:[%s734 + $0x1e0] sm:$0xff]
      %v2348 = vld [vmem:[%s734 + $0x1e8] sm:$0xff]
      %v2349 = vld [vmem:[%s734 + $0x1f0] sm:$0xff]
      %v2350 = vld [vmem:[%s734 + $0x1f8] sm:$0xff]
      %v2351 = vld [vmem:[%s734 + $0x200] sm:$0xff]
      %v2352 = vld [vmem:[%s734 + $0x208] sm:$0xff]
      %v2353 = vld [vmem:[%s734 + $0x210] sm:$0xff]
      %v2354 = vld [vmem:[%s734 + $0x218] sm:$0xff]
      %v2355 = vld [vmem:[%s734 + $0x220] sm:$0xff]
      %v2356 = vld [vmem:[%s734 + $0x228] sm:$0xff]
      %v2357 = vld [vmem:[%s734 + $0x230] sm:$0xff]
      %v2358 = vld [vmem:[%s734 + $0x238] sm:$0xff]
      %v2359 = vld [vmem:[%s734 + $0x240] sm:$0xff]
      %v2360 = vld [vmem:[%s734 + $0x248] sm:$0xff]
      %v2361 = vld [vmem:[%s734 + $0x250] sm:$0xff]
      %v2362 = vld [vmem:[%s734 + $0x258] sm:$0xff]
      %v2363 = vld [vmem:[%s734 + $0x260] sm:$0xff]
      %v2364 = vld [vmem:[%s734 + $0x268] sm:$0xff]
      %v2365 = vld [vmem:[%s734 + $0x270] sm:$0xff]
      %v2366 = vld [vmem:[%s734 + $0x278] sm:$0xff]
      %v2367 = vld [vmem:[%s734 + $0x280] sm:$0xff]
      %v2368 = vld [vmem:[%s734 + $0x288] sm:$0xff]
      %v2369 = vld [vmem:[%s734 + $0x290] sm:$0xff]
      %v2370 = vld [vmem:[%s734 + $0x298] sm:$0xff]
      %v2371 = vld [vmem:[%s734 + $0x2a0] sm:$0xff]
      %v2372 = vld [vmem:[%s734 + $0x2a8] sm:$0xff]
      %v2373 = vld [vmem:[%s734 + $0x2b0] sm:$0xff]
      %v2374 = vld [vmem:[%s734 + $0x2b8] sm:$0xff]
      %v2375 = vld [vmem:[%s734 + $0x2c0] sm:$0xff]
      %v2376 = vld [vmem:[%s734 + $0x2c8] sm:$0xff]
      %v2377 = vld [vmem:[%s734 + $0x2d0] sm:$0xff]
      %v2378 = vld [vmem:[%s734 + $0x2d8] sm:$0xff]
      %v2379 = vld [vmem:[%s734 + $0x2e0] sm:$0xff]
      %v2380 = vld [vmem:[%s734 + $0x2e8] sm:$0xff]
      %v2381 = vld [vmem:[%s734 + $0x2f0] sm:$0xff]
      %v2382 = vld [vmem:[%s734 + $0x2f8] sm:$0xff]
      %v2383 = vld [vmem:[%s734 + $0x300] sm:$0xff]
      %v2384 = vld [vmem:[%s734 + $0x308] sm:$0xff]
      %v2385 = vld [vmem:[%s734 + $0x310] sm:$0xff]
      %v2386 = vld [vmem:[%s734 + $0x318] sm:$0xff]
      %v2387 = vld [vmem:[%s734 + $0x320] sm:$0xff]
      %v2388 = vld [vmem:[%s734 + $0x328] sm:$0xff]
      %v2389 = vld [vmem:[%s734 + $0x330] sm:$0xff]
      %v2390 = vld [vmem:[%s734 + $0x338] sm:$0xff]
      %v2391 = vld [vmem:[%s734 + $0x340] sm:$0xff]
      %v2392 = vld [vmem:[%s734 + $0x348] sm:$0xff]
      %v2393 = vld [vmem:[%s734 + $0x350] sm:$0xff]
      %v2394 = vld [vmem:[%s734 + $0x358] sm:$0xff]
      %v2395 = vld [vmem:[%s734 + $0x360] sm:$0xff]
      %v2396 = vld [vmem:[%s734 + $0x368] sm:$0xff]
      %v2397 = vld [vmem:[%s734 + $0x370] sm:$0xff]
      %v2398 = vld [vmem:[%s734 + $0x378] sm:$0xff]
      %v2399 = vld [vmem:[%s734 + $0x380] sm:$0xff]
      %v2400 = vld [vmem:[%s734 + $0x388] sm:$0xff]
      %v2401 = vld [vmem:[%s734 + $0x390] sm:$0xff]
      %v2402 = vld [vmem:[%s734 + $0x398] sm:$0xff]
      %v2403 = vld [vmem:[%s734 + $0x3a0] sm:$0xff]
      %v2404 = vld [vmem:[%s734 + $0x3a8] sm:$0xff]
      %v2405 = vld [vmem:[%s734 + $0x3b0] sm:$0xff]
      %v2406 = vld [vmem:[%s734 + $0x3b8] sm:$0xff]
      %v2407 = vld [vmem:[%s734 + $0x3c0] sm:$0xff]
      %v2408 = vld [vmem:[%s734 + $0x3c8] sm:$0xff]
      %v2409 = vld [vmem:[%s734 + $0x3d0] sm:$0xff]
      %v2410 = vld [vmem:[%s734 + $0x3d8] sm:$0xff]
      %v2411 = vld [vmem:[%s734 + $0x3e0] sm:$0xff]
      %v2412 = vld [vmem:[%s734 + $0x3e8] sm:$0xff]
      %v2413 = vld [vmem:[%s734 + $0x3f0] sm:$0xff]
      %v2414 = vld [vmem:[%s734 + $0x3f8] sm:$0xff]
      %v2415 = vld [vmem:[%s734 + $0x400] sm:$0xff]
      %v2416 = vld [vmem:[%s734 + $0x408] sm:$0xff]
      %v2417 = vld [vmem:[%s734 + $0x410] sm:$0xff]
      %v2418 = vld [vmem:[%s734 + $0x418] sm:$0xff]
      %v2419 = vld [vmem:[%s734 + $0x420] sm:$0xff]
      %v2420 = vld [vmem:[%s734 + $0x428] sm:$0xff]
      %v2421 = vld [vmem:[%s734 + $0x430] sm:$0xff]
      %v2422 = vld [vmem:[%s734 + $0x438] sm:$0xff]
      %v2423 = vld [vmem:[%s734 + $0x440] sm:$0xff]
      %v2424 = vld [vmem:[%s734 + $0x448] sm:$0xff]
      %v2425 = vld [vmem:[%s734 + $0x450] sm:$0xff]
      %v2426 = vld [vmem:[%s734 + $0x458] sm:$0xff]
      %v2427 = vld [vmem:[%s734 + $0x460] sm:$0xff]
      %v2428 = vld [vmem:[%s734 + $0x468] sm:$0xff]
      %v2429 = vld [vmem:[%s734 + $0x470] sm:$0xff]
      %v2430 = vld [vmem:[%s734 + $0x478] sm:$0xff]
      %v2431 = vld [vmem:[%s734 + $0x480] sm:$0xff]
      %v2432 = vld [vmem:[%s734 + $0x488] sm:$0xff]
      %v2433 = vld [vmem:[%s734 + $0x490] sm:$0xff]
      %v2434 = vld [vmem:[%s734 + $0x498] sm:$0xff]
      %v2435 = vld [vmem:[%s734 + $0x4a0] sm:$0xff]
      %v2436 = vld [vmem:[%s734 + $0x4a8] sm:$0xff]
      %v2437 = vld [vmem:[%s734 + $0x4b0] sm:$0xff]
      %v2438 = vld [vmem:[%s734 + $0x4b8] sm:$0xff]
      %v2439 = vld [vmem:[%s734 + $0x4c0] sm:$0xff]
      %v2440 = vld [vmem:[%s734 + $0x4c8] sm:$0xff]
      %v2441 = vld [vmem:[%s734 + $0x4d0] sm:$0xff]
      %v2442 = vld [vmem:[%s734 + $0x4d8] sm:$0xff]
      %v2443 = vld [vmem:[%s734 + $0x4e0] sm:$0xff]
      %v2444 = vld [vmem:[%s734 + $0x4e8] sm:$0xff]
      %v2445 = vld [vmem:[%s734 + $0x4f0] sm:$0xff]
      %v2446 = vld [vmem:[%s734 + $0x4f8] sm:$0xff]
      %v2447 = vld [vmem:[%s734 + $0x500] sm:$0xff]
      %v2448 = vld [vmem:[%s734 + $0x508] sm:$0xff]
      %v2449 = vld [vmem:[%s734 + $0x510] sm:$0xff]
      %v2450 = vld [vmem:[%s734 + $0x518] sm:$0xff]
      %v2451 = vld [vmem:[%s734 + $0x520] sm:$0xff]
      %v2452 = vld [vmem:[%s734 + $0x528] sm:$0xff]
      %v2453 = vld [vmem:[%s734 + $0x530] sm:$0xff]
      %v2454 = vld [vmem:[%s734 + $0x538] sm:$0xff]
      %v2455 = vld [vmem:[%s734 + $0x540] sm:$0xff]
      %v2456 = vld [vmem:[%s734 + $0x548] sm:$0xff]
      %v2457 = vld [vmem:[%s734 + $0x550] sm:$0xff]
      %v2458 = vld [vmem:[%s734 + $0x558] sm:$0xff]
      %v2459 = vld [vmem:[%s734 + $0x560] sm:$0xff]
      %v2460 = vld [vmem:[%s734 + $0x568] sm:$0xff]
      %v2461 = vld [vmem:[%s734 + $0x570] sm:$0xff]
      %v2462 = vld [vmem:[%s734 + $0x578] sm:$0xff]
      %v2463 = vld [vmem:[%s734 + $0x580] sm:$0xff]
      %v2464 = vld [vmem:[%s734 + $0x588] sm:$0xff]
      %v2465 = vld [vmem:[%s734 + $0x590] sm:$0xff]
      %v2466 = vld [vmem:[%s734 + $0x598] sm:$0xff]
      %v2467 = vld [vmem:[%s734 + $0x5a0] sm:$0xff]
      %v2468 = vld [vmem:[%s734 + $0x5a8] sm:$0xff]
      %v2469 = vld [vmem:[%s734 + $0x5b0] sm:$0xff]
      %v2470 = vld [vmem:[%s734 + $0x5b8] sm:$0xff]
      %v2471 = vld [vmem:[%s734 + $0x5c0] sm:$0xff]
      %v2472 = vld [vmem:[%s734 + $0x5c8] sm:$0xff]
      %v2473 = vld [vmem:[%s734 + $0x5d0] sm:$0xff]
      %v2474 = vld [vmem:[%s734 + $0x5d8] sm:$0xff]
      %v2475 = vld [vmem:[%s734 + $0x5e0] sm:$0xff]
      %v2476 = vld [vmem:[%s734 + $0x5e8] sm:$0xff]
      %v2477 = vld [vmem:[%s734 + $0x5f0] sm:$0xff]
      %v2478 = vld [vmem:[%s734 + $0x5f8] sm:$0xff]
      %v2479 = vld [vmem:[%s734 + $0x600] sm:$0xff]
      %v2480 = vld [vmem:[%s734 + $0x608] sm:$0xff]
      %v2481 = vld [vmem:[%s734 + $0x610] sm:$0xff]
      %v2482 = vld [vmem:[%s734 + $0x618] sm:$0xff]
      %v2483 = vld [vmem:[%s734 + $0x620] sm:$0xff]
      %v2484 = vld [vmem:[%s734 + $0x628] sm:$0xff]
      %v2485 = vld [vmem:[%s734 + $0x630] sm:$0xff]
      %v2486 = vld [vmem:[%s734 + $0x638] sm:$0xff]
      %v2487 = vld [vmem:[%s734 + $0x640] sm:$0xff]
      %v2488 = vld [vmem:[%s734 + $0x648] sm:$0xff]
      %v2489 = vld [vmem:[%s734 + $0x650] sm:$0xff]
      %v2490 = vld [vmem:[%s734 + $0x658] sm:$0xff]
      %v2491 = vld [vmem:[%s734 + $0x660] sm:$0xff]
      %v2492 = vld [vmem:[%s734 + $0x668] sm:$0xff]
      %v2493 = vld [vmem:[%s734 + $0x670] sm:$0xff]
      %v2494 = vld [vmem:[%s734 + $0x678] sm:$0xff]
      %v2495 = vld [vmem:[%s734 + $0x680] sm:$0xff]
      %v2496 = vld [vmem:[%s734 + $0x688] sm:$0xff]
      %v2497 = vld [vmem:[%s734 + $0x690] sm:$0xff]
      %v2498 = vld [vmem:[%s734 + $0x698] sm:$0xff]
      %v2499 = vld [vmem:[%s734 + $0x6a0] sm:$0xff]
      %v2500 = vld [vmem:[%s734 + $0x6a8] sm:$0xff]
      %v2501 = vld [vmem:[%s734 + $0x6b0] sm:$0xff]
      %v2502 = vld [vmem:[%s734 + $0x6b8] sm:$0xff]
      %v2503 = vld [vmem:[%s734 + $0x6c0] sm:$0xff]
      %v2504 = vld [vmem:[%s734 + $0x6c8] sm:$0xff]
      %v2505 = vld [vmem:[%s734 + $0x6d0] sm:$0xff]
      %v2506 = vld [vmem:[%s734 + $0x6d8] sm:$0xff]
      %v2507 = vld [vmem:[%s734 + $0x6e0] sm:$0xff]
      %v2508 = vld [vmem:[%s734 + $0x6e8] sm:$0xff]
      %v2509 = vld [vmem:[%s734 + $0x6f0] sm:$0xff]
      %v2510 = vld [vmem:[%s734 + $0x6f8] sm:$0xff]
      %v2511 = vld [vmem:[%s734 + $0x700] sm:$0xff]
      %v2512 = vld [vmem:[%s734 + $0x708] sm:$0xff]
      %v2513 = vld [vmem:[%s734 + $0x710] sm:$0xff]
      %v2514 = vld [vmem:[%s734 + $0x718] sm:$0xff]
      %v2515 = vld [vmem:[%s734 + $0x720] sm:$0xff]
      %v2516 = vld [vmem:[%s734 + $0x728] sm:$0xff]
      %v2517 = vld [vmem:[%s734 + $0x730] sm:$0xff]
      %v2518 = vld [vmem:[%s734 + $0x738] sm:$0xff]
      %v2519 = vld [vmem:[%s734 + $0x740] sm:$0xff]
      %v2520 = vld [vmem:[%s734 + $0x748] sm:$0xff]
      %v2521 = vld [vmem:[%s734 + $0x750] sm:$0xff]
      %v2522 = vld [vmem:[%s734 + $0x758] sm:$0xff]
      %v2523 = vld [vmem:[%s734 + $0x760] sm:$0xff]
      %v2524 = vld [vmem:[%s734 + $0x768] sm:$0xff]
      %v2525 = vld [vmem:[%s734 + $0x770] sm:$0xff]
      %v2526 = vld [vmem:[%s734 + $0x778] sm:$0xff]
      %v2527 = vld [vmem:[%s734 + $0x780] sm:$0xff]
      %v2528 = vld [vmem:[%s734 + $0x788] sm:$0xff]
      %v2529 = vld [vmem:[%s734 + $0x790] sm:$0xff]
      %v2530 = vld [vmem:[%s734 + $0x798] sm:$0xff]
      %v2531 = vld [vmem:[%s734 + $0x7a0] sm:$0xff]
      %v2532 = vld [vmem:[%s734 + $0x7a8] sm:$0xff]
      %v2533 = vld [vmem:[%s734 + $0x7b0] sm:$0xff]
      %v2534 = vld [vmem:[%s734 + $0x7b8] sm:$0xff]
      %v2535 = vld [vmem:[%s734 + $0x7c0] sm:$0xff]
      %v2536 = vld [vmem:[%s734 + $0x7c8] sm:$0xff]
      %v2537 = vld [vmem:[%s734 + $0x7d0] sm:$0xff]
      %v2538 = vld [vmem:[%s734 + $0x7d8] sm:$0xff]
      %v2539 = vld [vmem:[%s734 + $0x7e0] sm:$0xff]
      %v2540 = vld [vmem:[%s734 + $0x7e8] sm:$0xff]
      %v2541 = vld [vmem:[%s734 + $0x7f0] sm:$0xff]
      %v2542 = vld [vmem:[%s734 + $0x7f8] sm:$0xff]
      %v2543 = vpack.c.bf16 %v2271, %v2271
      %v2544 = vpack.c.bf16 %v2272, %v2272
      %v2545 = vpack.c.bf16 %v2273, %v2273
      %v2546 = vpack.c.bf16 %v2274, %v2274
      %v2547 = vpack.c.bf16 %v2275, %v2275
      %v2548 = vpack.c.bf16 %v2276, %v2276
      %v2549 = vpack.c.bf16 %v2277, %v2277
      %v2550 = vpack.c.bf16 %v2278, %v2278
      %v2551 = vpack.c.bf16 %v2279, %v2279
      %v2552 = vpack.c.bf16 %v2280, %v2280
      %v2553 = vpack.c.bf16 %v2281, %v2281
      %v2554 = vpack.c.bf16 %v2282, %v2282
      %v2555 = vpack.c.bf16 %v2283, %v2283
      %v2556 = vpack.c.bf16 %v2284, %v2284
      %v2557 = vpack.c.bf16 %v2285, %v2285
      %v2558 = vpack.c.bf16 %v2286, %v2286
      %v2559 = vpack.c.bf16 %v2288, %v2287
      %v2560 = vpack.c.bf16 %v2290, %v2289
      %v2561 = vpack.c.bf16 %v2292, %v2291
      %v2562 = vpack.c.bf16 %v2294, %v2293
      %v2563 = vpack.c.bf16 %v2296, %v2295
      %v2564 = vpack.c.bf16 %v2298, %v2297
      %v2565 = vpack.c.bf16 %v2300, %v2299
      %v2566 = vpack.c.bf16 %v2302, %v2301
      %v2567 = vpack.c.bf16 %v2304, %v2303
      %v2568 = vpack.c.bf16 %v2306, %v2305
      %v2569 = vpack.c.bf16 %v2308, %v2307
      %v2570 = vpack.c.bf16 %v2310, %v2309
      %v2571 = vpack.c.bf16 %v2312, %v2311
      %v2572 = vpack.c.bf16 %v2314, %v2313
      %v2573 = vpack.c.bf16 %v2316, %v2315
      %v2574 = vpack.c.bf16 %v2318, %v2317
      %v2575 = vpack.c.bf16 %v2320, %v2319
      %v2576 = vpack.c.bf16 %v2322, %v2321
      %v2577 = vpack.c.bf16 %v2324, %v2323
      %v2578 = vpack.c.bf16 %v2326, %v2325
      %v2579 = vpack.c.bf16 %v2328, %v2327
      %v2580 = vpack.c.bf16 %v2330, %v2329
      %v2581 = vpack.c.bf16 %v2332, %v2331
      %v2582 = vpack.c.bf16 %v2334, %v2333
      %v2583 = vpack.c.bf16 %v2336, %v2335
      %v2584 = vpack.c.bf16 %v2338, %v2337
      %v2585 = vpack.c.bf16 %v2340, %v2339
      %v2586 = vpack.c.bf16 %v2342, %v2341
      %v2587 = vpack.c.bf16 %v2344, %v2343
      %v2588 = vpack.c.bf16 %v2346, %v2345
      %v2589 = vpack.c.bf16 %v2348, %v2347
      %v2590 = vpack.c.bf16 %v2350, %v2349
      %v2591 = vpack.c.bf16 %v2352, %v2351
      %v2592 = vpack.c.bf16 %v2354, %v2353
      %v2593 = vpack.c.bf16 %v2356, %v2355
      %v2594 = vpack.c.bf16 %v2358, %v2357
      %v2595 = vpack.c.bf16 %v2360, %v2359
      %v2596 = vpack.c.bf16 %v2362, %v2361
      %v2597 = vpack.c.bf16 %v2364, %v2363
      %v2598 = vpack.c.bf16 %v2366, %v2365
      %v2599 = vpack.c.bf16 %v2368, %v2367
      %v2600 = vpack.c.bf16 %v2370, %v2369
      %v2601 = vpack.c.bf16 %v2372, %v2371
      %v2602 = vpack.c.bf16 %v2374, %v2373
      %v2603 = vpack.c.bf16 %v2376, %v2375
      %v2604 = vpack.c.bf16 %v2378, %v2377
      %v2605 = vpack.c.bf16 %v2380, %v2379
      %v2606 = vpack.c.bf16 %v2382, %v2381
      %v2607 = vpack.c.bf16 %v2384, %v2383
      %v2608 = vpack.c.bf16 %v2386, %v2385
      %v2609 = vpack.c.bf16 %v2388, %v2387
      %v2610 = vpack.c.bf16 %v2390, %v2389
      %v2611 = vpack.c.bf16 %v2392, %v2391
      %v2612 = vpack.c.bf16 %v2394, %v2393
      %v2613 = vpack.c.bf16 %v2396, %v2395
      %v2614 = vpack.c.bf16 %v2398, %v2397
      %v2615 = vpack.c.bf16 %v2400, %v2399
      %v2616 = vpack.c.bf16 %v2402, %v2401
      %v2617 = vpack.c.bf16 %v2404, %v2403
      %v2618 = vpack.c.bf16 %v2406, %v2405
      %v2619 = vpack.c.bf16 %v2408, %v2407
      %v2620 = vpack.c.bf16 %v2410, %v2409
      %v2621 = vpack.c.bf16 %v2412, %v2411
      %v2622 = vpack.c.bf16 %v2414, %v2413
      %v2623 = vpack.c.bf16 %v2416, %v2415
      %v2624 = vpack.c.bf16 %v2418, %v2417
      %v2625 = vpack.c.bf16 %v2420, %v2419
      %v2626 = vpack.c.bf16 %v2422, %v2421
      %v2627 = vpack.c.bf16 %v2424, %v2423
      %v2628 = vpack.c.bf16 %v2426, %v2425
      %v2629 = vpack.c.bf16 %v2428, %v2427
      %v2630 = vpack.c.bf16 %v2430, %v2429
      %v2631 = vpack.c.bf16 %v2432, %v2431
      %v2632 = vpack.c.bf16 %v2434, %v2433
      %v2633 = vpack.c.bf16 %v2436, %v2435
      %v2634 = vpack.c.bf16 %v2438, %v2437
      %v2635 = vpack.c.bf16 %v2440, %v2439
      %v2636 = vpack.c.bf16 %v2442, %v2441
      %v2637 = vpack.c.bf16 %v2444, %v2443
      %v2638 = vpack.c.bf16 %v2446, %v2445
      %v2639 = vpack.c.bf16 %v2448, %v2447
      %v2640 = vpack.c.bf16 %v2450, %v2449
      %v2641 = vpack.c.bf16 %v2452, %v2451
      %v2642 = vpack.c.bf16 %v2454, %v2453
      %v2643 = vpack.c.bf16 %v2456, %v2455
      %v2644 = vpack.c.bf16 %v2458, %v2457
      %v2645 = vpack.c.bf16 %v2460, %v2459
      %v2646 = vpack.c.bf16 %v2462, %v2461
      %v2647 = vpack.c.bf16 %v2464, %v2463
      %v2648 = vpack.c.bf16 %v2466, %v2465
      %v2649 = vpack.c.bf16 %v2468, %v2467
      %v2650 = vpack.c.bf16 %v2470, %v2469
      %v2651 = vpack.c.bf16 %v2472, %v2471
      %v2652 = vpack.c.bf16 %v2474, %v2473
      %v2653 = vpack.c.bf16 %v2476, %v2475
      %v2654 = vpack.c.bf16 %v2478, %v2477
      %v2655 = vpack.c.bf16 %v2480, %v2479
      %v2656 = vpack.c.bf16 %v2482, %v2481
      %v2657 = vpack.c.bf16 %v2484, %v2483
      %v2658 = vpack.c.bf16 %v2486, %v2485
      %v2659 = vpack.c.bf16 %v2488, %v2487
      %v2660 = vpack.c.bf16 %v2490, %v2489
      %v2661 = vpack.c.bf16 %v2492, %v2491
      %v2662 = vpack.c.bf16 %v2494, %v2493
      %v2663 = vpack.c.bf16 %v2496, %v2495
      %v2664 = vpack.c.bf16 %v2498, %v2497
      %v2665 = vpack.c.bf16 %v2500, %v2499
      %v2666 = vpack.c.bf16 %v2502, %v2501
      %v2667 = vpack.c.bf16 %v2504, %v2503
      %v2668 = vpack.c.bf16 %v2506, %v2505
      %v2669 = vpack.c.bf16 %v2508, %v2507
      %v2670 = vpack.c.bf16 %v2510, %v2509
      %v2671 = vpack.c.bf16 %v2512, %v2511
      %v2672 = vpack.c.bf16 %v2514, %v2513
      %v2673 = vpack.c.bf16 %v2516, %v2515
      %v2674 = vpack.c.bf16 %v2518, %v2517
      %v2675 = vpack.c.bf16 %v2520, %v2519
      %v2676 = vpack.c.bf16 %v2522, %v2521
      %v2677 = vpack.c.bf16 %v2524, %v2523
      %v2678 = vpack.c.bf16 %v2526, %v2525
      %v2679 = vpack.c.bf16 %v2528, %v2527
      %v2680 = vpack.c.bf16 %v2530, %v2529
      %v2681 = vpack.c.bf16 %v2532, %v2531
      %v2682 = vpack.c.bf16 %v2534, %v2533
      %v2683 = vpack.c.bf16 %v2536, %v2535
      %v2684 = vpack.c.bf16 %v2538, %v2537
      %v2685 = vpack.c.bf16 %v2540, %v2539
      %v2686 = vpack.c.bf16 %v2542, %v2541
      %v2687 = vld [vmem:[%s737] sm:$0x1]
      %v2689 = vperm.slane %v2687, 0
      %2691 = vmatpush.bf16.msra.mxu0 %v2566
      %2692 = vmatpush.bf16.msra.mxu0 %v2565
      %2693 = vmatpush.bf16.msra.mxu0 %v2564
      %2694 = vmatpush.bf16.msra.mxu0 %v2563
      %2695 = vmatpush.bf16.msra.mxu0 %v2562
      %2696 = vmatpush.bf16.msra.mxu0 %v2561
      %2697 = vmatpush.bf16.msra.mxu0 %v2560
      %2698 = vmatpush.bf16.msra.mxu0 %v2559
      %2699 = vmatmul.bf16.gmra.mxu0 %v2543
      %v2700 = vpop.f32.mrf.mxu0
      %v2701 = vadd.f32 %v2689, %v2700
      %v2702 = vpop.f32.mrf.mxu0
      %2703 = vdwg.mxu0
      %2704 = vmatpush.bf16.msra.mxu0 %v2574
      %2705 = vmatpush.bf16.msra.mxu0 %v2573
      %2706 = vmatpush.bf16.msra.mxu0 %v2572
      %2707 = vmatpush.bf16.msra.mxu0 %v2571
      %2708 = vmatpush.bf16.msra.mxu0 %v2570
      %2709 = vmatpush.bf16.msra.mxu0 %v2569
      %2710 = vmatpush.bf16.msra.mxu0 %v2568
      %2711 = vmatpush.bf16.msra.mxu0 %v2567
      %2712 = vmatmul.bf16.gmra.mxu0 %v2544
      %v2713 = vpop.f32.mrf.mxu0
      %v2714 = vadd.f32 %v2701, %v2713
      %v2715 = vpop.f32.mrf.mxu0
      %2716 = vdwg.mxu0
      %2717 = vmatpush.bf16.msra.mxu0 %v2582
      %2718 = vmatpush.bf16.msra.mxu0 %v2581
      %2719 = vmatpush.bf16.msra.mxu0 %v2580
      %2720 = vmatpush.bf16.msra.mxu0 %v2579
      %2721 = vmatpush.bf16.msra.mxu0 %v2578
      %2722 = vmatpush.bf16.msra.mxu0 %v2577
      %2723 = vmatpush.bf16.msra.mxu0 %v2576
      %2724 = vmatpush.bf16.msra.mxu0 %v2575
      %2725 = vmatmul.bf16.gmra.mxu0 %v2545
      %v2726 = vpop.f32.mrf.mxu0
      %v2727 = vadd.f32 %v2714, %v2726
      %v2728 = vpop.f32.mrf.mxu0
      %2729 = vdwg.mxu0
      %2730 = vmatpush.bf16.msra.mxu0 %v2590
      %2731 = vmatpush.bf16.msra.mxu0 %v2589
      %2732 = vmatpush.bf16.msra.mxu0 %v2588
      %2733 = vmatpush.bf16.msra.mxu0 %v2587
      %2734 = vmatpush.bf16.msra.mxu0 %v2586
      %2735 = vmatpush.bf16.msra.mxu0 %v2585
      %2736 = vmatpush.bf16.msra.mxu0 %v2584
      %2737 = vmatpush.bf16.msra.mxu0 %v2583
      %2738 = vmatmul.bf16.gmra.mxu0 %v2546
      %v2739 = vpop.f32.mrf.mxu0
      %v2740 = vadd.f32 %v2727, %v2739
      %v2741 = vpop.f32.mrf.mxu0
      %2742 = vdwg.mxu0
      %2743 = vmatpush.bf16.msra.mxu0 %v2598
      %2744 = vmatpush.bf16.msra.mxu0 %v2597
      %2745 = vmatpush.bf16.msra.mxu0 %v2596
      %2746 = vmatpush.bf16.msra.mxu0 %v2595
      %2747 = vmatpush.bf16.msra.mxu0 %v2594
      %2748 = vmatpush.bf16.msra.mxu0 %v2593
      %2749 = vmatpush.bf16.msra.mxu0 %v2592
      %2750 = vmatpush.bf16.msra.mxu0 %v2591
      %2751 = vmatmul.bf16.gmra.mxu0 %v2547
      %v2752 = vpop.f32.mrf.mxu0
      %v2753 = vadd.f32 %v2740, %v2752
      %v2754 = vpop.f32.mrf.mxu0
      %2755 = vdwg.mxu0
      %2756 = vmatpush.bf16.msra.mxu0 %v2606
      %2757 = vmatpush.bf16.msra.mxu0 %v2605
      %2758 = vmatpush.bf16.msra.mxu0 %v2604
      %2759 = vmatpush.bf16.msra.mxu0 %v2603
      %2760 = vmatpush.bf16.msra.mxu0 %v2602
      %2761 = vmatpush.bf16.msra.mxu0 %v2601
      %2762 = vmatpush.bf16.msra.mxu0 %v2600
      %2763 = vmatpush.bf16.msra.mxu0 %v2599
      %2764 = vmatmul.bf16.gmra.mxu0 %v2548
      %v2765 = vpop.f32.mrf.mxu0
      %v2766 = vadd.f32 %v2753, %v2765
      %v2767 = vpop.f32.mrf.mxu0
      %2768 = vdwg.mxu0
      %2769 = vmatpush.bf16.msra.mxu0 %v2614
      %2770 = vmatpush.bf16.msra.mxu0 %v2613
      %2771 = vmatpush.bf16.msra.mxu0 %v2612
      %2772 = vmatpush.bf16.msra.mxu0 %v2611
      %2773 = vmatpush.bf16.msra.mxu0 %v2610
      %2774 = vmatpush.bf16.msra.mxu0 %v2609
      %2775 = vmatpush.bf16.msra.mxu0 %v2608
      %2776 = vmatpush.bf16.msra.mxu0 %v2607
      %2777 = vmatmul.bf16.gmra.mxu0 %v2549
      %v2778 = vpop.f32.mrf.mxu0
      %v2779 = vadd.f32 %v2766, %v2778
      %v2780 = vpop.f32.mrf.mxu0
      %2781 = vdwg.mxu0
      %2782 = vmatpush.bf16.msra.mxu0 %v2622
      %2783 = vmatpush.bf16.msra.mxu0 %v2621
      %2784 = vmatpush.bf16.msra.mxu0 %v2620
      %2785 = vmatpush.bf16.msra.mxu0 %v2619
      %2786 = vmatpush.bf16.msra.mxu0 %v2618
      %2787 = vmatpush.bf16.msra.mxu0 %v2617
      %2788 = vmatpush.bf16.msra.mxu0 %v2616
      %2789 = vmatpush.bf16.msra.mxu0 %v2615
      %2790 = vmatmul.bf16.gmra.mxu0 %v2550
      %v2791 = vpop.f32.mrf.mxu0
      %v2792 = vadd.f32 %v2779, %v2791
      %v2793 = vpop.f32.mrf.mxu0
      %2794 = vdwg.mxu0
      %2795 = vmatpush.bf16.msra.mxu0 %v2630
      %2796 = vmatpush.bf16.msra.mxu0 %v2629
      %2797 = vmatpush.bf16.msra.mxu0 %v2628
      %2798 = vmatpush.bf16.msra.mxu0 %v2627
      %2799 = vmatpush.bf16.msra.mxu0 %v2626
      %2800 = vmatpush.bf16.msra.mxu0 %v2625
      %2801 = vmatpush.bf16.msra.mxu0 %v2624
      %2802 = vmatpush.bf16.msra.mxu0 %v2623
      %2803 = vmatmul.bf16.gmra.mxu0 %v2551
      %v2804 = vpop.f32.mrf.mxu0
      %v2805 = vadd.f32 %v2792, %v2804
      %v2806 = vpop.f32.mrf.mxu0
      %2807 = vdwg.mxu0
      %2808 = vmatpush.bf16.msra.mxu0 %v2638
      %2809 = vmatpush.bf16.msra.mxu0 %v2637
      %2810 = vmatpush.bf16.msra.mxu0 %v2636
      %2811 = vmatpush.bf16.msra.mxu0 %v2635
      %2812 = vmatpush.bf16.msra.mxu0 %v2634
      %2813 = vmatpush.bf16.msra.mxu0 %v2633
      %2814 = vmatpush.bf16.msra.mxu0 %v2632
      %2815 = vmatpush.bf16.msra.mxu0 %v2631
      %2816 = vmatmul.bf16.gmra.mxu0 %v2552
      %v2817 = vpop.f32.mrf.mxu0
      %v2818 = vadd.f32 %v2805, %v2817
      %v2819 = vpop.f32.mrf.mxu0
      %2820 = vdwg.mxu0
      %2821 = vmatpush.bf16.msra.mxu0 %v2646
      %2822 = vmatpush.bf16.msra.mxu0 %v2645
      %2823 = vmatpush.bf16.msra.mxu0 %v2644
      %2824 = vmatpush.bf16.msra.mxu0 %v2643
      %2825 = vmatpush.bf16.msra.mxu0 %v2642
      %2826 = vmatpush.bf16.msra.mxu0 %v2641
      %2827 = vmatpush.bf16.msra.mxu0 %v2640
      %2828 = vmatpush.bf16.msra.mxu0 %v2639
      %2829 = vmatmul.bf16.gmra.mxu0 %v2553
      %v2830 = vpop.f32.mrf.mxu0
      %v2831 = vadd.f32 %v2818, %v2830
      %v2832 = vpop.f32.mrf.mxu0
      %2833 = vdwg.mxu0
      %2834 = vmatpush.bf16.msra.mxu0 %v2654
      %2835 = vmatpush.bf16.msra.mxu0 %v2653
      %2836 = vmatpush.bf16.msra.mxu0 %v2652
      %2837 = vmatpush.bf16.msra.mxu0 %v2651
      %2838 = vmatpush.bf16.msra.mxu0 %v2650
      %2839 = vmatpush.bf16.msra.mxu0 %v2649
      %2840 = vmatpush.bf16.msra.mxu0 %v2648
      %2841 = vmatpush.bf16.msra.mxu0 %v2647
      %2842 = vmatmul.bf16.gmra.mxu0 %v2554
      %v2843 = vpop.f32.mrf.mxu0
      %v2844 = vadd.f32 %v2831, %v2843
      %v2845 = vpop.f32.mrf.mxu0
      %2846 = vdwg.mxu0
      %2847 = vmatpush.bf16.msra.mxu0 %v2662
      %2848 = vmatpush.bf16.msra.mxu0 %v2661
      %2849 = vmatpush.bf16.msra.mxu0 %v2660
      %2850 = vmatpush.bf16.msra.mxu0 %v2659
      %2851 = vmatpush.bf16.msra.mxu0 %v2658
      %2852 = vmatpush.bf16.msra.mxu0 %v2657
      %2853 = vmatpush.bf16.msra.mxu0 %v2656
      %2854 = vmatpush.bf16.msra.mxu0 %v2655
      %2855 = vmatmul.bf16.gmra.mxu0 %v2555
      %v2856 = vpop.f32.mrf.mxu0
      %v2857 = vadd.f32 %v2844, %v2856
      %v2858 = vpop.f32.mrf.mxu0
      %2859 = vdwg.mxu0
      %2860 = vmatpush.bf16.msra.mxu0 %v2670
      %2861 = vmatpush.bf16.msra.mxu0 %v2669
      %2862 = vmatpush.bf16.msra.mxu0 %v2668
      %2863 = vmatpush.bf16.msra.mxu0 %v2667
      %2864 = vmatpush.bf16.msra.mxu0 %v2666
      %2865 = vmatpush.bf16.msra.mxu0 %v2665
      %2866 = vmatpush.bf16.msra.mxu0 %v2664
      %2867 = vmatpush.bf16.msra.mxu0 %v2663
      %2868 = vmatmul.bf16.gmra.mxu0 %v2556
      %v2869 = vpop.f32.mrf.mxu0
      %v2870 = vadd.f32 %v2857, %v2869
      %v2871 = vpop.f32.mrf.mxu0
      %2872 = vdwg.mxu0
      %2873 = vmatpush.bf16.msra.mxu0 %v2678
      %2874 = vmatpush.bf16.msra.mxu0 %v2677
      %2875 = vmatpush.bf16.msra.mxu0 %v2676
      %2876 = vmatpush.bf16.msra.mxu0 %v2675
      %2877 = vmatpush.bf16.msra.mxu0 %v2674
      %2878 = vmatpush.bf16.msra.mxu0 %v2673
      %2879 = vmatpush.bf16.msra.mxu0 %v2672
      %2880 = vmatpush.bf16.msra.mxu0 %v2671
      %2881 = vmatmul.bf16.gmra.mxu0 %v2557
      %v2882 = vpop.f32.mrf.mxu0
      %v2883 = vadd.f32 %v2870, %v2882
      %v2884 = vpop.f32.mrf.mxu0
      %2885 = vdwg.mxu0
      %2886 = vmatpush.bf16.msra.mxu0 %v2686
      %2887 = vmatpush.bf16.msra.mxu0 %v2685
      %2888 = vmatpush.bf16.msra.mxu0 %v2684
      %2889 = vmatpush.bf16.msra.mxu0 %v2683
      %2890 = vmatpush.bf16.msra.mxu0 %v2682
      %2891 = vmatpush.bf16.msra.mxu0 %v2681
      %2892 = vmatpush.bf16.msra.mxu0 %v2680
      %2893 = vmatpush.bf16.msra.mxu0 %v2679
      %2894 = vmatmul.bf16.gmra.mxu0 %v2558
      %v2895 = vpop.f32.mrf.mxu0
      %v2896 = vadd.f32 %v2883, %v2895
      %v2897 = vpop.f32.mrf.mxu0
      %2898 = vdwg.mxu0
      %v2899 = vadd.f32 %v1926, %v2896
      %v2900 = vld [vmem:[%s740] sm:$0x1]
      %v2901 = vld [vmem:[%s743] sm:$0x1]
      %v2902 = vsel %vm849, %v2899, 0.0
      %2903 = vadd.xlane.f32.xlu0 %v2902
      %v2904 = vpop.xlane.xlu0 %2903
      %v2905 = vmul.f32 %v2904, %v1899
      %v2906 = vsub.f32 %v2899, %v2905
      %v2907 = vmul.f32 %v2906, %v2906
      %v2908 = vsel %vm849, %v2907, 0.0
      %2909 = vadd.xlane.f32.xlu0 %v2908
      %v2910 = vpop.xlane.xlu0 %2909
      %v2911 = vmul.f32 %v2910, %v1899
      %v2912 = vadd.f32 %v2911, 1e-05
      %v2913 = vrsqrt.pop %v2912
      %v2914 = vmul.f32 %v2913, %v2912
      %v2915 = vmul.f32 %v2914, %v2913
      %v2916 = vmul.f32 0.5, %v2915
      %v2917 = vsub.f32 1.5, %v2916
      %v2918 = vmul.f32 %v2913, %v2917
      %vm2919 = vweird.f32 %v2912
      %vm2920 = vweird.f32 %v2913
      %vm2921 = vmor %vm2919, %vm2920
      %v2922 = vsel %vm2921, %v2913, %v2918
      %v2923 = vmul.f32 %v2906, %v2922
      %v2925 = vperm.slane %v2900, 0
      %v2927 = vmul.f32 %v2923, %v2925
      %v2929 = vperm.slane %v2901, 0
      %v2931 = vadd.f32 %v2927, %v2929
      %2932 = vst.msk [vmem:[#allocation2] sm:$0xff] %vm849, %v2931
      %p2933 = scmp.eq.s32.totalorder %s32, 1
      // Predicated region
      $region89: #{transformer_forward.1} parent=83 // pred_check
        %p2934 = pneg %p2933
      $region90: #{transformer_forward.1} parent=83 // pred_check_branch
        %2936 = sbr.rel (%p2934) target = $region92
      $region91: #{transformer_forward.1} parent=83 // pred_region
        %v2938 = vrot.slane %v2931, 2
        %v2939 = vrot.slane %v2931, 4
        %v2940 = vrot.slane %v2931, 6
        %vm2944 = vcmask 254976
        %v2945 = vsel %vm2944, %v2931, 0.0
        %v2946 = vsel %vm2944, %v2938, 0.0
        %v2947 = vadd.f32 %v2945, %v2946
        %v2948 = vsel %vm2944, %v2939, 0.0
        %v2949 = vadd.f32 %v2947, %v2948
        %v2950 = vsel %vm2944, %v2940, 0.0
        %v2951 = vadd.f32 %v2949, %v2950
        %2952 = vst.msk [vmem:[%s747] sm:$0x3] %vm2944, %v2951
      $region92: #{transformer_forward.1} parent=83 // pred_fallthru
        _
      %p2953 = scmp.lt.s32.totalorder %s31, 1
      %s2954 = scalar_select %p2953, %s31, 1
      %s2955 = smul.addr %s2954, 2
      %s2956 = scalar_lea.vmem %s16, %s2955
      // Predicated region
      $region93: #{transformer_forward.1} parent=83 // pred_check
        %p2957 = pneg %p463
      $region94: #{transformer_forward.1} parent=83 // pred_check_branch
        %2959 = sbr.rel (%p2957) target = $region96
      $region95: #{transformer_forward.1} parent=83 // pred_region
        _
      $region96: #{transformer_forward.1} parent=83 // pred_fallthru
        _
    $region84: #{transformer_forward.1} parent=5 // pred_fallthru
      _
    %p2960 = scmp.le.s32.totalorder 2, %s22
    // Predicated region
    $region97: #{transformer_forward.1} parent=5 // pred_check
      %p2961 = pneg %p2960
    $region98: #{transformer_forward.1} parent=5 // pred_check_branch
      %2963 = sbr.rel (%p2961) target = $region100
    $region99: #{transformer_forward.1} parent=5 // pred_region
      %s2964 = ssub.s32 %s22, 2
      // Predicated region
      $region101: #{transformer_forward.1} parent=99 // pred_check
        %p2965 = pneg %p469
      $region102: #{transformer_forward.1} parent=99 // pred_check_branch
        %2967 = sbr.rel (%p2965) target = $region104
      $region103: #{transformer_forward.1} parent=99 // pred_region
        %p2968 = scmp.lt.s32.totalorder %s33, 1
        %s2969 = scalar_select %p2968, %s33, 1
        %s2970 = smul.addr %s2969, 2
        %s2971 = scalar_lea.vmem %s16, %s2970
      $region104: #{transformer_forward.1} parent=99 // pred_fallthru
        _
    $region100: #{transformer_forward.1} parent=5 // pred_fallthru
      _
  $region6: #{transformer_forward.1} parent=0 // loop_footer
    %s26 = sadd.s32 1, %s22
  $region7: #{transformer_forward.1} parent=0 // loop_footer_branch
    %21 = sbr.rel target = $region3
  $region8: #{transformer_forward.1} parent=0 // loop_exit
    _

</llo_original>
